<compile_context>
chip_gen: v5e
topology: v5e:2x2
jax: 0.10.0
libtpu: 0.0.40
codegen_flags: <defaults>
</compile_context>

<pallas_src>
import functools

import jax
import jax.numpy as jnp
from jax import lax
from jax.experimental import pallas as pl
from jax.experimental.pallas import tpu as pltpu

VMEM_LIMIT = 64 * 1024 * 1024  # raise scoped VMEM so bigger tiles can compile


# ----------------------------------------------------------------------------
# Kernel 1: 1x1x1 conv (= matmul over channels, BN scale pre-folded into W)
#           + bias + optional ReLU
# ----------------------------------------------------------------------------
def _pw_bn_kernel(x_ref, w_ref, b_ref, o_ref, *, relu):
    y = jnp.dot(x_ref[...], w_ref[...], preferred_element_type=jnp.float32)
    y = y + b_ref[...]
    if relu:
        y = jnp.maximum(y, 0.0)
    o_ref[...] = y.astype(o_ref.dtype)


def pointwise_bn(x_flat, w_scaled, bias, *, relu, tm=512):
    M, cin = x_flat.shape
    cout = w_scaled.shape[1]
    tm = min(tm, M)
    grid_m = pl.cdiv(M, tm)
    mp = grid_m * tm
    if mp != M:
        # TODO(synk): masked tail instead of a padded copy for non-multiple M.
        x_flat = jnp.pad(x_flat, ((0, mp - M), (0, 0)))
    out = pl.pallas_call(
        functools.partial(_pw_bn_kernel, relu=relu),
        out_shape=jax.ShapeDtypeStruct((mp, cout), jnp.float32),
        grid_spec=pltpu.PrefetchScalarGridSpec(
            num_scalar_prefetch=0,
            grid=(grid_m,),
            in_specs=[
                pl.BlockSpec((tm, cin), lambda i: (i, 0)),
                pl.BlockSpec((cin, cout), lambda i: (0, 0)),
                pl.BlockSpec((1, cout), lambda i: (0, 0)),
            ],
            out_specs=pl.BlockSpec((tm, cout), lambda i: (i, 0)),
        ),
        compiler_params=pltpu.CompilerParams(
            dimension_semantics=("parallel",),
            vmem_limit_bytes=VMEM_LIMIT,
        ),
    )(x_flat, w_scaled, bias)
    return out[:M] if mp != M else out


# ----------------------------------------------------------------------------
# Kernel 2: fused conv2(3x3x3, pad=1, bn2-scale folded) + bias2 + relu
#           + conv3(1x1x1, bn3-scale folded) + bias3 + residual add + relu.
#   Grid over (N, T): each step produces one (H, W, Cout) output frame.
#   T-halo: three clamped-index-map views of the activation, scalar-masked.
#   H/W-halo: zero-bordered VMEM scratch slab (no jnp.pad HBM copy).
#   Spatial taps packed into 3 matmuls with K = 9*Cin (im2col per kd plane).
# ----------------------------------------------------------------------------
def _fused_conv2_conv3_kernel(prev_ref, cur_ref, next_ref, w2_ref, b2_ref,
                              w3_ref, b3_ref, id_ref, o_ref, slab_ref,
                              *, H, W, C, Cout):
    t = pl.program_id(1)
    n_t = pl.num_programs(1)

    # Zero the padded slab; only the interior is rewritten below, so the
    # 1-pixel border stays zero and implements the spatial conv padding.
    slab_ref[...] = jnp.zeros_like(slab_ref)

    mask_prev = (t > 0).astype(jnp.float32)          # frame t-1 is zero at t == 0
    mask_next = (t < n_t - 1).astype(jnp.float32)    # frame t+1 is zero at t == T-1
    frames = (
        prev_ref[0, 0] * mask_prev,
        cur_ref[0, 0],
        next_ref[0, 0] * mask_next,
    )

    acc = jnp.zeros((H * W, C), jnp.float32)
    for kd in range(3):
        slab_ref[1:H + 1, 1:W + 1, :] = frames[kd]
        # im2col over the 3x3 spatial taps -> (H*W, 9*C): one wide-K MXU matmul
        # per temporal tap instead of 9 tiny K=C dots.
        patch = jnp.concatenate(
            [slab_ref[kh:kh + H, kw:kw + W, :].reshape(H * W, C)
             for kh in range(3) for kw in range(3)],
            axis=-1)
        acc = acc + jnp.dot(patch, w2_ref[kd],
                            preferred_element_type=jnp.float32)

    y = jnp.maximum(acc + b2_ref[...], 0.0)                           # bn2 + relu
    y = jnp.dot(y, w3_ref[...], preferred_element_type=jnp.float32)   # conv3 (1x1x1)
    y = y + b3_ref[...]                                               # bn3 bias
    y = y + id_ref[0, 0].reshape(H * W, Cout)                         # residual
    o_ref[0, 0] = jnp.maximum(y, 0.0).reshape(H, W, Cout).astype(o_ref.dtype)


def fused_conv2_conv3(act, w2s, b2, w3s, b3, identity):
    # act: (N, T, H, W, C); w2s: (3, 9*C, C); w3s: (C, Cout);
    # identity: (N, T, H, W, Cout).  BN scales already folded into w2s / w3s.
    N, T, H, W, C = act.shape
    Cout = w3s.shape[1]
    kernel = functools.partial(_fused_conv2_conv3_kernel, H=H, W=W, C=C, Cout=Cout)
    return pl.pallas_call(
        kernel,
        out_shape=jax.ShapeDtypeStruct((N, T, H, W, Cout), jnp.float32),
        grid_spec=pltpu.PrefetchScalarGridSpec(
            num_scalar_prefetch=0,
            grid=(N, T),
            in_specs=[
                # frame t-1 / t / t+1 of the conv1 activation (T index clamped;
                # the out-of-range frames are scalar-masked to zero in-kernel).
                pl.BlockSpec((1, 1, H, W, C),
                             lambda n, t: (n, jnp.maximum(t - 1, 0), 0, 0, 0)),
                pl.BlockSpec((1, 1, H, W, C),
                             lambda n, t: (n, t, 0, 0, 0)),
                pl.BlockSpec((1, 1, H, W, C),
                             lambda n, t: (n, jnp.minimum(t + 1, T - 1), 0, 0, 0)),
                pl.BlockSpec((3, 9 * C, C), lambda n, t: (0, 0, 0)),
                pl.BlockSpec((1, C), lambda n, t: (0, 0)),
                pl.BlockSpec((C, Cout), lambda n, t: (0, 0)),
                pl.BlockSpec((1, Cout), lambda n, t: (0, 0)),
                pl.BlockSpec((1, 1, H, W, Cout), lambda n, t: (n, t, 0, 0, 0)),
            ],
            out_specs=pl.BlockSpec((1, 1, H, W, Cout),
                                   lambda n, t: (n, t, 0, 0, 0)),
            scratch_shapes=[pltpu.VMEM((H + 2, W + 2, C), jnp.float32)],
        ),
        compiler_params=pltpu.CompilerParams(
            dimension_semantics=("parallel", "parallel"),
            vmem_limit_bytes=VMEM_LIMIT,
        ),
    )(act, act, act, w2s, b2, w3s, b3, identity)


# ----------------------------------------------------------------------------
# Bottleneck forward (wrapper / glue)
# ----------------------------------------------------------------------------
def bottleneck_forward_ndhwc(x, params):
    # x: (N, T, H, W, Cin), channels-last all the way through.
    N, T, H, W, C = x.shape
    M = N * T * H * W
    width = params["w1"].shape[1]

    # Fold BN scales into the (tiny) conv weights once, outside the grid loops.
    w1s = params["w1"] * params["s1"]                 # (Cin, width) * (1, width)
    w2s = params["w2"] * params["s2"]                 # (3, 9*width, width) * (1, width)
    w3s = params["w3"] * params["s3"]                 # (width, Cout) * (1, Cout)

    # conv1 (1x1x1) + bn1 + relu
    a = pointwise_bn(x.reshape(M, C), w1s, params["b1"], relu=True)
    a = a.reshape(N, T, H, W, width)

    # conv2 + bn2 + relu + conv3 + bn3 + residual + relu  (one fused kernel)
    return fused_conv2_conv3(a, w2s, params["b2"], w3s, params["b3"], x)


def bottleneck_forward(x_ncdhw, params):
    # PyTorch NCDHW adapter.  In a channels-last pipeline these two full-HBM
    # transpose passes disappear: call bottleneck_forward_ndhwc directly.
    x = jnp.transpose(x_ncdhw, (0, 2, 3, 4, 1))
    y = bottleneck_forward_ndhwc(x, params)
    return jnp.transpose(y, (0, 4, 1, 2, 3))


# ----------------------------------------------------------------------------
# Pure-JAX reference (PyTorch semantics, NCDHW / OIDHW)
# ----------------------------------------------------------------------------
def reference_forward(x, w1_t, w2_t, w3_t, bns):
    def conv(v, w, pad):
        return lax.conv_general_dilated(
            v, w, window_strides=(1, 1, 1), padding=pad,
            dimension_numbers=("NCDHW", "OIDHW", "NCDHW"),
            precision=lax.Precision.HIGHEST)

    def bn(v, sb):
        s, b = sb
        return v * s[None, :, None, None, None] + b[None, :, None, None, None]

    out = jax.nn.relu(bn(conv(x, w1_t, "VALID"), bns[0]))
    out = jax.nn.relu(bn(conv(out, w2_t, [(1, 1)] * 3), bns[1]))
    out = bn(conv(out, w3_t, "VALID"), bns[2]) + x
    return jax.nn.relu(out)


def _bn_fold(key, c, eps=1e-5):
    k1, k2, k3, k4 = jax.random.split(key, 4)
    gamma = 1.0 + 0.1 * jax.random.normal(k1, (c,), jnp.float32)
    beta = 0.1 * jax.random.normal(k2, (c,), jnp.float32)
    mean = 0.1 * jax.random.normal(k3, (c,), jnp.float32)
    var = jnp.abs(jax.random.normal(k4, (c,), jnp.float32)) + 0.5
    scale = gamma / jnp.sqrt(var + eps)
    bias = beta - mean * scale
    return scale, bias


if __name__ == "__main__":
    key = jax.random.PRNGKey(0)
    ks = jax.random.split(key, 8)

    # Lane-dense Bottleneck config (all channel dims >= 128), small spatially.
    planes = 128
    width = int(planes * (64 / 64.0)) * 1     # = 128
    cout = planes * 4                          # = 512
    inplanes = cout                            # identity add needs inplanes == planes*4
    N, T, H, W = 2, 4, 8, 8

    # Input, PyTorch NCDHW layout.
    x = jax.random.normal(ks[0], (N, inplanes, T, H, W), jnp.float32)

    # Conv weights in PyTorch OIDHW layout (deterministic init).
    w1_t = 0.05 * jax.random.normal(ks[1], (width, inplanes, 1, 1, 1), jnp.float32)
    w2_t = 0.05 * jax.random.normal(ks[2], (width, width, 3, 3, 3), jnp.float32)
    w3_t = 0.05 * jax.random.normal(ks[3], (cout, width, 1, 1, 1), jnp.float32)

    # Folded BatchNorm (inference) params.
    s1, b1 = _bn_fold(ks[4], width)
    s2, b2 = _bn_fold(ks[5], width)
    s3, b3 = _bn_fold(ks[6], cout)

    params = {
        # kernel layouts: (Cin, Cout), (kD, kH*kW*Cin, Cout), (Cin, Cout)
        "w1": jnp.transpose(w1_t[:, :, 0, 0, 0], (1, 0)),
        "w2": jnp.transpose(w2_t, (2, 3, 4, 1, 0)).reshape(3, 9 * width, width),
        "w3": jnp.transpose(w3_t[:, :, 0, 0, 0], (1, 0)),
        "s1": s1.reshape(1, -1), "b1": b1.reshape(1, -1),
        "s2": s2.reshape(1, -1), "b2": b2.reshape(1, -1),
        "s3": s3.reshape(1, -1), "b3": b3.reshape(1, -1),
    }

    out = jax.jit(bottleneck_forward)(x, params)
    out = jax.block_until_ready(out)

    ref = reference_forward(x, w1_t, w2_t, w3_t, [(s1, b1), (s2, b2), (s3, b3)])
    ref = jax.block_until_ready(ref)

    assert out.shape == (N, cout, T, H, W), out.shape
    err = float(jnp.max(jnp.abs(out - ref)))
    ref_scale = float(jnp.max(jnp.abs(ref))) + 1e-6
    assert err / ref_scale < 1e-3, f"rel err {err / ref_scale} (abs {err})"
    print("KERNEL_OK")
</pallas_src>

<mosaic_0001>
module attributes {stable_mosaic.version = 11 : i64} {
  func.func @_pw_bn_kernel(%arg0: i32, %arg1: memref<512x512xf32, #tpu.memory_space<vmem>>, %arg2: memref<512x128xf32, #tpu.memory_space<vmem>>, %arg3: memref<1x128xf32, #tpu.memory_space<vmem>>, %arg4: memref<512x128xf32, #tpu.memory_space<vmem>>) attributes {dimension_semantics = [#tpu.dimension_semantics<parallel>], iteration_bounds = array<i64: 1>, scalar_prefetch = 0 : i64, scratch_operands = 0 : i64, tpu.core_type = #tpu.core_type<tc>, window_params = [{transform_indices = @transform_0, window_bounds = array<i64: 512, 512>}, {pipeline_mode = #tpu.pipeline_mode<synchronous>, transform_indices = @transform_1, window_bounds = array<i64: 512, 128>}, {pipeline_mode = #tpu.pipeline_mode<synchronous>, transform_indices = @transform_2, window_bounds = array<i64: 1, 128>}, {transform_indices = @transform_3, window_bounds = array<i64: 512, 128>}]} {
    %c0 = arith.constant 0 : index
    %c0_0 = arith.constant 0 : index
    %0 = vector.load %arg1[%c0, %c0_0] : memref<512x512xf32, #tpu.memory_space<vmem>>, vector<512x512xf32>
    %c0_1 = arith.constant 0 : index
    %c0_2 = arith.constant 0 : index
    %1 = vector.load %arg2[%c0_1, %c0_2] : memref<512x128xf32, #tpu.memory_space<vmem>>, vector<512x128xf32>
    %cst = arith.constant dense<0.000000e+00> : vector<512x128xf32>
    %2 = tpu.matmul %0, %1, %cst {dimension_numbers = #tpu.dot_dimension_numbers<[1], [0], [0], [1], [0, 0, 1, 1], [], []>} : vector<512x512xf32>, vector<512x128xf32>, vector<512x128xf32> -> vector<512x128xf32>
    %c0_3 = arith.constant 0 : index
    %c0_4 = arith.constant 0 : index
    %3 = vector.load %arg3[%c0_3, %c0_4] : memref<1x128xf32, #tpu.memory_space<vmem>>, vector<1x128xf32>
    %4 = vector.broadcast %3 : vector<1x128xf32> to vector<512x128xf32>
    %5 = arith.addf %2, %4 : vector<512x128xf32>
    %cst_5 = arith.constant 0.000000e+00 : f32
    %6 = vector.broadcast %cst_5 : f32 to vector<512x128xf32>
    %7 = arith.maximumf %5, %6 : vector<512x128xf32>
    %c0_6 = arith.constant 0 : index
    %c0_7 = arith.constant 0 : index
    %8 = vector.load %arg4[%c0_6, %c0_7] : memref<512x128xf32, #tpu.memory_space<vmem>>, vector<512x128xf32>
    tpu.vector_store %arg4[%c0_6, %c0_7], %7 {strides = array<i32>} : memref<512x128xf32, #tpu.memory_space<vmem>>, vector<512x128xf32>,
    return
  }
  func.func @transform_0(%arg0: i32) -> (i32, i32) {
    %c0_i32 = arith.constant 0 : i32
    %c0_i32_0 = arith.constant 0 : i32
    return %arg0, %c0_i32 : i32, i32
  }
  func.func @transform_1(%arg0: i32) -> (i32, i32) {
    %c0_i32 = arith.constant 0 : i32
    %c0_i32_0 = arith.constant 0 : i32
    %c0_i32_1 = arith.constant 0 : i32
    return %c0_i32, %c0_i32_0 : i32, i32
  }
  func.func @transform_2(%arg0: i32) -> (i32, i32) {
    %c0_i32 = arith.constant 0 : i32
    %c0_i32_0 = arith.constant 0 : i32
    %c0_i32_1 = arith.constant 0 : i32
    return %c0_i32, %c0_i32_0 : i32, i32
  }
  func.func @transform_3(%arg0: i32) -> (i32, i32) {
    %c0_i32 = arith.constant 0 : i32
    %c0_i32_0 = arith.constant 0 : i32
    return %arg0, %c0_i32 : i32, i32
  }
}

module attributes {stable_mosaic.version = 11 : i64} {
  func.func @_fused_conv2_conv3_kernel(%arg0: i32, %arg1: i32, %arg2: memref<1x1x8x8x128xf32, #tpu.memory_space<vmem>>, %arg3: memref<1x1x8x8x128xf32, #tpu.memory_space<vmem>>, %arg4: memref<1x1x8x8x128xf32, #tpu.memory_space<vmem>>, %arg5: memref<3x1152x128xf32, #tpu.memory_space<vmem>>, %arg6: memref<1x128xf32, #tpu.memory_space<vmem>>, %arg7: memref<128x512xf32, #tpu.memory_space<vmem>>, %arg8: memref<1x512xf32, #tpu.memory_space<vmem>>, %arg9: memref<1x1x8x8x512xf32, #tpu.memory_space<vmem>>, %arg10: memref<1x1x8x8x512xf32, #tpu.memory_space<vmem>>, %arg11: memref<10x10x128xf32, #tpu.memory_space<vmem>>) attributes {dimension_semantics = [#tpu.dimension_semantics<parallel>, #tpu.dimension_semantics<parallel>], iteration_bounds = array<i64: 2, 4>, scalar_prefetch = 0 : i64, scratch_operands = 1 : i64, tpu.core_type = #tpu.core_type<tc>, window_params = [{transform_indices = @transform_0, window_bounds = array<i64: 1, 1, 8, 8, 128>}, {transform_indices = @transform_1, window_bounds = array<i64: 1, 1, 8, 8, 128>}, {transform_indices = @transform_2, window_bounds = array<i64: 1, 1, 8, 8, 128>}, {pipeline_mode = #tpu.pipeline_mode<synchronous>, transform_indices = @transform_3, window_bounds = array<i64: 3, 1152, 128>}, {pipeline_mode = #tpu.pipeline_mode<synchronous>, transform_indices = @transform_4, window_bounds = array<i64: 1, 128>}, {pipeline_mode = #tpu.pipeline_mode<synchronous>, transform_indices = @transform_5, window_bounds = array<i64: 128, 512>}, {pipeline_mode = #tpu.pipeline_mode<synchronous>, transform_indices = @transform_6, window_bounds = array<i64: 1, 512>}, {transform_indices = @transform_7, window_bounds = array<i64: 1, 1, 8, 8, 512>}, {transform_indices = @transform_8, window_bounds = array<i64: 1, 1, 8, 8, 512>}]} {
    %cst = arith.constant 0.000000e+00 : f32
    %0 = vector.broadcast %cst : f32 to vector<10x10x128xf32>
    %c0 = arith.constant 0 : index
    %c0_0 = arith.constant 0 : index
    %c0_1 = arith.constant 0 : index
    %1 = vector.load %arg11[%c0, %c0_0, %c0_1] : memref<10x10x128xf32, #tpu.memory_space<vmem>>, vector<10x10x128xf32>
    tpu.vector_store %arg11[%c0, %c0_0, %c0_1], %0 {strides = array<i32>} : memref<10x10x128xf32, #tpu.memory_space<vmem>>, vector<10x10x128xf32>,
    %c0_i32 = arith.constant 0 : i32
    %2 = arith.cmpi sgt, %arg1, %c0_i32 : i32
    %3 = arith.extui %2 : i1 to i32
    %4 = arith.sitofp %3 : i32 to f32
    %c3_i32 = arith.constant 3 : i32
    %5 = arith.cmpi slt, %arg1, %c3_i32 : i32
    %6 = arith.extui %5 : i1 to i32
    %7 = arith.sitofp %6 : i32 to f32
    %c0_2 = arith.constant 0 : index
    %c0_3 = arith.constant 0 : index
    %c0_4 = arith.constant 0 : index
    %c0_5 = arith.constant 0 : index
    %c0_6 = arith.constant 0 : index
    %8 = vector.load %arg2[%c0_2, %c0_3, %c0_4, %c0_5, %c0_6] : memref<1x1x8x8x128xf32, #tpu.memory_space<vmem>>, vector<1x1x8x8x128xf32>
    %9 = vector.shape_cast %8 : vector<1x1x8x8x128xf32> to vector<8x8x128xf32>
    %10 = vector.broadcast %4 : f32 to vector<8x8x128xf32>
    %11 = arith.mulf %9, %10 : vector<8x8x128xf32>
    %c0_7 = arith.constant 0 : index
    %c0_8 = arith.constant 0 : index
    %c0_9 = arith.constant 0 : index
    %c0_10 = arith.constant 0 : index
    %c0_11 = arith.constant 0 : index
    %12 = vector.load %arg3[%c0_7, %c0_8, %c0_9, %c0_10, %c0_11] : memref<1x1x8x8x128xf32, #tpu.memory_space<vmem>>, vector<1x1x8x8x128xf32>
    %13 = vector.shape_cast %12 : vector<1x1x8x8x128xf32> to vector<8x8x128xf32>
    %c0_12 = arith.constant 0 : index
    %c0_13 = arith.constant 0 : index
    %c0_14 = arith.constant 0 : index
    %c0_15 = arith.constant 0 : index
    %c0_16 = arith.constant 0 : index
    %14 = vector.load %arg4[%c0_12, %c0_13, %c0_14, %c0_15, %c0_16] : memref<1x1x8x8x128xf32, #tpu.memory_space<vmem>>, vector<1x1x8x8x128xf32>
    %15 = vector.shape_cast %14 : vector<1x1x8x8x128xf32> to vector<8x8x128xf32>
    %16 = vector.broadcast %7 : f32 to vector<8x8x128xf32>
    %17 = arith.mulf %15, %16 : vector<8x8x128xf32>
    %cst_17 = arith.constant 0.000000e+00 : f32
    %18 = vector.broadcast %cst_17 : f32 to vector<64x128xf32>
    %c1 = arith.constant 1 : index
    %c1_18 = arith.constant 1 : index
    %c0_19 = arith.constant 0 : index
    %19 = vector.load %arg11[%c1, %c1_18, %c0_19] : memref<10x10x128xf32, #tpu.memory_space<vmem>>, vector<8x8x128xf32>
    tpu.vector_store %arg11[%c1, %c1_18, %c0_19], %11 {strides = array<i32>} : memref<10x10x128xf32, #tpu.memory_space<vmem>>, vector<8x8x128xf32>,
    %c0_20 = arith.constant 0 : index
    %c0_21 = arith.constant 0 : index
    %c0_22 = arith.constant 0 : index
    %20 = vector.load %arg11[%c0_20, %c0_21, %c0_22] : memref<10x10x128xf32, #tpu.memory_space<vmem>>, vector<8x8x128xf32>
    %21 = vector.shape_cast %20 : vector<8x8x128xf32> to vector<64x128xf32>
    %c0_23 = arith.constant 0 : index
    %c1_24 = arith.constant 1 : index
    %c0_25 = arith.constant 0 : index
    %22 = vector.load %arg11[%c0_23, %c1_24, %c0_25] : memref<10x10x128xf32, #tpu.memory_space<vmem>>, vector<8x8x128xf32>
    %23 = vector.shape_cast %22 : vector<8x8x128xf32> to vector<64x128xf32>
    %c0_26 = arith.constant 0 : index
    %c2 = arith.constant 2 : index
    %c0_27 = arith.constant 0 : index
    %24 = vector.load %arg11[%c0_26, %c2, %c0_27] : memref<10x10x128xf32, #tpu.memory_space<vmem>>, vector<8x8x128xf32>
    %25 = vector.shape_cast %24 : vector<8x8x128xf32> to vector<64x128xf32>
    %c1_28 = arith.constant 1 : index
    %c0_29 = arith.constant 0 : index
    %c0_30 = arith.constant 0 : index
    %26 = vector.load %arg11[%c1_28, %c0_29, %c0_30] : memref<10x10x128xf32, #tpu.memory_space<vmem>>, vector<8x8x128xf32>
    %27 = vector.shape_cast %26 : vector<8x8x128xf32> to vector<64x128xf32>
    %c1_31 = arith.constant 1 : index
    %c1_32 = arith.constant 1 : index
    %c0_33 = arith.constant 0 : index
    %28 = vector.load %arg11[%c1_31, %c1_32, %c0_33] : memref<10x10x128xf32, #tpu.memory_space<vmem>>, vector<8x8x128xf32>
    %29 = vector.shape_cast %28 : vector<8x8x128xf32> to vector<64x128xf32>
    %c1_34 = arith.constant 1 : index
    %c2_35 = arith.constant 2 : index
    %c0_36 = arith.constant 0 : index
    %30 = vector.load %arg11[%c1_34, %c2_35, %c0_36] : memref<10x10x128xf32, #tpu.memory_space<vmem>>, vector<8x8x128xf32>
    %31 = vector.shape_cast %30 : vector<8x8x128xf32> to vector<64x128xf32>
    %c2_37 = arith.constant 2 : index
    %c0_38 = arith.constant 0 : index
    %c0_39 = arith.constant 0 : index
    %32 = vector.load %arg11[%c2_37, %c0_38, %c0_39] : memref<10x10x128xf32, #tpu.memory_space<vmem>>, vector<8x8x128xf32>
    %33 = vector.shape_cast %32 : vector<8x8x128xf32> to vector<64x128xf32>
    %c2_40 = arith.constant 2 : index
    %c1_41 = arith.constant 1 : index
    %c0_42 = arith.constant 0 : index
    %34 = vector.load %arg11[%c2_40, %c1_41, %c0_42] : memref<10x10x128xf32, #tpu.memory_space<vmem>>, vector<8x8x128xf32>
    %35 = vector.shape_cast %34 : vector<8x8x128xf32> to vector<64x128xf32>
    %c2_43 = arith.constant 2 : index
    %c2_44 = arith.constant 2 : index
    %c0_45 = arith.constant 0 : index
    %36 = vector.load %arg11[%c2_43, %c2_44, %c0_45] : memref<10x10x128xf32, #tpu.memory_space<vmem>>, vector<8x8x128xf32>
    %37 = vector.shape_cast %36 : vector<8x8x128xf32> to vector<64x128xf32>
    %38 = tpu.concatenate %21, %23, %25, %27, %29, %31, %33, %35, %37 in 1 : vector<64x128xf32>, vector<64x128xf32>, vector<64x128xf32>, vector<64x128xf32>, vector<64x128xf32>, vector<64x128xf32>, vector<64x128xf32>, vector<64x128xf32>, vector<64x128xf32> -> vector<64x1152xf32>
    %c0_46 = arith.constant 0 : index
    %c0_47 = arith.constant 0 : index
    %c0_48 = arith.constant 0 : index
    %39 = vector.load %arg5[%c0_46, %c0_47, %c0_48] : memref<3x1152x128xf32, #tpu.memory_space<vmem>>, vector<1x1152x128xf32>
    %40 = vector.shape_cast %39 : vector<1x1152x128xf32> to vector<1152x128xf32>
    %cst_49 = arith.constant dense<0.000000e+00> : vector<64x128xf32>
    %41 = tpu.matmul %38, %40, %cst_49 {dimension_numbers = #tpu.dot_dimension_numbers<[1], [0], [0], [1], [0, 0, 1, 1], [], []>} : vector<64x1152xf32>, vector<1152x128xf32>, vector<64x128xf32> -> vector<64x128xf32>
    %42 = arith.addf %18, %41 : vector<64x128xf32>
    %c1_50 = arith.constant 1 : index
    %c1_51 = arith.constant 1 : index
    %c0_52 = arith.constant 0 : index
    %43 = vector.load %arg11[%c1_50, %c1_51, %c0_52] : memref<10x10x128xf32, #tpu.memory_space<vmem>>, vector<8x8x128xf32>
    tpu.vector_store %arg11[%c1_50, %c1_51, %c0_52], %13 {strides = array<i32>} : memref<10x10x128xf32, #tpu.memory_space<vmem>>, vector<8x8x128xf32>,
    %c0_53 = arith.constant 0 : index
    %c0_54 = arith.constant 0 : index
    %c0_55 = arith.constant 0 : index
    %44 = vector.load %arg11[%c0_53, %c0_54, %c0_55] : memref<10x10x128xf32, #tpu.memory_space<vmem>>, vector<8x8x128xf32>
    %45 = vector.shape_cast %44 : vector<8x8x128xf32> to vector<64x128xf32>
    %c0_56 = arith.constant 0 : index
    %c1_57 = arith.constant 1 : index
    %c0_58 = arith.constant 0 : index
    %46 = vector.load %arg11[%c0_56, %c1_57, %c0_58] : memref<10x10x128xf32, #tpu.memory_space<vmem>>, vector<8x8x128xf32>
    %47 = vector.shape_cast %46 : vector<8x8x128xf32> to vector<64x128xf32>
    %c0_59 = arith.constant 0 : index
    %c2_60 = arith.constant 2 : index
    %c0_61 = arith.constant 0 : index
    %48 = vector.load %arg11[%c0_59, %c2_60, %c0_61] : memref<10x10x128xf32, #tpu.memory_space<vmem>>, vector<8x8x128xf32>
    %49 = vector.shape_cast %48 : vector<8x8x128xf32> to vector<64x128xf32>
    %c1_62 = arith.constant 1 : index
    %c0_63 = arith.constant 0 : index
    %c0_64 = arith.constant 0 : index
    %50 = vector.load %arg11[%c1_62, %c0_63, %c0_64] : memref<10x10x128xf32, #tpu.memory_space<vmem>>, vector<8x8x128xf32>
    %51 = vector.shape_cast %50 : vector<8x8x128xf32> to vector<64x128xf32>
    %c1_65 = arith.constant 1 : index
    %c1_66 = arith.constant 1 : index
    %c0_67 = arith.constant 0 : index
    %52 = vector.load %arg11[%c1_65, %c1_66, %c0_67] : memref<10x10x128xf32, #tpu.memory_space<vmem>>, vector<8x8x128xf32>
    %53 = vector.shape_cast %52 : vector<8x8x128xf32> to vector<64x128xf32>
    %c1_68 = arith.constant 1 : index
    %c2_69 = arith.constant 2 : index
    %c0_70 = arith.constant 0 : index
    %54 = vector.load %arg11[%c1_68, %c2_69, %c0_70] : memref<10x10x128xf32, #tpu.memory_space<vmem>>, vector<8x8x128xf32>
    %55 = vector.shape_cast %54 : vector<8x8x128xf32> to vector<64x128xf32>
    %c2_71 = arith.constant 2 : index
    %c0_72 = arith.constant 0 : index
    %c0_73 = arith.constant 0 : index
    %56 = vector.load %arg11[%c2_71, %c0_72, %c0_73] : memref<10x10x128xf32, #tpu.memory_space<vmem>>, vector<8x8x128xf32>
    %57 = vector.shape_cast %56 : vector<8x8x128xf32> to vector<64x128xf32>
    %c2_74 = arith.constant 2 : index
    %c1_75 = arith.constant 1 : index
    %c0_76 = arith.constant 0 : index
    %58 = vector.load %arg11[%c2_74, %c1_75, %c0_76] : memref<10x10x128xf32, #tpu.memory_space<vmem>>, vector<8x8x128xf32>
    %59 = vector.shape_cast %58 : vector<8x8x128xf32> to vector<64x128xf32>
    %c2_77 = arith.constant 2 : index
    %c2_78 = arith.constant 2 : index
    %c0_79 = arith.constant 0 : index
    %60 = vector.load %arg11[%c2_77, %c2_78, %c0_79] : memref<10x10x128xf32, #tpu.memory_space<vmem>>, vector<8x8x128xf32>
    %61 = vector.shape_cast %60 : vector<8x8x128xf32> to vector<64x128xf32>
    %62 = tpu.concatenate %45, %47, %49, %51, %53, %55, %57, %59, %61 in 1 : vector<64x128xf32>, vector<64x128xf32>, vector<64x128xf32>, vector<64x128xf32>, vector<64x128xf32>, vector<64x128xf32>, vector<64x128xf32>, vector<64x128xf32>, vector<64x128xf32> -> vector<64x1152xf32>
    %c1_80 = arith.constant 1 : index
    %c0_81 = arith.constant 0 : index
    %c0_82 = arith.constant 0 : index
    %63 = vector.load %arg5[%c1_80, %c0_81, %c0_82] : memref<3x1152x128xf32, #tpu.memory_space<vmem>>, vector<1x1152x128xf32>
    %64 = vector.shape_cast %63 : vector<1x1152x128xf32> to vector<1152x128xf32>
    %cst_83 = arith.constant dense<0.000000e+00> : vector<64x128xf32>
    %65 = tpu.matmul %62, %64, %cst_83 {dimension_numbers = #tpu.dot_dimension_numbers<[1], [0], [0], [1], [0, 0, 1, 1], [], []>} : vector<64x1152xf32>, vector<1152x128xf32>, vector<64x128xf32> -> vector<64x128xf32>
    %66 = arith.addf %42, %65 : vector<64x128xf32>
    %c1_84 = arith.constant 1 : index
    %c1_85 = arith.constant 1 : index
    %c0_86 = arith.constant 0 : index
    %67 = vector.load %arg11[%c1_84, %c1_85, %c0_86] : memref<10x10x128xf32, #tpu.memory_space<vmem>>, vector<8x8x128xf32>
    tpu.vector_store %arg11[%c1_84, %c1_85, %c0_86], %17 {strides = array<i32>} : memref<10x10x128xf32, #tpu.memory_space<vmem>>, vector<8x8x128xf32>,
    %c0_87 = arith.constant 0 : index
    %c0_88 = arith.constant 0 : index
    %c0_89 = arith.constant 0 : index
    %68 = vector.load %arg11[%c0_87, %c0_88, %c0_89] : memref<10x10x128xf32, #tpu.memory_space<vmem>>, vector<8x8x128xf32>
    %69 = vector.shape_cast %68 : vector<8x8x128xf32> to vector<64x128xf32>
    %c0_90 = arith.constant 0 : index
    %c1_91 = arith.constant 1 : index
    %c0_92 = arith.constant 0 : index
    %70 = vector.load %arg11[%c0_90, %c1_91, %c0_92] : memref<10x10x128xf32, #tpu.memory_space<vmem>>, vector<8x8x128xf32>
    %71 = vector.shape_cast %70 : vector<8x8x128xf32> to vector<64x128xf32>
    %c0_93 = arith.constant 0 : index
    %c2_94 = arith.constant 2 : index
    %c0_95 = arith.constant 0 : index
    %72 = vector.load %arg11[%c0_93, %c2_94, %c0_95] : memref<10x10x128xf32, #tpu.memory_space<vmem>>, vector<8x8x128xf32>
    %73 = vector.shape_cast %72 : vector<8x8x128xf32> to vector<64x128xf32>
    %c1_96 = arith.constant 1 : index
    %c0_97 = arith.constant 0 : index
    %c0_98 = arith.constant 0 : index
    %74 = vector.load %arg11[%c1_96, %c0_97, %c0_98] : memref<10x10x128xf32, #tpu.memory_space<vmem>>, vector<8x8x128xf32>
    %75 = vector.shape_cast %74 : vector<8x8x128xf32> to vector<64x128xf32>
    %c1_99 = arith.constant 1 : index
    %c1_100 = arith.constant 1 : index
    %c0_101 = arith.constant 0 : index
    %76 = vector.load %arg11[%c1_99, %c1_100, %c0_101] : memref<10x10x128xf32, #tpu.memory_space<vmem>>, vector<8x8x128xf32>
    %77 = vector.shape_cast %76 : vector<8x8x128xf32> to vector<64x128xf32>
    %c1_102 = arith.constant 1 : index
    %c2_103 = arith.constant 2 : index
    %c0_104 = arith.constant 0 : index
    %78 = vector.load %arg11[%c1_102, %c2_103, %c0_104] : memref<10x10x128xf32, #tpu.memory_space<vmem>>, vector<8x8x128xf32>
    %79 = vector.shape_cast %78 : vector<8x8x128xf32> to vector<64x128xf32>
    %c2_105 = arith.constant 2 : index
    %c0_106 = arith.constant 0 : index
    %c0_107 = arith.constant 0 : index
    %80 = vector.load %arg11[%c2_105, %c0_106, %c0_107] : memref<10x10x128xf32, #tpu.memory_space<vmem>>, vector<8x8x128xf32>
    %81 = vector.shape_cast %80 : vector<8x8x128xf32> to vector<64x128xf32>
    %c2_108 = arith.constant 2 : index
    %c1_109 = arith.constant 1 : index
    %c0_110 = arith.constant 0 : index
    %82 = vector.load %arg11[%c2_108, %c1_109, %c0_110] : memref<10x10x128xf32, #tpu.memory_space<vmem>>, vector<8x8x128xf32>
    %83 = vector.shape_cast %82 : vector<8x8x128xf32> to vector<64x128xf32>
    %c2_111 = arith.constant 2 : index
    %c2_112 = arith.constant 2 : index
    %c0_113 = arith.constant 0 : index
    %84 = vector.load %arg11[%c2_111, %c2_112, %c0_113] : memref<10x10x128xf32, #tpu.memory_space<vmem>>, vector<8x8x128xf32>
    %85 = vector.shape_cast %84 : vector<8x8x128xf32> to vector<64x128xf32>
    %86 = tpu.concatenate %69, %71, %73, %75, %77, %79, %81, %83, %85 in 1 : vector<64x128xf32>, vector<64x128xf32>, vector<64x128xf32>, vector<64x128xf32>, vector<64x128xf32>, vector<64x128xf32>, vector<64x128xf32>, vector<64x128xf32>, vector<64x128xf32> -> vector<64x1152xf32>
    %c2_114 = arith.constant 2 : index
    %c0_115 = arith.constant 0 : index
    %c0_116 = arith.constant 0 : index
    %87 = vector.load %arg5[%c2_114, %c0_115, %c0_116] : memref<3x1152x128xf32, #tpu.memory_space<vmem>>, vector<1x1152x128xf32>
    %88 = vector.shape_cast %87 : vector<1x1152x128xf32> to vector<1152x128xf32>
    %cst_117 = arith.constant dense<0.000000e+00> : vector<64x128xf32>
    %89 = tpu.matmul %86, %88, %cst_117 {dimension_numbers = #tpu.dot_dimension_numbers<[1], [0], [0], [1], [0, 0, 1, 1], [], []>} : vector<64x1152xf32>, vector<1152x128xf32>, vector<64x128xf32> -> vector<64x128xf32>
    %90 = arith.addf %66, %89 : vector<64x128xf32>
    %c0_118 = arith.constant 0 : index
    %c0_119 = arith.constant 0 : index
    %91 = vector.load %arg6[%c0_118, %c0_119] : memref<1x128xf32, #tpu.memory_space<vmem>>, vector<1x128xf32>
    %92 = vector.broadcast %91 : vector<1x128xf32> to vector<64x128xf32>
    %93 = arith.addf %90, %92 : vector<64x128xf32>
    %cst_120 = arith.constant 0.000000e+00 : f32
    %94 = vector.broadcast %cst_120 : f32 to vector<64x128xf32>
    %95 = arith.maximumf %93, %94 : vector<64x128xf32>
    %c0_121 = arith.constant 0 : index
    %c0_122 = arith.constant 0 : index
    %96 = vector.load %arg7[%c0_121, %c0_122] : memref<128x512xf32, #tpu.memory_space<vmem>>, vector<128x512xf32>
    %cst_123 = arith.constant dense<0.000000e+00> : vector<64x512xf32>
    %97 = tpu.matmul %95, %96, %cst_123 {dimension_numbers = #tpu.dot_dimension_numbers<[1], [0], [0], [1], [0, 0, 1, 1], [], []>} : vector<64x128xf32>, vector<128x512xf32>, vector<64x512xf32> -> vector<64x512xf32>
    %c0_124 = arith.constant 0 : index
    %c0_125 = arith.constant 0 : index
    %98 = vector.load %arg8[%c0_124, %c0_125] : memref<1x512xf32, #tpu.memory_space<vmem>>, vector<1x512xf32>
    %99 = vector.broadcast %98 : vector<1x512xf32> to vector<64x512xf32>
    %100 = arith.addf %97, %99 : vector<64x512xf32>
    %c0_126 = arith.constant 0 : index
    %c0_127 = arith.constant 0 : index
    %c0_128 = arith.constant 0 : index
    %c0_129 = arith.constant 0 : index
    %c0_130 = arith.constant 0 : index
    %101 = vector.load %arg9[%c0_126, %c0_127, %c0_128, %c0_129, %c0_130] : memref<1x1x8x8x512xf32, #tpu.memory_space<vmem>>, vector<1x1x8x8x512xf32>
    %102 = vector.shape_cast %101 : vector<1x1x8x8x512xf32> to vector<8x8x512xf32>
    %103 = vector.shape_cast %102 : vector<8x8x512xf32> to vector<64x512xf32>
    %104 = arith.addf %100, %103 : vector<64x512xf32>
    %cst_131 = arith.constant 0.000000e+00 : f32
    %105 = vector.broadcast %cst_131 : f32 to vector<64x512xf32>
    %106 = arith.maximumf %104, %105 : vector<64x512xf32>
    %107 = vector.shape_cast %106 : vector<64x512xf32> to vector<8x8x512xf32>
    %c0_132 = arith.constant 0 : index
    %c0_133 = arith.constant 0 : index
    %c0_134 = arith.constant 0 : index
    %c0_135 = arith.constant 0 : index
    %c0_136 = arith.constant 0 : index
    %108 = vector.load %arg10[%c0_132, %c0_133, %c0_134, %c0_135, %c0_136] : memref<1x1x8x8x512xf32, #tpu.memory_space<vmem>>, vector<1x1x8x8x512xf32>
    %109 = vector.shape_cast %108 : vector<1x1x8x8x512xf32> to vector<8x8x512xf32>
    %110 = vector.shape_cast %107 : vector<8x8x512xf32> to vector<1x1x8x8x512xf32>
    tpu.vector_store %arg10[%c0_132, %c0_133, %c0_134, %c0_135, %c0_136], %110 {strides = array<i32>} : memref<1x1x8x8x512xf32, #tpu.memory_space<vmem>>, vector<1x1x8x8x512xf32>,
    return
  }
  func.func @transform_0(%arg0: i32, %arg1: i32) -> (i32, i32, i32, i32, i32) {
    %c1_i32 = arith.constant 1 : i32
    %0 = arith.subi %arg1, %c1_i32 : i32
    %c0_i32 = arith.constant 0 : i32
    %1 = arith.maxsi %0, %c0_i32 : i32
    %c0_i32_0 = arith.constant 0 : i32
    %c0_i32_1 = arith.constant 0 : i32
    %c0_i32_2 = arith.constant 0 : i32
    %c0_i32_3 = arith.constant 0 : i32
    return %arg0, %1, %c0_i32_0, %c0_i32_1, %c0_i32_2 : i32, i32, i32, i32, i32
  }
  func.func @transform_1(%arg0: i32, %arg1: i32) -> (i32, i32, i32, i32, i32) {
    %c0_i32 = arith.constant 0 : i32
    %c0_i32_0 = arith.constant 0 : i32
    %c0_i32_1 = arith.constant 0 : i32
    %c0_i32_2 = arith.constant 0 : i32
    return %arg0, %arg1, %c0_i32, %c0_i32_0, %c0_i32_1 : i32, i32, i32, i32, i32
  }
  func.func @transform_2(%arg0: i32, %arg1: i32) -> (i32, i32, i32, i32, i32) {
    %c1_i32 = arith.constant 1 : i32
    %0 = arith.addi %arg1, %c1_i32 : i32
    %c3_i32 = arith.constant 3 : i32
    %1 = arith.minsi %0, %c3_i32 : i32
    %c0_i32 = arith.constant 0 : i32
    %c0_i32_0 = arith.constant 0 : i32
    %c0_i32_1 = arith.constant 0 : i32
    %c0_i32_2 = arith.constant 0 : i32
    return %arg0, %1, %c0_i32, %c0_i32_0, %c0_i32_1 : i32, i32, i32, i32, i32
  }
  func.func @transform_3(%arg0: i32, %arg1: i32) -> (i32, i32, i32) {
    %c0_i32 = arith.constant 0 : i32
    %c0_i32_0 = arith.constant 0 : i32
    %c0_i32_1 = arith.constant 0 : i32
    %c0_i32_2 = arith.constant 0 : i32
    return %c0_i32, %c0_i32_0, %c0_i32_1 : i32, i32, i32
  }
  func.func @transform_4(%arg0: i32, %arg1: i32) -> (i32, i32) {
    %c0_i32 = arith.constant 0 : i32
    %c0_i32_0 = arith.constant 0 : i32
    %c0_i32_1 = arith.constant 0 : i32
    return %c0_i32, %c0_i32_0 : i32, i32
  }
  func.func @transform_5(%arg0: i32, %arg1: i32) -> (i32, i32) {
    %c0_i32 = arith.constant 0 : i32
    %c0_i32_0 = arith.constant 0 : i32
    %c0_i32_1 = arith.constant 0 : i32
    return %c0_i32, %c0_i32_0 : i32, i32
  }
  func.func @transform_6(%arg0: i32, %arg1: i32) -> (i32, i32) {
    %c0_i32 = arith.constant 0 : i32
    %c0_i32_0 = arith.constant 0 : i32
    %c0_i32_1 = arith.constant 0 : i32
    return %c0_i32, %c0_i32_0 : i32, i32
  }
  func.func @transform_7(%arg0: i32, %arg1: i32) -> (i32, i32, i32, i32, i32) {
    %c0_i32 = arith.constant 0 : i32
    %c0_i32_0 = arith.constant 0 : i32
    %c0_i32_1 = arith.constant 0 : i32
    %c0_i32_2 = arith.constant 0 : i32
    return %arg0, %arg1, %c0_i32, %c0_i32_0, %c0_i32_1 : i32, i32, i32, i32, i32
  }
  func.func @transform_8(%arg0: i32, %arg1: i32) -> (i32, i32, i32, i32, i32) {
    %c0_i32 = arith.constant 0 : i32
    %c0_i32_0 = arith.constant 0 : i32
    %c0_i32_1 = arith.constant 0 : i32
    %c0_i32_2 = arith.constant 0 : i32
    return %arg0, %arg1, %c0_i32, %c0_i32_0, %c0_i32_1 : i32, i32, i32, i32, i32
  }
}

</mosaic_0001>

<llo_original>
// kernel: bottleneck_forward.2
$region0: #{bottleneck_forward.2}
  #allocation0 [shape = 'u32[]', space=smem, size = 0x4, offset = 0x4, fixed_abs, tag = 'smem constant byte address 0x4 - core index']
  #allocation1 [shape = 'u32[72,128]{1,0:T(1,128)}', space=vmem, size = 0x9000, scoped, tag = 'internal scratch']
  %s0 = inlined_call_operand.hbm [shape: f32[512,512], index: 0, kind: input, shape index: {}]
  %s1 = inlined_call_operand.vmem [shape: f32[512,128], index: 1, kind: input, shape index: {}]
  %s2 = inlined_call_operand.hbm [shape: f32[1,128], index: 2, kind: input, shape index: {}]
  %s3 = inlined_call_operand.vmem [shape: f32[512,128], index: 3, kind: output, shape index: {}]
  %s4 = sld [smem:[#allocation0]]
  $region30: #{bottleneck_forward.2} parent=0
    _
  %s6 = ssub.s32 1, %s4
  %s7 = scalar_select 0, %s6, %s4
  $region1: #{bottleneck_forward.2} parent=0
    #allocation2 [shape = 'u8[1048576]{0}', space=vmem, size = 0x100000, scoped, tag = 'input window, operand 0, single buffered']
    #allocation3 [shape = 's32[1]{0}', space=sflag, size = 0x4, scoped, tag = 'scoped memory for bottleneck_forward.2']
    #allocation4 [shape = 'u8[512]{0}', space=vmem, size = 0x400, scoped, tag = 'input window, operand 2, single buffered']
    #allocation5 [shape = 's32[1]{0}', space=sflag, size = 0x4, scoped, tag = 'scoped memory for bottleneck_forward.2']
    %8 = vsyncpa [#allocation3], 0
    %9 = vsyncpa [#allocation5], 0
    // Predicated region
    $region2: #{bottleneck_forward.2} parent=1 // pred_check
      _
    $region3: #{bottleneck_forward.2} parent=1 // pred_check_branch
      %11 = sbr.rel (0) target = $region5
    $region4: #{bottleneck_forward.2} parent=1 // pred_region
      %13 = vsyncadd [#allocation3], 0
      %s14 = sshll.u32 %s0, 4
      %s15 = int_to_ptr.hbm [resolvable:$true] %s14
      %s16 = sshll.u32 [#allocation2], 4
      %s17 = int_to_ptr.vmem [resolvable:$true] %s16
      %22 = dma.hbm_to_vmem [thread:$0]  %s15, 32768, %s17, [#allocation3], 512, 512, 32
    $region5: #{bottleneck_forward.2} parent=1 // pred_fallthru
      _
    // Predicated region
    $region6: #{bottleneck_forward.2} parent=1 // pred_check
      _
    $region7: #{bottleneck_forward.2} parent=1 // pred_check_branch
      %24 = sbr.rel (0) target = $region9
    $region8: #{bottleneck_forward.2} parent=1 // pred_region
      _
    $region9: #{bottleneck_forward.2} parent=1 // pred_fallthru
      _
    // Predicated region
    $region10: #{bottleneck_forward.2} parent=1 // pred_check
      _
    $region11: #{bottleneck_forward.2} parent=1 // pred_check_branch
      %26 = sbr.rel (0) target = $region13
    $region12: #{bottleneck_forward.2} parent=1 // pred_region
      %28 = vsyncadd [#allocation5], 0
      %s30 = sshll.u32 %s2, 4
      %s31 = int_to_ptr.hbm [resolvable:$true] %s30
      %s32 = sshll.u32 [#allocation4], 4
      %s33 = int_to_ptr.vmem [resolvable:$true] %s32
      %35 = dma.hbm_to_vmem [thread:$0]  %s31, 16, %s33, [#allocation5]
    $region13: #{bottleneck_forward.2} parent=1 // pred_fallthru
      _
    // Predicated region
    $region14: #{bottleneck_forward.2} parent=1 // pred_check
      _
    $region15: #{bottleneck_forward.2} parent=1 // pred_check_branch
      %37 = sbr.rel (0) target = $region17
    $region16: #{bottleneck_forward.2} parent=1 // pred_region
      %39 = dma.done [#allocation3], 32768
    $region17: #{bottleneck_forward.2} parent=1 // pred_fallthru
      _
    // Predicated region
    $region18: #{bottleneck_forward.2} parent=1 // pred_check
      _
    $region19: #{bottleneck_forward.2} parent=1 // pred_check_branch
      %41 = sbr.rel (0) target = $region21
    $region20: #{bottleneck_forward.2} parent=1 // pred_region
      %43 = dma.done [#allocation5], 16
    $region21: #{bottleneck_forward.2} parent=1 // pred_fallthru
      _
    %v44 = vld [vmem:[#allocation2] sm:$0xff]
    %v45 = vld [vmem:[#allocation2 + $0x8] sm:$0xff]
    %v46 = vld [vmem:[#allocation2 + $0x10] sm:$0xff]
    %v47 = vld [vmem:[#allocation2 + $0x18] sm:$0xff]
    %v48 = vld [vmem:[#allocation2 + $0x20] sm:$0xff]
    %v49 = vld [vmem:[#allocation2 + $0x28] sm:$0xff]
    %v50 = vld [vmem:[#allocation2 + $0x30] sm:$0xff]
    %v51 = vld [vmem:[#allocation2 + $0x38] sm:$0xff]
    %v52 = vld [vmem:[#allocation2 + $0x40] sm:$0xff]
    %v53 = vld [vmem:[#allocation2 + $0x48] sm:$0xff]
    %v54 = vld [vmem:[#allocation2 + $0x50] sm:$0xff]
    %v55 = vld [vmem:[#allocation2 + $0x58] sm:$0xff]
    %v56 = vld [vmem:[#allocation2 + $0x60] sm:$0xff]
    %v57 = vld [vmem:[#allocation2 + $0x68] sm:$0xff]
    %v58 = vld [vmem:[#allocation2 + $0x70] sm:$0xff]
    %v59 = vld [vmem:[#allocation2 + $0x78] sm:$0xff]
    %v60 = vld [vmem:[#allocation2 + $0x80] sm:$0xff]
    %v61 = vld [vmem:[#allocation2 + $0x88] sm:$0xff]
    %v62 = vld [vmem:[#allocation2 + $0x90] sm:$0xff]
    %v63 = vld [vmem:[#allocation2 + $0x98] sm:$0xff]
    %v64 = vld [vmem:[#allocation2 + $0xa0] sm:$0xff]
    %v65 = vld [vmem:[#allocation2 + $0xa8] sm:$0xff]
    %v66 = vld [vmem:[#allocation2 + $0xb0] sm:$0xff]
    %v67 = vld [vmem:[#allocation2 + $0xb8] sm:$0xff]
    %v68 = vld [vmem:[#allocation2 + $0xc0] sm:$0xff]
    %v69 = vld [vmem:[#allocation2 + $0xc8] sm:$0xff]
    %v70 = vld [vmem:[#allocation2 + $0xd0] sm:$0xff]
    %v71 = vld [vmem:[#allocation2 + $0xd8] sm:$0xff]
    %v72 = vld [vmem:[#allocation2 + $0xe0] sm:$0xff]
    %v73 = vld [vmem:[#allocation2 + $0xe8] sm:$0xff]
    %v74 = vld [vmem:[#allocation2 + $0xf0] sm:$0xff]
    %v75 = vld [vmem:[#allocation2 + $0xf8] sm:$0xff]
    %v76 = vld [vmem:[#allocation2 + $0x100] sm:$0xff]
    %v77 = vld [vmem:[#allocation2 + $0x108] sm:$0xff]
    %v78 = vld [vmem:[#allocation2 + $0x110] sm:$0xff]
    %v79 = vld [vmem:[#allocation2 + $0x118] sm:$0xff]
    %v80 = vld [vmem:[#allocation2 + $0x120] sm:$0xff]
    %v81 = vld [vmem:[#allocation2 + $0x128] sm:$0xff]
    %v82 = vld [vmem:[#allocation2 + $0x130] sm:$0xff]
    %v83 = vld [vmem:[#allocation2 + $0x138] sm:$0xff]
    %v84 = vld [vmem:[#allocation2 + $0x140] sm:$0xff]
    %v85 = vld [vmem:[#allocation2 + $0x148] sm:$0xff]
    %v86 = vld [vmem:[#allocation2 + $0x150] sm:$0xff]
    %v87 = vld [vmem:[#allocation2 + $0x158] sm:$0xff]
    %v88 = vld [vmem:[#allocation2 + $0x160] sm:$0xff]
    %v89 = vld [vmem:[#allocation2 + $0x168] sm:$0xff]
    %v90 = vld [vmem:[#allocation2 + $0x170] sm:$0xff]
    %v91 = vld [vmem:[#allocation2 + $0x178] sm:$0xff]
    %v92 = vld [vmem:[#allocation2 + $0x180] sm:$0xff]
    %v93 = vld [vmem:[#allocation2 + $0x188] sm:$0xff]
    %v94 = vld [vmem:[#allocation2 + $0x190] sm:$0xff]
    %v95 = vld [vmem:[#allocation2 + $0x198] sm:$0xff]
    %v96 = vld [vmem:[#allocation2 + $0x1a0] sm:$0xff]
    %v97 = vld [vmem:[#allocation2 + $0x1a8] sm:$0xff]
    %v98 = vld [vmem:[#allocation2 + $0x1b0] sm:$0xff]
    %v99 = vld [vmem:[#allocation2 + $0x1b8] sm:$0xff]
    %v100 = vld [vmem:[#allocation2 + $0x1c0] sm:$0xff]
    %v101 = vld [vmem:[#allocation2 + $0x1c8] sm:$0xff]
    %v102 = vld [vmem:[#allocation2 + $0x1d0] sm:$0xff]
    %v103 = vld [vmem:[#allocation2 + $0x1d8] sm:$0xff]
    %v104 = vld [vmem:[#allocation2 + $0x1e0] sm:$0xff]
    %v105 = vld [vmem:[#allocation2 + $0x1e8] sm:$0xff]
    %v106 = vld [vmem:[#allocation2 + $0x1f0] sm:$0xff]
    %v107 = vld [vmem:[#allocation2 + $0x1f8] sm:$0xff]
    %v108 = vld [vmem:[#allocation2 + $0x200] sm:$0xff]
    %v109 = vld [vmem:[#allocation2 + $0x208] sm:$0xff]
    %v110 = vld [vmem:[#allocation2 + $0x210] sm:$0xff]
    %v111 = vld [vmem:[#allocation2 + $0x218] sm:$0xff]
    %v112 = vld [vmem:[#allocation2 + $0x220] sm:$0xff]
    %v113 = vld [vmem:[#allocation2 + $0x228] sm:$0xff]
    %v114 = vld [vmem:[#allocation2 + $0x230] sm:$0xff]
    %v115 = vld [vmem:[#allocation2 + $0x238] sm:$0xff]
    %v116 = vld [vmem:[#allocation2 + $0x240] sm:$0xff]
    %v117 = vld [vmem:[#allocation2 + $0x248] sm:$0xff]
    %v118 = vld [vmem:[#allocation2 + $0x250] sm:$0xff]
    %v119 = vld [vmem:[#allocation2 + $0x258] sm:$0xff]
    %v120 = vld [vmem:[#allocation2 + $0x260] sm:$0xff]
    %v121 = vld [vmem:[#allocation2 + $0x268] sm:$0xff]
    %v122 = vld [vmem:[#allocation2 + $0x270] sm:$0xff]
    %v123 = vld [vmem:[#allocation2 + $0x278] sm:$0xff]
    %v124 = vld [vmem:[#allocation2 + $0x280] sm:$0xff]
    %v125 = vld [vmem:[#allocation2 + $0x288] sm:$0xff]
    %v126 = vld [vmem:[#allocation2 + $0x290] sm:$0xff]
    %v127 = vld [vmem:[#allocation2 + $0x298] sm:$0xff]
    %v128 = vld [vmem:[#allocation2 + $0x2a0] sm:$0xff]
    %v129 = vld [vmem:[#allocation2 + $0x2a8] sm:$0xff]
    %v130 = vld [vmem:[#allocation2 + $0x2b0] sm:$0xff]
    %v131 = vld [vmem:[#allocation2 + $0x2b8] sm:$0xff]
    %v132 = vld [vmem:[#allocation2 + $0x2c0] sm:$0xff]
    %v133 = vld [vmem:[#allocation2 + $0x2c8] sm:$0xff]
    %v134 = vld [vmem:[#allocation2 + $0x2d0] sm:$0xff]
    %v135 = vld [vmem:[#allocation2 + $0x2d8] sm:$0xff]
    %v136 = vld [vmem:[#allocation2 + $0x2e0] sm:$0xff]
    %v137 = vld [vmem:[#allocation2 + $0x2e8] sm:$0xff]
    %v138 = vld [vmem:[#allocation2 + $0x2f0] sm:$0xff]
    %v139 = vld [vmem:[#allocation2 + $0x2f8] sm:$0xff]
    %v140 = vld [vmem:[#allocation2 + $0x300] sm:$0xff]
    %v141 = vld [vmem:[#allocation2 + $0x308] sm:$0xff]
    %v142 = vld [vmem:[#allocation2 + $0x310] sm:$0xff]
    %v143 = vld [vmem:[#allocation2 + $0x318] sm:$0xff]
    %v144 = vld [vmem:[#allocation2 + $0x320] sm:$0xff]
    %v145 = vld [vmem:[#allocation2 + $0x328] sm:$0xff]
    %v146 = vld [vmem:[#allocation2 + $0x330] sm:$0xff]
    %v147 = vld [vmem:[#allocation2 + $0x338] sm:$0xff]
    %v148 = vld [vmem:[#allocation2 + $0x340] sm:$0xff]
    %v149 = vld [vmem:[#allocation2 + $0x348] sm:$0xff]
    %v150 = vld [vmem:[#allocation2 + $0x350] sm:$0xff]
    %v151 = vld [vmem:[#allocation2 + $0x358] sm:$0xff]
    %v152 = vld [vmem:[#allocation2 + $0x360] sm:$0xff]
    %v153 = vld [vmem:[#allocation2 + $0x368] sm:$0xff]
    %v154 = vld [vmem:[#allocation2 + $0x370] sm:$0xff]
    %v155 = vld [vmem:[#allocation2 + $0x378] sm:$0xff]
    %v156 = vld [vmem:[#allocation2 + $0x380] sm:$0xff]
    %v157 = vld [vmem:[#allocation2 + $0x388] sm:$0xff]
    %v158 = vld [vmem:[#allocation2 + $0x390] sm:$0xff]
    %v159 = vld [vmem:[#allocation2 + $0x398] sm:$0xff]
    %v160 = vld [vmem:[#allocation2 + $0x3a0] sm:$0xff]
    %v161 = vld [vmem:[#allocation2 + $0x3a8] sm:$0xff]
    %v162 = vld [vmem:[#allocation2 + $0x3b0] sm:$0xff]
    %v163 = vld [vmem:[#allocation2 + $0x3b8] sm:$0xff]
    %v164 = vld [vmem:[#allocation2 + $0x3c0] sm:$0xff]
    %v165 = vld [vmem:[#allocation2 + $0x3c8] sm:$0xff]
    %v166 = vld [vmem:[#allocation2 + $0x3d0] sm:$0xff]
    %v167 = vld [vmem:[#allocation2 + $0x3d8] sm:$0xff]
    %v168 = vld [vmem:[#allocation2 + $0x3e0] sm:$0xff]
    %v169 = vld [vmem:[#allocation2 + $0x3e8] sm:$0xff]
    %v170 = vld [vmem:[#allocation2 + $0x3f0] sm:$0xff]
    %v171 = vld [vmem:[#allocation2 + $0x3f8] sm:$0xff]
    %v172 = vld [vmem:[#allocation2 + $0x400] sm:$0xff]
    %v173 = vld [vmem:[#allocation2 + $0x408] sm:$0xff]
    %v174 = vld [vmem:[#allocation2 + $0x410] sm:$0xff]
    %v175 = vld [vmem:[#allocation2 + $0x418] sm:$0xff]
    %v176 = vld [vmem:[#allocation2 + $0x420] sm:$0xff]
    %v177 = vld [vmem:[#allocation2 + $0x428] sm:$0xff]
    %v178 = vld [vmem:[#allocation2 + $0x430] sm:$0xff]
    %v179 = vld [vmem:[#allocation2 + $0x438] sm:$0xff]
    %v180 = vld [vmem:[#allocation2 + $0x440] sm:$0xff]
    %v181 = vld [vmem:[#allocation2 + $0x448] sm:$0xff]
    %v182 = vld [vmem:[#allocation2 + $0x450] sm:$0xff]
    %v183 = vld [vmem:[#allocation2 + $0x458] sm:$0xff]
    %v184 = vld [vmem:[#allocation2 + $0x460] sm:$0xff]
    %v185 = vld [vmem:[#allocation2 + $0x468] sm:$0xff]
    %v186 = vld [vmem:[#allocation2 + $0x470] sm:$0xff]
    %v187 = vld [vmem:[#allocation2 + $0x478] sm:$0xff]
    %v188 = vld [vmem:[#allocation2 + $0x480] sm:$0xff]
    %v189 = vld [vmem:[#allocation2 + $0x488] sm:$0xff]
    %v190 = vld [vmem:[#allocation2 + $0x490] sm:$0xff]
    %v191 = vld [vmem:[#allocation2 + $0x498] sm:$0xff]
    %v192 = vld [vmem:[#allocation2 + $0x4a0] sm:$0xff]
    %v193 = vld [vmem:[#allocation2 + $0x4a8] sm:$0xff]
    %v194 = vld [vmem:[#allocation2 + $0x4b0] sm:$0xff]
    %v195 = vld [vmem:[#allocation2 + $0x4b8] sm:$0xff]
    %v196 = vld [vmem:[#allocation2 + $0x4c0] sm:$0xff]
    %v197 = vld [vmem:[#allocation2 + $0x4c8] sm:$0xff]
    %v198 = vld [vmem:[#allocation2 + $0x4d0] sm:$0xff]
    %v199 = vld [vmem:[#allocation2 + $0x4d8] sm:$0xff]
    %v200 = vld [vmem:[#allocation2 + $0x4e0] sm:$0xff]
    %v201 = vld [vmem:[#allocation2 + $0x4e8] sm:$0xff]
    %v202 = vld [vmem:[#allocation2 + $0x4f0] sm:$0xff]
    %v203 = vld [vmem:[#allocation2 + $0x4f8] sm:$0xff]
    %v204 = vld [vmem:[#allocation2 + $0x500] sm:$0xff]
    %v205 = vld [vmem:[#allocation2 + $0x508] sm:$0xff]
    %v206 = vld [vmem:[#allocation2 + $0x510] sm:$0xff]
    %v207 = vld [vmem:[#allocation2 + $0x518] sm:$0xff]
    %v208 = vld [vmem:[#allocation2 + $0x520] sm:$0xff]
    %v209 = vld [vmem:[#allocation2 + $0x528] sm:$0xff]
    %v210 = vld [vmem:[#allocation2 + $0x530] sm:$0xff]
    %v211 = vld [vmem:[#allocation2 + $0x538] sm:$0xff]
    %v212 = vld [vmem:[#allocation2 + $0x540] sm:$0xff]
    %v213 = vld [vmem:[#allocation2 + $0x548] sm:$0xff]
    %v214 = vld [vmem:[#allocation2 + $0x550] sm:$0xff]
    %v215 = vld [vmem:[#allocation2 + $0x558] sm:$0xff]
    %v216 = vld [vmem:[#allocation2 + $0x560] sm:$0xff]
    %v217 = vld [vmem:[#allocation2 + $0x568] sm:$0xff]
    %v218 = vld [vmem:[#allocation2 + $0x570] sm:$0xff]
    %v219 = vld [vmem:[#allocation2 + $0x578] sm:$0xff]
    %v220 = vld [vmem:[#allocation2 + $0x580] sm:$0xff]
    %v221 = vld [vmem:[#allocation2 + $0x588] sm:$0xff]
    %v222 = vld [vmem:[#allocation2 + $0x590] sm:$0xff]
    %v223 = vld [vmem:[#allocation2 + $0x598] sm:$0xff]
    %v224 = vld [vmem:[#allocation2 + $0x5a0] sm:$0xff]
    %v225 = vld [vmem:[#allocation2 + $0x5a8] sm:$0xff]
    %v226 = vld [vmem:[#allocation2 + $0x5b0] sm:$0xff]
    %v227 = vld [vmem:[#allocation2 + $0x5b8] sm:$0xff]
    %v228 = vld [vmem:[#allocation2 + $0x5c0] sm:$0xff]
    %v229 = vld [vmem:[#allocation2 + $0x5c8] sm:$0xff]
    %v230 = vld [vmem:[#allocation2 + $0x5d0] sm:$0xff]
    %v231 = vld [vmem:[#allocation2 + $0x5d8] sm:$0xff]
    %v232 = vld [vmem:[#allocation2 + $0x5e0] sm:$0xff]
    %v233 = vld [vmem:[#allocation2 + $0x5e8] sm:$0xff]
    %v234 = vld [vmem:[#allocation2 + $0x5f0] sm:$0xff]
    %v235 = vld [vmem:[#allocation2 + $0x5f8] sm:$0xff]
    %v236 = vld [vmem:[#allocation2 + $0x600] sm:$0xff]
    %v237 = vld [vmem:[#allocation2 + $0x608] sm:$0xff]
    %v238 = vld [vmem:[#allocation2 + $0x610] sm:$0xff]
    %v239 = vld [vmem:[#allocation2 + $0x618] sm:$0xff]
    %v240 = vld [vmem:[#allocation2 + $0x620] sm:$0xff]
    %v241 = vld [vmem:[#allocation2 + $0x628] sm:$0xff]
    %v242 = vld [vmem:[#allocation2 + $0x630] sm:$0xff]
    %v243 = vld [vmem:[#allocation2 + $0x638] sm:$0xff]
    %v244 = vld [vmem:[#allocation2 + $0x640] sm:$0xff]
    %v245 = vld [vmem:[#allocation2 + $0x648] sm:$0xff]
    %v246 = vld [vmem:[#allocation2 + $0x650] sm:$0xff]
    %v247 = vld [vmem:[#allocation2 + $0x658] sm:$0xff]
    %v248 = vld [vmem:[#allocation2 + $0x660] sm:$0xff]
    %v249 = vld [vmem:[#allocation2 + $0x668] sm:$0xff]
    %v250 = vld [vmem:[#allocation2 + $0x670] sm:$0xff]
    %v251 = vld [vmem:[#allocation2 + $0x678] sm:$0xff]
    %v252 = vld [vmem:[#allocation2 + $0x680] sm:$0xff]
    %v253 = vld [vmem:[#allocation2 + $0x688] sm:$0xff]
    %v254 = vld [vmem:[#allocation2 + $0x690] sm:$0xff]
    %v255 = vld [vmem:[#allocation2 + $0x698] sm:$0xff]
    %v256 = vld [vmem:[#allocation2 + $0x6a0] sm:$0xff]
    %v257 = vld [vmem:[#allocation2 + $0x6a8] sm:$0xff]
    %v258 = vld [vmem:[#allocation2 + $0x6b0] sm:$0xff]
    %v259 = vld [vmem:[#allocation2 + $0x6b8] sm:$0xff]
    %v260 = vld [vmem:[#allocation2 + $0x6c0] sm:$0xff]
    %v261 = vld [vmem:[#allocation2 + $0x6c8] sm:$0xff]
    %v262 = vld [vmem:[#allocation2 + $0x6d0] sm:$0xff]
    %v263 = vld [vmem:[#allocation2 + $0x6d8] sm:$0xff]
    %v264 = vld [vmem:[#allocation2 + $0x6e0] sm:$0xff]
    %v265 = vld [vmem:[#allocation2 + $0x6e8] sm:$0xff]
    %v266 = vld [vmem:[#allocation2 + $0x6f0] sm:$0xff]
    %v267 = vld [vmem:[#allocation2 + $0x6f8] sm:$0xff]
    %v268 = vld [vmem:[#allocation2 + $0x700] sm:$0xff]
    %v269 = vld [vmem:[#allocation2 + $0x708] sm:$0xff]
    %v270 = vld [vmem:[#allocation2 + $0x710] sm:$0xff]
    %v271 = vld [vmem:[#allocation2 + $0x718] sm:$0xff]
    %v272 = vld [vmem:[#allocation2 + $0x720] sm:$0xff]
    %v273 = vld [vmem:[#allocation2 + $0x728] sm:$0xff]
    %v274 = vld [vmem:[#allocation2 + $0x730] sm:$0xff]
    %v275 = vld [vmem:[#allocation2 + $0x738] sm:$0xff]
    %v276 = vld [vmem:[#allocation2 + $0x740] sm:$0xff]
    %v277 = vld [vmem:[#allocation2 + $0x748] sm:$0xff]
    %v278 = vld [vmem:[#allocation2 + $0x750] sm:$0xff]
    %v279 = vld [vmem:[#allocation2 + $0x758] sm:$0xff]
    %v280 = vld [vmem:[#allocation2 + $0x760] sm:$0xff]
    %v281 = vld [vmem:[#allocation2 + $0x768] sm:$0xff]
    %v282 = vld [vmem:[#allocation2 + $0x770] sm:$0xff]
    %v283 = vld [vmem:[#allocation2 + $0x778] sm:$0xff]
    %v284 = vld [vmem:[#allocation2 + $0x780] sm:$0xff]
    %v285 = vld [vmem:[#allocation2 + $0x788] sm:$0xff]
    %v286 = vld [vmem:[#allocation2 + $0x790] sm:$0xff]
    %v287 = vld [vmem:[#allocation2 + $0x798] sm:$0xff]
    %v288 = vld [vmem:[#allocation2 + $0x7a0] sm:$0xff]
    %v289 = vld [vmem:[#allocation2 + $0x7a8] sm:$0xff]
    %v290 = vld [vmem:[#allocation2 + $0x7b0] sm:$0xff]
    %v291 = vld [vmem:[#allocation2 + $0x7b8] sm:$0xff]
    %v292 = vld [vmem:[#allocation2 + $0x7c0] sm:$0xff]
    %v293 = vld [vmem:[#allocation2 + $0x7c8] sm:$0xff]
    %v294 = vld [vmem:[#allocation2 + $0x7d0] sm:$0xff]
    %v295 = vld [vmem:[#allocation2 + $0x7d8] sm:$0xff]
    %v296 = vld [vmem:[#allocation2 + $0x7e0] sm:$0xff]
    %v297 = vld [vmem:[#allocation2 + $0x7e8] sm:$0xff]
    %v298 = vld [vmem:[#allocation2 + $0x7f0] sm:$0xff]
    %v299 = vld [vmem:[#allocation2 + $0x7f8] sm:$0xff]
    %v300 = vld [vmem:[%s1] sm:$0xff]
    %v301 = vld [vmem:[%s1 + $0x8] sm:$0xff]
    %v302 = vld [vmem:[%s1 + $0x10] sm:$0xff]
    %v303 = vld [vmem:[%s1 + $0x18] sm:$0xff]
    %v304 = vld [vmem:[%s1 + $0x20] sm:$0xff]
    %v305 = vld [vmem:[%s1 + $0x28] sm:$0xff]
    %v306 = vld [vmem:[%s1 + $0x30] sm:$0xff]
    %v307 = vld [vmem:[%s1 + $0x38] sm:$0xff]
    %v308 = vld [vmem:[%s1 + $0x40] sm:$0xff]
    %v309 = vld [vmem:[%s1 + $0x48] sm:$0xff]
    %v310 = vld [vmem:[%s1 + $0x50] sm:$0xff]
    %v311 = vld [vmem:[%s1 + $0x58] sm:$0xff]
    %v312 = vld [vmem:[%s1 + $0x60] sm:$0xff]
    %v313 = vld [vmem:[%s1 + $0x68] sm:$0xff]
    %v314 = vld [vmem:[%s1 + $0x70] sm:$0xff]
    %v315 = vld [vmem:[%s1 + $0x78] sm:$0xff]
    %v316 = vld [vmem:[%s1 + $0x80] sm:$0xff]
    %v317 = vld [vmem:[%s1 + $0x88] sm:$0xff]
    %v318 = vld [vmem:[%s1 + $0x90] sm:$0xff]
    %v319 = vld [vmem:[%s1 + $0x98] sm:$0xff]
    %v320 = vld [vmem:[%s1 + $0xa0] sm:$0xff]
    %v321 = vld [vmem:[%s1 + $0xa8] sm:$0xff]
    %v322 = vld [vmem:[%s1 + $0xb0] sm:$0xff]
    %v323 = vld [vmem:[%s1 + $0xb8] sm:$0xff]
    %v324 = vld [vmem:[%s1 + $0xc0] sm:$0xff]
    %v325 = vld [vmem:[%s1 + $0xc8] sm:$0xff]
    %v326 = vld [vmem:[%s1 + $0xd0] sm:$0xff]
    %v327 = vld [vmem:[%s1 + $0xd8] sm:$0xff]
    %v328 = vld [vmem:[%s1 + $0xe0] sm:$0xff]
    %v329 = vld [vmem:[%s1 + $0xe8] sm:$0xff]
    %v330 = vld [vmem:[%s1 + $0xf0] sm:$0xff]
    %v331 = vld [vmem:[%s1 + $0xf8] sm:$0xff]
    %v332 = vld [vmem:[%s1 + $0x100] sm:$0xff]
    %v333 = vld [vmem:[%s1 + $0x108] sm:$0xff]
    %v334 = vld [vmem:[%s1 + $0x110] sm:$0xff]
    %v335 = vld [vmem:[%s1 + $0x118] sm:$0xff]
    %v336 = vld [vmem:[%s1 + $0x120] sm:$0xff]
    %v337 = vld [vmem:[%s1 + $0x128] sm:$0xff]
    %v338 = vld [vmem:[%s1 + $0x130] sm:$0xff]
    %v339 = vld [vmem:[%s1 + $0x138] sm:$0xff]
    %v340 = vld [vmem:[%s1 + $0x140] sm:$0xff]
    %v341 = vld [vmem:[%s1 + $0x148] sm:$0xff]
    %v342 = vld [vmem:[%s1 + $0x150] sm:$0xff]
    %v343 = vld [vmem:[%s1 + $0x158] sm:$0xff]
    %v344 = vld [vmem:[%s1 + $0x160] sm:$0xff]
    %v345 = vld [vmem:[%s1 + $0x168] sm:$0xff]
    %v346 = vld [vmem:[%s1 + $0x170] sm:$0xff]
    %v347 = vld [vmem:[%s1 + $0x178] sm:$0xff]
    %v348 = vld [vmem:[%s1 + $0x180] sm:$0xff]
    %v349 = vld [vmem:[%s1 + $0x188] sm:$0xff]
    %v350 = vld [vmem:[%s1 + $0x190] sm:$0xff]
    %v351 = vld [vmem:[%s1 + $0x198] sm:$0xff]
    %v352 = vld [vmem:[%s1 + $0x1a0] sm:$0xff]
    %v353 = vld [vmem:[%s1 + $0x1a8] sm:$0xff]
    %v354 = vld [vmem:[%s1 + $0x1b0] sm:$0xff]
    %v355 = vld [vmem:[%s1 + $0x1b8] sm:$0xff]
    %v356 = vld [vmem:[%s1 + $0x1c0] sm:$0xff]
    %v357 = vld [vmem:[%s1 + $0x1c8] sm:$0xff]
    %v358 = vld [vmem:[%s1 + $0x1d0] sm:$0xff]
    %v359 = vld [vmem:[%s1 + $0x1d8] sm:$0xff]
    %v360 = vld [vmem:[%s1 + $0x1e0] sm:$0xff]
    %v361 = vld [vmem:[%s1 + $0x1e8] sm:$0xff]
    %v362 = vld [vmem:[%s1 + $0x1f0] sm:$0xff]
    %v363 = vld [vmem:[%s1 + $0x1f8] sm:$0xff]
    %v364 = vld [vmem:[#allocation4] sm:$0x1]
    %v366 = vperm.slane %v364, 0
    %368 = vmatpush.msra.mxu0 %v315
    %369 = vmatpush.msra.mxu0 %v314
    %370 = vmatpush.msra.mxu0 %v313
    %371 = vmatpush.msra.mxu0 %v312
    %372 = vmatpush.msra.mxu0 %v311
    %373 = vmatpush.msra.mxu0 %v310
    %374 = vmatpush.msra.mxu0 %v309
    %375 = vmatpush.msra.mxu0 %v308
    %376 = vmatpush.msra.mxu0 %v307
    %377 = vmatpush.msra.mxu0 %v306
    %378 = vmatpush.msra.mxu0 %v305
    %379 = vmatpush.msra.mxu0 %v304
    %380 = vmatpush.msra.mxu0 %v303
    %381 = vmatpush.msra.mxu0 %v302
    %382 = vmatpush.msra.mxu0 %v301
    %383 = vmatpush.msra.mxu0 %v300
    %384 = vmatmul.f32.gmra.mxu0 %v44
    %v385 = vpop.f32.mrf.mxu0
    %v386 = vadd.f32 %v366, %v385
    %387 = vmatmul.f32.gmra.mxu0 %v48
    %v388 = vpop.f32.mrf.mxu0
    %v389 = vadd.f32 %v366, %v388
    %390 = vmatmul.f32.gmra.mxu0 %v52
    %v391 = vpop.f32.mrf.mxu0
    %v392 = vadd.f32 %v366, %v391
    %393 = vmatmul.f32.gmra.mxu0 %v56
    %v394 = vpop.f32.mrf.mxu0
    %v395 = vadd.f32 %v366, %v394
    %396 = vmatmul.f32.gmra.mxu0 %v60
    %v397 = vpop.f32.mrf.mxu0
    %v398 = vadd.f32 %v366, %v397
    %399 = vmatmul.f32.gmra.mxu0 %v64
    %v400 = vpop.f32.mrf.mxu0
    %v401 = vadd.f32 %v366, %v400
    %402 = vmatmul.f32.gmra.mxu0 %v68
    %v403 = vpop.f32.mrf.mxu0
    %v404 = vadd.f32 %v366, %v403
    %405 = vmatmul.f32.gmra.mxu0 %v72
    %v406 = vpop.f32.mrf.mxu0
    %v407 = vadd.f32 %v366, %v406
    %408 = vmatmul.f32.gmra.mxu0 %v76
    %v409 = vpop.f32.mrf.mxu0
    %v410 = vadd.f32 %v366, %v409
    %411 = vmatmul.f32.gmra.mxu0 %v80
    %v412 = vpop.f32.mrf.mxu0
    %v413 = vadd.f32 %v366, %v412
    %414 = vmatmul.f32.gmra.mxu0 %v84
    %v415 = vpop.f32.mrf.mxu0
    %v416 = vadd.f32 %v366, %v415
    %417 = vmatmul.f32.gmra.mxu0 %v88
    %v418 = vpop.f32.mrf.mxu0
    %v419 = vadd.f32 %v366, %v418
    %420 = vmatmul.f32.gmra.mxu0 %v92
    %v421 = vpop.f32.mrf.mxu0
    %v422 = vadd.f32 %v366, %v421
    %423 = vmatmul.f32.gmra.mxu0 %v96
    %v424 = vpop.f32.mrf.mxu0
    %v425 = vadd.f32 %v366, %v424
    %426 = vmatmul.f32.gmra.mxu0 %v100
    %v427 = vpop.f32.mrf.mxu0
    %v428 = vadd.f32 %v366, %v427
    %429 = vmatmul.f32.gmra.mxu0 %v104
    %v430 = vpop.f32.mrf.mxu0
    %v431 = vadd.f32 %v366, %v430
    %432 = vmatmul.f32.gmra.mxu0 %v108
    %v433 = vpop.f32.mrf.mxu0
    %v434 = vadd.f32 %v366, %v433
    %435 = vmatmul.f32.gmra.mxu0 %v112
    %v436 = vpop.f32.mrf.mxu0
    %v437 = vadd.f32 %v366, %v436
    %438 = vmatmul.f32.gmra.mxu0 %v116
    %v439 = vpop.f32.mrf.mxu0
    %v440 = vadd.f32 %v366, %v439
    %441 = vmatmul.f32.gmra.mxu0 %v120
    %v442 = vpop.f32.mrf.mxu0
    %v443 = vadd.f32 %v366, %v442
    %444 = vmatmul.f32.gmra.mxu0 %v124
    %v445 = vpop.f32.mrf.mxu0
    %v446 = vadd.f32 %v366, %v445
    %447 = vmatmul.f32.gmra.mxu0 %v128
    %v448 = vpop.f32.mrf.mxu0
    %v449 = vadd.f32 %v366, %v448
    %450 = vmatmul.f32.gmra.mxu0 %v132
    %v451 = vpop.f32.mrf.mxu0
    %v452 = vadd.f32 %v366, %v451
    %453 = vmatmul.f32.gmra.mxu0 %v136
    %v454 = vpop.f32.mrf.mxu0
    %v455 = vadd.f32 %v366, %v454
    %456 = vmatmul.f32.gmra.mxu0 %v140
    %v457 = vpop.f32.mrf.mxu0
    %v458 = vadd.f32 %v366, %v457
    %459 = vmatmul.f32.gmra.mxu0 %v144
    %v460 = vpop.f32.mrf.mxu0
    %v461 = vadd.f32 %v366, %v460
    %462 = vmatmul.f32.gmra.mxu0 %v148
    %v463 = vpop.f32.mrf.mxu0
    %v464 = vadd.f32 %v366, %v463
    %465 = vmatmul.f32.gmra.mxu0 %v152
    %v466 = vpop.f32.mrf.mxu0
    %v467 = vadd.f32 %v366, %v466
    %468 = vmatmul.f32.gmra.mxu0 %v156
    %v469 = vpop.f32.mrf.mxu0
    %v470 = vadd.f32 %v366, %v469
    %471 = vmatmul.f32.gmra.mxu0 %v160
    %v472 = vpop.f32.mrf.mxu0
    %v473 = vadd.f32 %v366, %v472
    %474 = vmatmul.f32.gmra.mxu0 %v164
    %v475 = vpop.f32.mrf.mxu0
    %v476 = vadd.f32 %v366, %v475
    %477 = vmatmul.f32.gmra.mxu0 %v168
    %v478 = vpop.f32.mrf.mxu0
    %v479 = vadd.f32 %v366, %v478
    %480 = vmatmul.f32.gmra.mxu0 %v172
    %v481 = vpop.f32.mrf.mxu0
    %v482 = vadd.f32 %v366, %v481
    %483 = vmatmul.f32.gmra.mxu0 %v176
    %v484 = vpop.f32.mrf.mxu0
    %v485 = vadd.f32 %v366, %v484
    %486 = vmatmul.f32.gmra.mxu0 %v180
    %v487 = vpop.f32.mrf.mxu0
    %v488 = vadd.f32 %v366, %v487
    %489 = vmatmul.f32.gmra.mxu0 %v184
    %v490 = vpop.f32.mrf.mxu0
    %v491 = vadd.f32 %v366, %v490
    %492 = vmatmul.f32.gmra.mxu0 %v188
    %v493 = vpop.f32.mrf.mxu0
    %v494 = vadd.f32 %v366, %v493
    %495 = vmatmul.f32.gmra.mxu0 %v192
    %v496 = vpop.f32.mrf.mxu0
    %v497 = vadd.f32 %v366, %v496
    %498 = vmatmul.f32.gmra.mxu0 %v196
    %v499 = vpop.f32.mrf.mxu0
    %v500 = vadd.f32 %v366, %v499
    %501 = vmatmul.f32.gmra.mxu0 %v200
    %v502 = vpop.f32.mrf.mxu0
    %v503 = vadd.f32 %v366, %v502
    %504 = vmatmul.f32.gmra.mxu0 %v204
    %v505 = vpop.f32.mrf.mxu0
    %v506 = vadd.f32 %v366, %v505
    %507 = vmatmul.f32.gmra.mxu0 %v208
    %v508 = vpop.f32.mrf.mxu0
    %v509 = vadd.f32 %v366, %v508
    %510 = vmatmul.f32.gmra.mxu0 %v212
    %v511 = vpop.f32.mrf.mxu0
    %v512 = vadd.f32 %v366, %v511
    %513 = vmatmul.f32.gmra.mxu0 %v216
    %v514 = vpop.f32.mrf.mxu0
    %v515 = vadd.f32 %v366, %v514
    %516 = vmatmul.f32.gmra.mxu0 %v220
    %v517 = vpop.f32.mrf.mxu0
    %v518 = vadd.f32 %v366, %v517
    %519 = vmatmul.f32.gmra.mxu0 %v224
    %v520 = vpop.f32.mrf.mxu0
    %v521 = vadd.f32 %v366, %v520
    %522 = vmatmul.f32.gmra.mxu0 %v228
    %v523 = vpop.f32.mrf.mxu0
    %v524 = vadd.f32 %v366, %v523
    %525 = vmatmul.f32.gmra.mxu0 %v232
    %v526 = vpop.f32.mrf.mxu0
    %v527 = vadd.f32 %v366, %v526
    %528 = vmatmul.f32.gmra.mxu0 %v236
    %v529 = vpop.f32.mrf.mxu0
    %v530 = vadd.f32 %v366, %v529
    %531 = vmatmul.f32.gmra.mxu0 %v240
    %v532 = vpop.f32.mrf.mxu0
    %v533 = vadd.f32 %v366, %v532
    %534 = vmatmul.f32.gmra.mxu0 %v244
    %v535 = vpop.f32.mrf.mxu0
    %v536 = vadd.f32 %v366, %v535
    %537 = vmatmul.f32.gmra.mxu0 %v248
    %v538 = vpop.f32.mrf.mxu0
    %v539 = vadd.f32 %v366, %v538
    %540 = vmatmul.f32.gmra.mxu0 %v252
    %v541 = vpop.f32.mrf.mxu0
    %v542 = vadd.f32 %v366, %v541
    %543 = vmatmul.f32.gmra.mxu0 %v256
    %v544 = vpop.f32.mrf.mxu0
    %v545 = vadd.f32 %v366, %v544
    %546 = vmatmul.f32.gmra.mxu0 %v260
    %v547 = vpop.f32.mrf.mxu0
    %v548 = vadd.f32 %v366, %v547
    %549 = vmatmul.f32.gmra.mxu0 %v264
    %v550 = vpop.f32.mrf.mxu0
    %v551 = vadd.f32 %v366, %v550
    %552 = vmatmul.f32.gmra.mxu0 %v268
    %v553 = vpop.f32.mrf.mxu0
    %v554 = vadd.f32 %v366, %v553
    %555 = vmatmul.f32.gmra.mxu0 %v272
    %v556 = vpop.f32.mrf.mxu0
    %v557 = vadd.f32 %v366, %v556
    %558 = vmatmul.f32.gmra.mxu0 %v276
    %v559 = vpop.f32.mrf.mxu0
    %v560 = vadd.f32 %v366, %v559
    %561 = vmatmul.f32.gmra.mxu0 %v280
    %v562 = vpop.f32.mrf.mxu0
    %v563 = vadd.f32 %v366, %v562
    %564 = vmatmul.f32.gmra.mxu0 %v284
    %v565 = vpop.f32.mrf.mxu0
    %v566 = vadd.f32 %v366, %v565
    %567 = vmatmul.f32.gmra.mxu0 %v288
    %v568 = vpop.f32.mrf.mxu0
    %v569 = vadd.f32 %v366, %v568
    %570 = vmatmul.f32.gmra.mxu0 %v292
    %v571 = vpop.f32.mrf.mxu0
    %v572 = vadd.f32 %v366, %v571
    %573 = vmatmul.f32.gmra.mxu0 %v296
    %v574 = vpop.f32.mrf.mxu0
    %v575 = vadd.f32 %v366, %v574
    %576 = vdwg.mxu0
    %577 = vmatpush.msra.mxu0 %v331
    %578 = vmatpush.msra.mxu0 %v330
    %579 = vmatpush.msra.mxu0 %v329
    %580 = vmatpush.msra.mxu0 %v328
    %581 = vmatpush.msra.mxu0 %v327
    %582 = vmatpush.msra.mxu0 %v326
    %583 = vmatpush.msra.mxu0 %v325
    %584 = vmatpush.msra.mxu0 %v324
    %585 = vmatpush.msra.mxu0 %v323
    %586 = vmatpush.msra.mxu0 %v322
    %587 = vmatpush.msra.mxu0 %v321
    %588 = vmatpush.msra.mxu0 %v320
    %589 = vmatpush.msra.mxu0 %v319
    %590 = vmatpush.msra.mxu0 %v318
    %591 = vmatpush.msra.mxu0 %v317
    %592 = vmatpush.msra.mxu0 %v316
    %593 = vmatmul.f32.gmra.mxu0 %v45
    %v594 = vpop.f32.mrf.mxu0
    %v595 = vadd.f32 %v386, %v594
    %596 = vmatmul.f32.gmra.mxu0 %v49
    %v597 = vpop.f32.mrf.mxu0
    %v598 = vadd.f32 %v389, %v597
    %599 = vmatmul.f32.gmra.mxu0 %v53
    %v600 = vpop.f32.mrf.mxu0
    %v601 = vadd.f32 %v392, %v600
    %602 = vmatmul.f32.gmra.mxu0 %v57
    %v603 = vpop.f32.mrf.mxu0
    %v604 = vadd.f32 %v395, %v603
    %605 = vmatmul.f32.gmra.mxu0 %v61
    %v606 = vpop.f32.mrf.mxu0
    %v607 = vadd.f32 %v398, %v606
    %608 = vmatmul.f32.gmra.mxu0 %v65
    %v609 = vpop.f32.mrf.mxu0
    %v610 = vadd.f32 %v401, %v609
    %611 = vmatmul.f32.gmra.mxu0 %v69
    %v612 = vpop.f32.mrf.mxu0
    %v613 = vadd.f32 %v404, %v612
    %614 = vmatmul.f32.gmra.mxu0 %v73
    %v615 = vpop.f32.mrf.mxu0
    %v616 = vadd.f32 %v407, %v615
    %617 = vmatmul.f32.gmra.mxu0 %v77
    %v618 = vpop.f32.mrf.mxu0
    %v619 = vadd.f32 %v410, %v618
    %620 = vmatmul.f32.gmra.mxu0 %v81
    %v621 = vpop.f32.mrf.mxu0
    %v622 = vadd.f32 %v413, %v621
    %623 = vmatmul.f32.gmra.mxu0 %v85
    %v624 = vpop.f32.mrf.mxu0
    %v625 = vadd.f32 %v416, %v624
    %626 = vmatmul.f32.gmra.mxu0 %v89
    %v627 = vpop.f32.mrf.mxu0
    %v628 = vadd.f32 %v419, %v627
    %629 = vmatmul.f32.gmra.mxu0 %v93
    %v630 = vpop.f32.mrf.mxu0
    %v631 = vadd.f32 %v422, %v630
    %632 = vmatmul.f32.gmra.mxu0 %v97
    %v633 = vpop.f32.mrf.mxu0
    %v634 = vadd.f32 %v425, %v633
    %635 = vmatmul.f32.gmra.mxu0 %v101
    %v636 = vpop.f32.mrf.mxu0
    %v637 = vadd.f32 %v428, %v636
    %638 = vmatmul.f32.gmra.mxu0 %v105
    %v639 = vpop.f32.mrf.mxu0
    %v640 = vadd.f32 %v431, %v639
    %641 = vmatmul.f32.gmra.mxu0 %v109
    %v642 = vpop.f32.mrf.mxu0
    %v643 = vadd.f32 %v434, %v642
    %644 = vmatmul.f32.gmra.mxu0 %v113
    %v645 = vpop.f32.mrf.mxu0
    %v646 = vadd.f32 %v437, %v645
    %647 = vmatmul.f32.gmra.mxu0 %v117
    %v648 = vpop.f32.mrf.mxu0
    %v649 = vadd.f32 %v440, %v648
    %650 = vmatmul.f32.gmra.mxu0 %v121
    %v651 = vpop.f32.mrf.mxu0
    %v652 = vadd.f32 %v443, %v651
    %653 = vmatmul.f32.gmra.mxu0 %v125
    %v654 = vpop.f32.mrf.mxu0
    %v655 = vadd.f32 %v446, %v654
    %656 = vmatmul.f32.gmra.mxu0 %v129
    %v657 = vpop.f32.mrf.mxu0
    %v658 = vadd.f32 %v449, %v657
    %659 = vmatmul.f32.gmra.mxu0 %v133
    %v660 = vpop.f32.mrf.mxu0
    %v661 = vadd.f32 %v452, %v660
    %662 = vmatmul.f32.gmra.mxu0 %v137
    %v663 = vpop.f32.mrf.mxu0
    %v664 = vadd.f32 %v455, %v663
    %665 = vmatmul.f32.gmra.mxu0 %v141
    %v666 = vpop.f32.mrf.mxu0
    %v667 = vadd.f32 %v458, %v666
    %668 = vmatmul.f32.gmra.mxu0 %v145
    %v669 = vpop.f32.mrf.mxu0
    %v670 = vadd.f32 %v461, %v669
    %671 = vmatmul.f32.gmra.mxu0 %v149
    %v672 = vpop.f32.mrf.mxu0
    %v673 = vadd.f32 %v464, %v672
    %674 = vmatmul.f32.gmra.mxu0 %v153
    %v675 = vpop.f32.mrf.mxu0
    %v676 = vadd.f32 %v467, %v675
    %677 = vmatmul.f32.gmra.mxu0 %v157
    %v678 = vpop.f32.mrf.mxu0
    %v679 = vadd.f32 %v470, %v678
    %680 = vmatmul.f32.gmra.mxu0 %v161
    %v681 = vpop.f32.mrf.mxu0
    %v682 = vadd.f32 %v473, %v681
    %683 = vmatmul.f32.gmra.mxu0 %v165
    %v684 = vpop.f32.mrf.mxu0
    %v685 = vadd.f32 %v476, %v684
    %686 = vmatmul.f32.gmra.mxu0 %v169
    %v687 = vpop.f32.mrf.mxu0
    %v688 = vadd.f32 %v479, %v687
    %689 = vmatmul.f32.gmra.mxu0 %v173
    %v690 = vpop.f32.mrf.mxu0
    %v691 = vadd.f32 %v482, %v690
    %692 = vmatmul.f32.gmra.mxu0 %v177
    %v693 = vpop.f32.mrf.mxu0
    %v694 = vadd.f32 %v485, %v693
    %695 = vmatmul.f32.gmra.mxu0 %v181
    %v696 = vpop.f32.mrf.mxu0
    %v697 = vadd.f32 %v488, %v696
    %698 = vmatmul.f32.gmra.mxu0 %v185
    %v699 = vpop.f32.mrf.mxu0
    %v700 = vadd.f32 %v491, %v699
    %701 = vmatmul.f32.gmra.mxu0 %v189
    %v702 = vpop.f32.mrf.mxu0
    %v703 = vadd.f32 %v494, %v702
    %704 = vmatmul.f32.gmra.mxu0 %v193
    %v705 = vpop.f32.mrf.mxu0
    %v706 = vadd.f32 %v497, %v705
    %707 = vmatmul.f32.gmra.mxu0 %v197
    %v708 = vpop.f32.mrf.mxu0
    %v709 = vadd.f32 %v500, %v708
    %710 = vmatmul.f32.gmra.mxu0 %v201
    %v711 = vpop.f32.mrf.mxu0
    %v712 = vadd.f32 %v503, %v711
    %713 = vmatmul.f32.gmra.mxu0 %v205
    %v714 = vpop.f32.mrf.mxu0
    %v715 = vadd.f32 %v506, %v714
    %716 = vmatmul.f32.gmra.mxu0 %v209
    %v717 = vpop.f32.mrf.mxu0
    %v718 = vadd.f32 %v509, %v717
    %719 = vmatmul.f32.gmra.mxu0 %v213
    %v720 = vpop.f32.mrf.mxu0
    %v721 = vadd.f32 %v512, %v720
    %722 = vmatmul.f32.gmra.mxu0 %v217
    %v723 = vpop.f32.mrf.mxu0
    %v724 = vadd.f32 %v515, %v723
    %725 = vmatmul.f32.gmra.mxu0 %v221
    %v726 = vpop.f32.mrf.mxu0
    %v727 = vadd.f32 %v518, %v726
    %728 = vmatmul.f32.gmra.mxu0 %v225
    %v729 = vpop.f32.mrf.mxu0
    %v730 = vadd.f32 %v521, %v729
    %731 = vmatmul.f32.gmra.mxu0 %v229
    %v732 = vpop.f32.mrf.mxu0
    %v733 = vadd.f32 %v524, %v732
    %734 = vmatmul.f32.gmra.mxu0 %v233
    %v735 = vpop.f32.mrf.mxu0
    %v736 = vadd.f32 %v527, %v735
    %737 = vmatmul.f32.gmra.mxu0 %v237
    %v738 = vpop.f32.mrf.mxu0
    %v739 = vadd.f32 %v530, %v738
    %740 = vmatmul.f32.gmra.mxu0 %v241
    %v741 = vpop.f32.mrf.mxu0
    %v742 = vadd.f32 %v533, %v741
    %743 = vmatmul.f32.gmra.mxu0 %v245
    %v744 = vpop.f32.mrf.mxu0
    %v745 = vadd.f32 %v536, %v744
    %746 = vmatmul.f32.gmra.mxu0 %v249
    %v747 = vpop.f32.mrf.mxu0
    %v748 = vadd.f32 %v539, %v747
    %749 = vmatmul.f32.gmra.mxu0 %v253
    %v750 = vpop.f32.mrf.mxu0
    %v751 = vadd.f32 %v542, %v750
    %752 = vmatmul.f32.gmra.mxu0 %v257
    %v753 = vpop.f32.mrf.mxu0
    %v754 = vadd.f32 %v545, %v753
    %755 = vmatmul.f32.gmra.mxu0 %v261
    %v756 = vpop.f32.mrf.mxu0
    %v757 = vadd.f32 %v548, %v756
    %758 = vmatmul.f32.gmra.mxu0 %v265
    %v759 = vpop.f32.mrf.mxu0
    %v760 = vadd.f32 %v551, %v759
    %761 = vmatmul.f32.gmra.mxu0 %v269
    %v762 = vpop.f32.mrf.mxu0
    %v763 = vadd.f32 %v554, %v762
    %764 = vmatmul.f32.gmra.mxu0 %v273
    %v765 = vpop.f32.mrf.mxu0
    %v766 = vadd.f32 %v557, %v765
    %767 = vmatmul.f32.gmra.mxu0 %v277
    %v768 = vpop.f32.mrf.mxu0
    %v769 = vadd.f32 %v560, %v768
    %770 = vmatmul.f32.gmra.mxu0 %v281
    %v771 = vpop.f32.mrf.mxu0
    %v772 = vadd.f32 %v563, %v771
    %773 = vmatmul.f32.gmra.mxu0 %v285
    %v774 = vpop.f32.mrf.mxu0
    %v775 = vadd.f32 %v566, %v774
    %776 = vmatmul.f32.gmra.mxu0 %v289
    %v777 = vpop.f32.mrf.mxu0
    %v778 = vadd.f32 %v569, %v777
    %779 = vmatmul.f32.gmra.mxu0 %v293
    %v780 = vpop.f32.mrf.mxu0
    %v781 = vadd.f32 %v572, %v780
    %782 = vmatmul.f32.gmra.mxu0 %v297
    %v783 = vpop.f32.mrf.mxu0
    %v784 = vadd.f32 %v575, %v783
    %785 = vdwg.mxu0
    %786 = vmatpush.msra.mxu0 %v347
    %787 = vmatpush.msra.mxu0 %v346
    %788 = vmatpush.msra.mxu0 %v345
    %789 = vmatpush.msra.mxu0 %v344
    %790 = vmatpush.msra.mxu0 %v343
    %791 = vmatpush.msra.mxu0 %v342
    %792 = vmatpush.msra.mxu0 %v341
    %793 = vmatpush.msra.mxu0 %v340
    %794 = vmatpush.msra.mxu0 %v339
    %795 = vmatpush.msra.mxu0 %v338
    %796 = vmatpush.msra.mxu0 %v337
    %797 = vmatpush.msra.mxu0 %v336
    %798 = vmatpush.msra.mxu0 %v335
    %799 = vmatpush.msra.mxu0 %v334
    %800 = vmatpush.msra.mxu0 %v333
    %801 = vmatpush.msra.mxu0 %v332
    %802 = vmatmul.f32.gmra.mxu0 %v46
    %v803 = vpop.f32.mrf.mxu0
    %v804 = vadd.f32 %v595, %v803
    %805 = vmatmul.f32.gmra.mxu0 %v50
    %v806 = vpop.f32.mrf.mxu0
    %v807 = vadd.f32 %v598, %v806
    %808 = vmatmul.f32.gmra.mxu0 %v54
    %v809 = vpop.f32.mrf.mxu0
    %v810 = vadd.f32 %v601, %v809
    %811 = vmatmul.f32.gmra.mxu0 %v58
    %v812 = vpop.f32.mrf.mxu0
    %v813 = vadd.f32 %v604, %v812
    %814 = vmatmul.f32.gmra.mxu0 %v62
    %v815 = vpop.f32.mrf.mxu0
    %v816 = vadd.f32 %v607, %v815
    %817 = vmatmul.f32.gmra.mxu0 %v66
    %v818 = vpop.f32.mrf.mxu0
    %v819 = vadd.f32 %v610, %v818
    %820 = vmatmul.f32.gmra.mxu0 %v70
    %v821 = vpop.f32.mrf.mxu0
    %v822 = vadd.f32 %v613, %v821
    %823 = vmatmul.f32.gmra.mxu0 %v74
    %v824 = vpop.f32.mrf.mxu0
    %v825 = vadd.f32 %v616, %v824
    %826 = vmatmul.f32.gmra.mxu0 %v78
    %v827 = vpop.f32.mrf.mxu0
    %v828 = vadd.f32 %v619, %v827
    %829 = vmatmul.f32.gmra.mxu0 %v82
    %v830 = vpop.f32.mrf.mxu0
    %v831 = vadd.f32 %v622, %v830
    %832 = vmatmul.f32.gmra.mxu0 %v86
    %v833 = vpop.f32.mrf.mxu0
    %v834 = vadd.f32 %v625, %v833
    %835 = vmatmul.f32.gmra.mxu0 %v90
    %v836 = vpop.f32.mrf.mxu0
    %v837 = vadd.f32 %v628, %v836
    %838 = vmatmul.f32.gmra.mxu0 %v94
    %v839 = vpop.f32.mrf.mxu0
    %v840 = vadd.f32 %v631, %v839
    %841 = vmatmul.f32.gmra.mxu0 %v98
    %v842 = vpop.f32.mrf.mxu0
    %v843 = vadd.f32 %v634, %v842
    %844 = vmatmul.f32.gmra.mxu0 %v102
    %v845 = vpop.f32.mrf.mxu0
    %v846 = vadd.f32 %v637, %v845
    %847 = vmatmul.f32.gmra.mxu0 %v106
    %v848 = vpop.f32.mrf.mxu0
    %v849 = vadd.f32 %v640, %v848
    %850 = vmatmul.f32.gmra.mxu0 %v110
    %v851 = vpop.f32.mrf.mxu0
    %v852 = vadd.f32 %v643, %v851
    %853 = vmatmul.f32.gmra.mxu0 %v114
    %v854 = vpop.f32.mrf.mxu0
    %v855 = vadd.f32 %v646, %v854
    %856 = vmatmul.f32.gmra.mxu0 %v118
    %v857 = vpop.f32.mrf.mxu0
    %v858 = vadd.f32 %v649, %v857
    %859 = vmatmul.f32.gmra.mxu0 %v122
    %v860 = vpop.f32.mrf.mxu0
    %v861 = vadd.f32 %v652, %v860
    %862 = vmatmul.f32.gmra.mxu0 %v126
    %v863 = vpop.f32.mrf.mxu0
    %v864 = vadd.f32 %v655, %v863
    %865 = vmatmul.f32.gmra.mxu0 %v130
    %v866 = vpop.f32.mrf.mxu0
    %v867 = vadd.f32 %v658, %v866
    %868 = vmatmul.f32.gmra.mxu0 %v134
    %v869 = vpop.f32.mrf.mxu0
    %v870 = vadd.f32 %v661, %v869
    %871 = vmatmul.f32.gmra.mxu0 %v138
    %v872 = vpop.f32.mrf.mxu0
    %v873 = vadd.f32 %v664, %v872
    %874 = vmatmul.f32.gmra.mxu0 %v142
    %v875 = vpop.f32.mrf.mxu0
    %v876 = vadd.f32 %v667, %v875
    %877 = vmatmul.f32.gmra.mxu0 %v146
    %v878 = vpop.f32.mrf.mxu0
    %v879 = vadd.f32 %v670, %v878
    %880 = vmatmul.f32.gmra.mxu0 %v150
    %v881 = vpop.f32.mrf.mxu0
    %v882 = vadd.f32 %v673, %v881
    %883 = vmatmul.f32.gmra.mxu0 %v154
    %v884 = vpop.f32.mrf.mxu0
    %v885 = vadd.f32 %v676, %v884
    %886 = vmatmul.f32.gmra.mxu0 %v158
    %v887 = vpop.f32.mrf.mxu0
    %v888 = vadd.f32 %v679, %v887
    %889 = vmatmul.f32.gmra.mxu0 %v162
    %v890 = vpop.f32.mrf.mxu0
    %v891 = vadd.f32 %v682, %v890
    %892 = vmatmul.f32.gmra.mxu0 %v166
    %v893 = vpop.f32.mrf.mxu0
    %v894 = vadd.f32 %v685, %v893
    %895 = vmatmul.f32.gmra.mxu0 %v170
    %v896 = vpop.f32.mrf.mxu0
    %v897 = vadd.f32 %v688, %v896
    %898 = vmatmul.f32.gmra.mxu0 %v174
    %v899 = vpop.f32.mrf.mxu0
    %v900 = vadd.f32 %v691, %v899
    %901 = vmatmul.f32.gmra.mxu0 %v178
    %v902 = vpop.f32.mrf.mxu0
    %v903 = vadd.f32 %v694, %v902
    %904 = vmatmul.f32.gmra.mxu0 %v182
    %v905 = vpop.f32.mrf.mxu0
    %v906 = vadd.f32 %v697, %v905
    %907 = vmatmul.f32.gmra.mxu0 %v186
    %v908 = vpop.f32.mrf.mxu0
    %v909 = vadd.f32 %v700, %v908
    %910 = vmatmul.f32.gmra.mxu0 %v190
    %v911 = vpop.f32.mrf.mxu0
    %v912 = vadd.f32 %v703, %v911
    %913 = vmatmul.f32.gmra.mxu0 %v194
    %v914 = vpop.f32.mrf.mxu0
    %v915 = vadd.f32 %v706, %v914
    %916 = vmatmul.f32.gmra.mxu0 %v198
    %v917 = vpop.f32.mrf.mxu0
    %v918 = vadd.f32 %v709, %v917
    %919 = vmatmul.f32.gmra.mxu0 %v202
    %v920 = vpop.f32.mrf.mxu0
    %v921 = vadd.f32 %v712, %v920
    %922 = vmatmul.f32.gmra.mxu0 %v206
    %v923 = vpop.f32.mrf.mxu0
    %v924 = vadd.f32 %v715, %v923
    %925 = vmatmul.f32.gmra.mxu0 %v210
    %v926 = vpop.f32.mrf.mxu0
    %v927 = vadd.f32 %v718, %v926
    %928 = vmatmul.f32.gmra.mxu0 %v214
    %v929 = vpop.f32.mrf.mxu0
    %v930 = vadd.f32 %v721, %v929
    %931 = vmatmul.f32.gmra.mxu0 %v218
    %v932 = vpop.f32.mrf.mxu0
    %v933 = vadd.f32 %v724, %v932
    %934 = vmatmul.f32.gmra.mxu0 %v222
    %v935 = vpop.f32.mrf.mxu0
    %v936 = vadd.f32 %v727, %v935
    %937 = vmatmul.f32.gmra.mxu0 %v226
    %v938 = vpop.f32.mrf.mxu0
    %v939 = vadd.f32 %v730, %v938
    %940 = vmatmul.f32.gmra.mxu0 %v230
    %v941 = vpop.f32.mrf.mxu0
    %v942 = vadd.f32 %v733, %v941
    %943 = vmatmul.f32.gmra.mxu0 %v234
    %v944 = vpop.f32.mrf.mxu0
    %v945 = vadd.f32 %v736, %v944
    %946 = vmatmul.f32.gmra.mxu0 %v238
    %v947 = vpop.f32.mrf.mxu0
    %v948 = vadd.f32 %v739, %v947
    %949 = vmatmul.f32.gmra.mxu0 %v242
    %v950 = vpop.f32.mrf.mxu0
    %v951 = vadd.f32 %v742, %v950
    %952 = vmatmul.f32.gmra.mxu0 %v246
    %v953 = vpop.f32.mrf.mxu0
    %v954 = vadd.f32 %v745, %v953
    %955 = vmatmul.f32.gmra.mxu0 %v250
    %v956 = vpop.f32.mrf.mxu0
    %v957 = vadd.f32 %v748, %v956
    %958 = vmatmul.f32.gmra.mxu0 %v254
    %v959 = vpop.f32.mrf.mxu0
    %v960 = vadd.f32 %v751, %v959
    %961 = vmatmul.f32.gmra.mxu0 %v258
    %v962 = vpop.f32.mrf.mxu0
    %v963 = vadd.f32 %v754, %v962
    %964 = vmatmul.f32.gmra.mxu0 %v262
    %v965 = vpop.f32.mrf.mxu0
    %v966 = vadd.f32 %v757, %v965
    %967 = vmatmul.f32.gmra.mxu0 %v266
    %v968 = vpop.f32.mrf.mxu0
    %v969 = vadd.f32 %v760, %v968
    %970 = vmatmul.f32.gmra.mxu0 %v270
    %v971 = vpop.f32.mrf.mxu0
    %v972 = vadd.f32 %v763, %v971
    %973 = vmatmul.f32.gmra.mxu0 %v274
    %v974 = vpop.f32.mrf.mxu0
    %v975 = vadd.f32 %v766, %v974
    %976 = vmatmul.f32.gmra.mxu0 %v278
    %v977 = vpop.f32.mrf.mxu0
    %v978 = vadd.f32 %v769, %v977
    %979 = vmatmul.f32.gmra.mxu0 %v282
    %v980 = vpop.f32.mrf.mxu0
    %v981 = vadd.f32 %v772, %v980
    %982 = vmatmul.f32.gmra.mxu0 %v286
    %v983 = vpop.f32.mrf.mxu0
    %v984 = vadd.f32 %v775, %v983
    %985 = vmatmul.f32.gmra.mxu0 %v290
    %v986 = vpop.f32.mrf.mxu0
    %v987 = vadd.f32 %v778, %v986
    %988 = vmatmul.f32.gmra.mxu0 %v294
    %v989 = vpop.f32.mrf.mxu0
    %v990 = vadd.f32 %v781, %v989
    %991 = vmatmul.f32.gmra.mxu0 %v298
    %v992 = vpop.f32.mrf.mxu0
    %v993 = vadd.f32 %v784, %v992
    %994 = vdwg.mxu0
    %995 = vmatpush.msra.mxu0 %v363
    %996 = vmatpush.msra.mxu0 %v362
    %997 = vmatpush.msra.mxu0 %v361
    %998 = vmatpush.msra.mxu0 %v360
    %999 = vmatpush.msra.mxu0 %v359
    %1000 = vmatpush.msra.mxu0 %v358
    %1001 = vmatpush.msra.mxu0 %v357
    %1002 = vmatpush.msra.mxu0 %v356
    %1003 = vmatpush.msra.mxu0 %v355
    %1004 = vmatpush.msra.mxu0 %v354
    %1005 = vmatpush.msra.mxu0 %v353
    %1006 = vmatpush.msra.mxu0 %v352
    %1007 = vmatpush.msra.mxu0 %v351
    %1008 = vmatpush.msra.mxu0 %v350
    %1009 = vmatpush.msra.mxu0 %v349
    %1010 = vmatpush.msra.mxu0 %v348
    %1011 = vmatmul.f32.gmra.mxu0 %v47
    %v1012 = vpop.f32.mrf.mxu0
    %v1013 = vadd.f32 %v804, %v1012
    %1014 = vmatmul.f32.gmra.mxu0 %v51
    %v1015 = vpop.f32.mrf.mxu0
    %v1016 = vadd.f32 %v807, %v1015
    %1017 = vmatmul.f32.gmra.mxu0 %v55
    %v1018 = vpop.f32.mrf.mxu0
    %v1019 = vadd.f32 %v810, %v1018
    %1020 = vmatmul.f32.gmra.mxu0 %v59
    %v1021 = vpop.f32.mrf.mxu0
    %v1022 = vadd.f32 %v813, %v1021
    %1023 = vmatmul.f32.gmra.mxu0 %v63
    %v1024 = vpop.f32.mrf.mxu0
    %v1025 = vadd.f32 %v816, %v1024
    %1026 = vmatmul.f32.gmra.mxu0 %v67
    %v1027 = vpop.f32.mrf.mxu0
    %v1028 = vadd.f32 %v819, %v1027
    %1029 = vmatmul.f32.gmra.mxu0 %v71
    %v1030 = vpop.f32.mrf.mxu0
    %v1031 = vadd.f32 %v822, %v1030
    %1032 = vmatmul.f32.gmra.mxu0 %v75
    %v1033 = vpop.f32.mrf.mxu0
    %v1034 = vadd.f32 %v825, %v1033
    %1035 = vmatmul.f32.gmra.mxu0 %v79
    %v1036 = vpop.f32.mrf.mxu0
    %v1037 = vadd.f32 %v828, %v1036
    %1038 = vmatmul.f32.gmra.mxu0 %v83
    %v1039 = vpop.f32.mrf.mxu0
    %v1040 = vadd.f32 %v831, %v1039
    %1041 = vmatmul.f32.gmra.mxu0 %v87
    %v1042 = vpop.f32.mrf.mxu0
    %v1043 = vadd.f32 %v834, %v1042
    %1044 = vmatmul.f32.gmra.mxu0 %v91
    %v1045 = vpop.f32.mrf.mxu0
    %v1046 = vadd.f32 %v837, %v1045
    %1047 = vmatmul.f32.gmra.mxu0 %v95
    %v1048 = vpop.f32.mrf.mxu0
    %v1049 = vadd.f32 %v840, %v1048
    %1050 = vmatmul.f32.gmra.mxu0 %v99
    %v1051 = vpop.f32.mrf.mxu0
    %v1052 = vadd.f32 %v843, %v1051
    %1053 = vmatmul.f32.gmra.mxu0 %v103
    %v1054 = vpop.f32.mrf.mxu0
    %v1055 = vadd.f32 %v846, %v1054
    %1056 = vmatmul.f32.gmra.mxu0 %v107
    %v1057 = vpop.f32.mrf.mxu0
    %v1058 = vadd.f32 %v849, %v1057
    %1059 = vmatmul.f32.gmra.mxu0 %v111
    %v1060 = vpop.f32.mrf.mxu0
    %v1061 = vadd.f32 %v852, %v1060
    %1062 = vmatmul.f32.gmra.mxu0 %v115
    %v1063 = vpop.f32.mrf.mxu0
    %v1064 = vadd.f32 %v855, %v1063
    %1065 = vmatmul.f32.gmra.mxu0 %v119
    %v1066 = vpop.f32.mrf.mxu0
    %v1067 = vadd.f32 %v858, %v1066
    %1068 = vmatmul.f32.gmra.mxu0 %v123
    %v1069 = vpop.f32.mrf.mxu0
    %v1070 = vadd.f32 %v861, %v1069
    %1071 = vmatmul.f32.gmra.mxu0 %v127
    %v1072 = vpop.f32.mrf.mxu0
    %v1073 = vadd.f32 %v864, %v1072
    %1074 = vmatmul.f32.gmra.mxu0 %v131
    %v1075 = vpop.f32.mrf.mxu0
    %v1076 = vadd.f32 %v867, %v1075
    %1077 = vmatmul.f32.gmra.mxu0 %v135
    %v1078 = vpop.f32.mrf.mxu0
    %v1079 = vadd.f32 %v870, %v1078
    %1080 = vmatmul.f32.gmra.mxu0 %v139
    %v1081 = vpop.f32.mrf.mxu0
    %v1082 = vadd.f32 %v873, %v1081
    %1083 = vmatmul.f32.gmra.mxu0 %v143
    %v1084 = vpop.f32.mrf.mxu0
    %v1085 = vadd.f32 %v876, %v1084
    %1086 = vmatmul.f32.gmra.mxu0 %v147
    %v1087 = vpop.f32.mrf.mxu0
    %v1088 = vadd.f32 %v879, %v1087
    %1089 = vmatmul.f32.gmra.mxu0 %v151
    %v1090 = vpop.f32.mrf.mxu0
    %v1091 = vadd.f32 %v882, %v1090
    %1092 = vmatmul.f32.gmra.mxu0 %v155
    %v1093 = vpop.f32.mrf.mxu0
    %v1094 = vadd.f32 %v885, %v1093
    %1095 = vmatmul.f32.gmra.mxu0 %v159
    %v1096 = vpop.f32.mrf.mxu0
    %v1097 = vadd.f32 %v888, %v1096
    %1098 = vmatmul.f32.gmra.mxu0 %v163
    %v1099 = vpop.f32.mrf.mxu0
    %v1100 = vadd.f32 %v891, %v1099
    %1101 = vmatmul.f32.gmra.mxu0 %v167
    %v1102 = vpop.f32.mrf.mxu0
    %v1103 = vadd.f32 %v894, %v1102
    %1104 = vmatmul.f32.gmra.mxu0 %v171
    %v1105 = vpop.f32.mrf.mxu0
    %v1106 = vadd.f32 %v897, %v1105
    %1107 = vmatmul.f32.gmra.mxu0 %v175
    %v1108 = vpop.f32.mrf.mxu0
    %v1109 = vadd.f32 %v900, %v1108
    %1110 = vmatmul.f32.gmra.mxu0 %v179
    %v1111 = vpop.f32.mrf.mxu0
    %v1112 = vadd.f32 %v903, %v1111
    %1113 = vmatmul.f32.gmra.mxu0 %v183
    %v1114 = vpop.f32.mrf.mxu0
    %v1115 = vadd.f32 %v906, %v1114
    %1116 = vmatmul.f32.gmra.mxu0 %v187
    %v1117 = vpop.f32.mrf.mxu0
    %v1118 = vadd.f32 %v909, %v1117
    %1119 = vmatmul.f32.gmra.mxu0 %v191
    %v1120 = vpop.f32.mrf.mxu0
    %v1121 = vadd.f32 %v912, %v1120
    %1122 = vmatmul.f32.gmra.mxu0 %v195
    %v1123 = vpop.f32.mrf.mxu0
    %v1124 = vadd.f32 %v915, %v1123
    %1125 = vmatmul.f32.gmra.mxu0 %v199
    %v1126 = vpop.f32.mrf.mxu0
    %v1127 = vadd.f32 %v918, %v1126
    %1128 = vmatmul.f32.gmra.mxu0 %v203
    %v1129 = vpop.f32.mrf.mxu0
    %v1130 = vadd.f32 %v921, %v1129
    %1131 = vmatmul.f32.gmra.mxu0 %v207
    %v1132 = vpop.f32.mrf.mxu0
    %v1133 = vadd.f32 %v924, %v1132
    %1134 = vmatmul.f32.gmra.mxu0 %v211
    %v1135 = vpop.f32.mrf.mxu0
    %v1136 = vadd.f32 %v927, %v1135
    %1137 = vmatmul.f32.gmra.mxu0 %v215
    %v1138 = vpop.f32.mrf.mxu0
    %v1139 = vadd.f32 %v930, %v1138
    %1140 = vmatmul.f32.gmra.mxu0 %v219
    %v1141 = vpop.f32.mrf.mxu0
    %v1142 = vadd.f32 %v933, %v1141
    %1143 = vmatmul.f32.gmra.mxu0 %v223
    %v1144 = vpop.f32.mrf.mxu0
    %v1145 = vadd.f32 %v936, %v1144
    %1146 = vmatmul.f32.gmra.mxu0 %v227
    %v1147 = vpop.f32.mrf.mxu0
    %v1148 = vadd.f32 %v939, %v1147
    %1149 = vmatmul.f32.gmra.mxu0 %v231
    %v1150 = vpop.f32.mrf.mxu0
    %v1151 = vadd.f32 %v942, %v1150
    %1152 = vmatmul.f32.gmra.mxu0 %v235
    %v1153 = vpop.f32.mrf.mxu0
    %v1154 = vadd.f32 %v945, %v1153
    %1155 = vmatmul.f32.gmra.mxu0 %v239
    %v1156 = vpop.f32.mrf.mxu0
    %v1157 = vadd.f32 %v948, %v1156
    %1158 = vmatmul.f32.gmra.mxu0 %v243
    %v1159 = vpop.f32.mrf.mxu0
    %v1160 = vadd.f32 %v951, %v1159
    %1161 = vmatmul.f32.gmra.mxu0 %v247
    %v1162 = vpop.f32.mrf.mxu0
    %v1163 = vadd.f32 %v954, %v1162
    %1164 = vmatmul.f32.gmra.mxu0 %v251
    %v1165 = vpop.f32.mrf.mxu0
    %v1166 = vadd.f32 %v957, %v1165
    %1167 = vmatmul.f32.gmra.mxu0 %v255
    %v1168 = vpop.f32.mrf.mxu0
    %v1169 = vadd.f32 %v960, %v1168
    %1170 = vmatmul.f32.gmra.mxu0 %v259
    %v1171 = vpop.f32.mrf.mxu0
    %v1172 = vadd.f32 %v963, %v1171
    %1173 = vmatmul.f32.gmra.mxu0 %v263
    %v1174 = vpop.f32.mrf.mxu0
    %v1175 = vadd.f32 %v966, %v1174
    %1176 = vmatmul.f32.gmra.mxu0 %v267
    %v1177 = vpop.f32.mrf.mxu0
    %v1178 = vadd.f32 %v969, %v1177
    %1179 = vmatmul.f32.gmra.mxu0 %v271
    %v1180 = vpop.f32.mrf.mxu0
    %v1181 = vadd.f32 %v972, %v1180
    %1182 = vmatmul.f32.gmra.mxu0 %v275
    %v1183 = vpop.f32.mrf.mxu0
    %v1184 = vadd.f32 %v975, %v1183
    %1185 = vmatmul.f32.gmra.mxu0 %v279
    %v1186 = vpop.f32.mrf.mxu0
    %v1187 = vadd.f32 %v978, %v1186
    %1188 = vmatmul.f32.gmra.mxu0 %v283
    %v1189 = vpop.f32.mrf.mxu0
    %v1190 = vadd.f32 %v981, %v1189
    %1191 = vmatmul.f32.gmra.mxu0 %v287
    %v1192 = vpop.f32.mrf.mxu0
    %v1193 = vadd.f32 %v984, %v1192
    %1194 = vmatmul.f32.gmra.mxu0 %v291
    %v1195 = vpop.f32.mrf.mxu0
    %v1196 = vadd.f32 %v987, %v1195
    %1197 = vmatmul.f32.gmra.mxu0 %v295
    %v1198 = vpop.f32.mrf.mxu0
    %v1199 = vadd.f32 %v990, %v1198
    %1200 = vmatmul.f32.gmra.mxu0 %v299
    %v1201 = vpop.f32.mrf.mxu0
    %v1202 = vadd.f32 %v993, %v1201
    %1203 = vdwg.mxu0
    %v1204 = vmax.f32 %v1013, 0.0
    %v1205 = vmax.f32 %v1016, 0.0
    %v1206 = vmax.f32 %v1019, 0.0
    %v1207 = vmax.f32 %v1022, 0.0
    %v1208 = vmax.f32 %v1025, 0.0
    %v1209 = vmax.f32 %v1028, 0.0
    %v1210 = vmax.f32 %v1031, 0.0
    %v1211 = vmax.f32 %v1034, 0.0
    %v1212 = vmax.f32 %v1037, 0.0
    %v1213 = vmax.f32 %v1040, 0.0
    %v1214 = vmax.f32 %v1043, 0.0
    %v1215 = vmax.f32 %v1046, 0.0
    %v1216 = vmax.f32 %v1049, 0.0
    %v1217 = vmax.f32 %v1052, 0.0
    %v1218 = vmax.f32 %v1055, 0.0
    %v1219 = vmax.f32 %v1058, 0.0
    %v1220 = vmax.f32 %v1061, 0.0
    %v1221 = vmax.f32 %v1064, 0.0
    %v1222 = vmax.f32 %v1067, 0.0
    %v1223 = vmax.f32 %v1070, 0.0
    %v1224 = vmax.f32 %v1073, 0.0
    %v1225 = vmax.f32 %v1076, 0.0
    %v1226 = vmax.f32 %v1079, 0.0
    %v1227 = vmax.f32 %v1082, 0.0
    %v1228 = vmax.f32 %v1085, 0.0
    %v1229 = vmax.f32 %v1088, 0.0
    %v1230 = vmax.f32 %v1091, 0.0
    %v1231 = vmax.f32 %v1094, 0.0
    %v1232 = vmax.f32 %v1097, 0.0
    %v1233 = vmax.f32 %v1100, 0.0
    %v1234 = vmax.f32 %v1103, 0.0
    %v1235 = vmax.f32 %v1106, 0.0
    %v1236 = vmax.f32 %v1109, 0.0
    %v1237 = vmax.f32 %v1112, 0.0
    %v1238 = vmax.f32 %v1115, 0.0
    %v1239 = vmax.f32 %v1118, 0.0
    %v1240 = vmax.f32 %v1121, 0.0
    %v1241 = vmax.f32 %v1124, 0.0
    %v1242 = vmax.f32 %v1127, 0.0
    %v1243 = vmax.f32 %v1130, 0.0
    %v1244 = vmax.f32 %v1133, 0.0
    %v1245 = vmax.f32 %v1136, 0.0
    %v1246 = vmax.f32 %v1139, 0.0
    %v1247 = vmax.f32 %v1142, 0.0
    %v1248 = vmax.f32 %v1145, 0.0
    %v1249 = vmax.f32 %v1148, 0.0
    %v1250 = vmax.f32 %v1151, 0.0
    %v1251 = vmax.f32 %v1154, 0.0
    %v1252 = vmax.f32 %v1157, 0.0
    %v1253 = vmax.f32 %v1160, 0.0
    %v1254 = vmax.f32 %v1163, 0.0
    %v1255 = vmax.f32 %v1166, 0.0
    %v1256 = vmax.f32 %v1169, 0.0
    %v1257 = vmax.f32 %v1172, 0.0
    %v1258 = vmax.f32 %v1175, 0.0
    %v1259 = vmax.f32 %v1178, 0.0
    %v1260 = vmax.f32 %v1181, 0.0
    %v1261 = vmax.f32 %v1184, 0.0
    %v1262 = vmax.f32 %v1187, 0.0
    %v1263 = vmax.f32 %v1190, 0.0
    %v1264 = vmax.f32 %v1193, 0.0
    %v1265 = vmax.f32 %v1196, 0.0
    %v1266 = vmax.f32 %v1199, 0.0
    %v1267 = vmax.f32 %v1202, 0.0
    %1268 = vst [vmem:[%s3] sm:$0xff] %v1204
    %1269 = vst [vmem:[%s3 + $0x8] sm:$0xff] %v1205
    %1270 = vst [vmem:[%s3 + $0x10] sm:$0xff] %v1206
    %1271 = vst [vmem:[%s3 + $0x18] sm:$0xff] %v1207
    %1272 = vst [vmem:[%s3 + $0x20] sm:$0xff] %v1208
    %1273 = vst [vmem:[%s3 + $0x28] sm:$0xff] %v1209
    %1274 = vst [vmem:[%s3 + $0x30] sm:$0xff] %v1210
    %1275 = vst [vmem:[%s3 + $0x38] sm:$0xff] %v1211
    %1276 = vst [vmem:[%s3 + $0x40] sm:$0xff] %v1212
    %1277 = vst [vmem:[%s3 + $0x48] sm:$0xff] %v1213
    %1278 = vst [vmem:[%s3 + $0x50] sm:$0xff] %v1214
    %1279 = vst [vmem:[%s3 + $0x58] sm:$0xff] %v1215
    %1280 = vst [vmem:[%s3 + $0x60] sm:$0xff] %v1216
    %1281 = vst [vmem:[%s3 + $0x68] sm:$0xff] %v1217
    %1282 = vst [vmem:[%s3 + $0x70] sm:$0xff] %v1218
    %1283 = vst [vmem:[%s3 + $0x78] sm:$0xff] %v1219
    %1284 = vst [vmem:[%s3 + $0x80] sm:$0xff] %v1220
    %1285 = vst [vmem:[%s3 + $0x88] sm:$0xff] %v1221
    %1286 = vst [vmem:[%s3 + $0x90] sm:$0xff] %v1222
    %1287 = vst [vmem:[%s3 + $0x98] sm:$0xff] %v1223
    %1288 = vst [vmem:[%s3 + $0xa0] sm:$0xff] %v1224
    %1289 = vst [vmem:[%s3 + $0xa8] sm:$0xff] %v1225
    %1290 = vst [vmem:[%s3 + $0xb0] sm:$0xff] %v1226
    %1291 = vst [vmem:[%s3 + $0xb8] sm:$0xff] %v1227
    %1292 = vst [vmem:[%s3 + $0xc0] sm:$0xff] %v1228
    %1293 = vst [vmem:[%s3 + $0xc8] sm:$0xff] %v1229
    %1294 = vst [vmem:[%s3 + $0xd0] sm:$0xff] %v1230
    %1295 = vst [vmem:[%s3 + $0xd8] sm:$0xff] %v1231
    %1296 = vst [vmem:[%s3 + $0xe0] sm:$0xff] %v1232
    %1297 = vst [vmem:[%s3 + $0xe8] sm:$0xff] %v1233
    %1298 = vst [vmem:[%s3 + $0xf0] sm:$0xff] %v1234
    %1299 = vst [vmem:[%s3 + $0xf8] sm:$0xff] %v1235
    %1300 = vst [vmem:[%s3 + $0x100] sm:$0xff] %v1236
    %1301 = vst [vmem:[%s3 + $0x108] sm:$0xff] %v1237
    %1302 = vst [vmem:[%s3 + $0x110] sm:$0xff] %v1238
    %1303 = vst [vmem:[%s3 + $0x118] sm:$0xff] %v1239
    %1304 = vst [vmem:[%s3 + $0x120] sm:$0xff] %v1240
    %1305 = vst [vmem:[%s3 + $0x128] sm:$0xff] %v1241
    %1306 = vst [vmem:[%s3 + $0x130] sm:$0xff] %v1242
    %1307 = vst [vmem:[%s3 + $0x138] sm:$0xff] %v1243
    %1308 = vst [vmem:[%s3 + $0x140] sm:$0xff] %v1244
    %1309 = vst [vmem:[%s3 + $0x148] sm:$0xff] %v1245
    %1310 = vst [vmem:[%s3 + $0x150] sm:$0xff] %v1246
    %1311 = vst [vmem:[%s3 + $0x158] sm:$0xff] %v1247
    %1312 = vst [vmem:[%s3 + $0x160] sm:$0xff] %v1248
    %1313 = vst [vmem:[%s3 + $0x168] sm:$0xff] %v1249
    %1314 = vst [vmem:[%s3 + $0x170] sm:$0xff] %v1250
    %1315 = vst [vmem:[%s3 + $0x178] sm:$0xff] %v1251
    %1316 = vst [vmem:[%s3 + $0x180] sm:$0xff] %v1252
    %1317 = vst [vmem:[%s3 + $0x188] sm:$0xff] %v1253
    %1318 = vst [vmem:[%s3 + $0x190] sm:$0xff] %v1254
    %1319 = vst [vmem:[%s3 + $0x198] sm:$0xff] %v1255
    %1320 = vst [vmem:[%s3 + $0x1a0] sm:$0xff] %v1256
    %1321 = vst [vmem:[%s3 + $0x1a8] sm:$0xff] %v1257
    %1322 = vst [vmem:[%s3 + $0x1b0] sm:$0xff] %v1258
    %1323 = vst [vmem:[%s3 + $0x1b8] sm:$0xff] %v1259
    %1324 = vst [vmem:[%s3 + $0x1c0] sm:$0xff] %v1260
    %1325 = vst [vmem:[%s3 + $0x1c8] sm:$0xff] %v1261
    %1326 = vst [vmem:[%s3 + $0x1d0] sm:$0xff] %v1262
    %1327 = vst [vmem:[%s3 + $0x1d8] sm:$0xff] %v1263
    %1328 = vst [vmem:[%s3 + $0x1e0] sm:$0xff] %v1264
    %1329 = vst [vmem:[%s3 + $0x1e8] sm:$0xff] %v1265
    %1330 = vst [vmem:[%s3 + $0x1f0] sm:$0xff] %v1266
    %1331 = vst [vmem:[%s3 + $0x1f8] sm:$0xff] %v1267
    // Predicated region
    $region22: #{bottleneck_forward.2} parent=1 // pred_check
      _
    $region23: #{bottleneck_forward.2} parent=1 // pred_check_branch
      %1333 = sbr.rel (0) target = $region25
    $region24: #{bottleneck_forward.2} parent=1 // pred_region
      _
    $region25: #{bottleneck_forward.2} parent=1 // pred_fallthru
      _
    // Predicated region
    $region26: #{bottleneck_forward.2} parent=1 // pred_check
      _
    $region27: #{bottleneck_forward.2} parent=1 // pred_check_branch
      %1335 = sbr.rel (0) target = $region29
    $region28: #{bottleneck_forward.2} parent=1 // pred_region
      _
    $region29: #{bottleneck_forward.2} parent=1 // pred_fallthru
      _
    %1336 = vsyncpa [#allocation3], 1
    %1337 = vsyncpa [#allocation5], 1

// kernel: bottleneck_forward.3
$region0: #{bottleneck_forward.3}
  #allocation0 [shape = 'u32[]', space=smem, size = 0x4, offset = 0x4, fixed_abs, tag = 'smem constant byte address 0x4 - core index']
  #allocation1 [shape = 'u32[72,128]{1,0:T(1,128)}', space=vmem, size = 0x9000, scoped, tag = 'internal scratch']
  #allocation2 [shape = 'f32[10,10,128]{2,1,0:T(8,128)}', space=vmem, size = 0x14000, scoped, tag = 'scratch operand']
  %s0 = inlined_call_operand.vmem [shape: f32[2,4,8,8,128], index: 0, kind: input, shape index: {}, may-alias: {0,1,2}]
  %s1 = inlined_call_operand.vmem [shape: f32[2,4,8,8,128], index: 1, kind: input, shape index: {}, may-alias: {0,1,2}]
  %s2 = inlined_call_operand.vmem [shape: f32[2,4,8,8,128], index: 2, kind: input, shape index: {}, may-alias: {0,1,2}]
  %s3 = inlined_call_operand.vmem [shape: f32[3,1152,128], index: 3, kind: input, shape index: {}]
  %s4 = inlined_call_operand.vmem [shape: f32[1,128], index: 4, kind: input, shape index: {}]
  %s5 = inlined_call_operand.vmem [shape: f32[128,512], index: 5, kind: input, shape index: {}]
  %s6 = inlined_call_operand.vmem [shape: f32[1,512], index: 6, kind: input, shape index: {}]
  %s7 = inlined_call_operand.vmem [shape: f32[2,4,8,8,512], index: 7, kind: input, shape index: {}]
  %s8 = inlined_call_operand.hbm [shape: f32[2,4,8,8,512], index: 8, kind: output, shape index: {}]
  %s9 = sld [smem:[#allocation0]]
  $region65: #{bottleneck_forward.3} parent=0
    _
  %s11 = ssub.s32 1, %s9
  %s12 = scalar_select 0, %s11, %s9
  $region1: #{bottleneck_forward.3} parent=0
    #allocation3 [shape = 'u8[262144]{0}', space=vmem, size = 0x40000, scoped, tag = 'output window, operand 0']
    #allocation4 [shape = 's32[2]{0}', space=sflag, size = 0x8, scoped, tag = 'scoped memory for bottleneck_forward.3']
    %13 = vsyncpa [#allocation4], 0
    %s14 = scalar_lea.sflag [#allocation4], 1
    %15 = vsyncpa %s14, 0
    loop: start=0, step=1, limit=10
    $region2: #{bottleneck_forward.3} parent=1 // loop_pre_header
      _
    $region3: #{bottleneck_forward.3} parent=1 // loop_header
      %s17 = sphi 0, %s21
      %p18 = scmp.ge.s32.totalorder %s17, 10
      %s24 = sphi 0, %s36
      %s25 = sphi 0, %s32
      %s26 = sphi 0, %s24
      %s27 = sphi 0, %s25
      %s28 = sphi 0, %s26
      %s29 = sphi 0, %s27
      %s47 = sphi 0, %s49
      %s50 = sphi 0, %s47
      %s51 = sphi 0, %s50
      %s67 = sphi 0, %s51
      %s75 = sphi 0, %s77
      %s78 = sphi 0, %s75
      %s79 = sphi 0, %s78
      %s95 = sphi 0, %s79
      %s109 = sphi 0, %s111
      %s112 = sphi 0, %s109
      %s113 = sphi 0, %s112
      %s129 = sphi 0, %s113
      %s133 = sphi 0, %s133
      %s135 = sphi 0, %s133
      %s136 = sphi 0, %s135
      %s150 = sphi 0, %s136
      %s154 = sphi 0, %s154
      %s156 = sphi 0, %s154
      %s157 = sphi 0, %s156
      %s171 = sphi 0, %s157
      %s175 = sphi 0, %s175
      %s177 = sphi 0, %s175
      %s178 = sphi 0, %s177
      %s192 = sphi 0, %s178
      %s196 = sphi 0, %s196
      %s198 = sphi 0, %s196
      %s199 = sphi 0, %s198
      %s213 = sphi 0, %s199
      %s221 = sphi 0, %s223
      %s224 = sphi 0, %s221
      %s225 = sphi 0, %s224
      %s241 = sphi 0, %s225
      %s249 = sphi 0, %s251
      %s252 = sphi 0, %s249
      %s253 = sphi 0, %s252
      %s269 = sphi 0, %s253
    $region4: #{bottleneck_forward.3} parent=1 // loop_header_branch
      %20 = sbr.rel (%p18) target = $region8
    $region5: #{bottleneck_forward.3} parent=1 // loop_body
      %s22 = ssub.s32 %s17, 1
      %s23 = ssub.s32 %s17, 2
      %s30 = sadd.s32 1, %s25
      %p31 = scmp.ge.s32.totalorder %s30, 4
      %s32 = scalar_select %p31, 0, %s30
      %s33 = sadd.s32 1, %s24
      %s34 = scalar_select %p31, %s33, %s24
      %p35 = scmp.ge.s32.totalorder %s34, 2
      %s36 = scalar_select %p35, 0, %s34
      %s37 = ssub.s32 %s25, 1
      %p38 = scmp.gt.s32.totalorder %s37, 0
      %s39 = scalar_select %p38, %s37, 0
      %s40 = ssub.s32 %s32, 1
      %p41 = scmp.gt.s32.totalorder %s40, 0
      %s42 = scalar_select %p41, %s40, 0
      %s43 = ssub.s32 %s24, %s36
      %s44 = ssub.s32 %s39, %s42
      %s45 = sor.u32 %s43, %s44
      %p46 = scmp.eq.s32.totalorder %s45, 0
      %s48 = sadd.s32 %s47, 1
      %s49 = scalar_select %p46, %s47, %s48
      %p52 = pneg %p46
      %p53 = scmp.eq.s32.totalorder %s17, 7
      %p54 = por %p52, %p53
      %p55 = scmp.ne.s32.totalorder %s47, %s50
      %p56 = scmp.eq.s32.totalorder %s17, 0
      %p57 = por %p55, %p56
      %p58 = scmp.ne.s32.totalorder %s47, %s50
      %p59 = scmp.eq.s32.totalorder %s22, 7
      %p60 = por %p58, %p59
      %p61 = scmp.ne.s32.totalorder %s50, %s51
      %p62 = scmp.eq.s32.totalorder %s22, 0
      %p63 = por %p61, %p62
      %p64 = scmp.ne.s32.totalorder %s50, %s51
      %p65 = scmp.eq.s32.totalorder %s23, 7
      %p66 = por %p64, %p65
      %p68 = scmp.ne.s32.totalorder %s51, %s67
      %p69 = scmp.eq.s32.totalorder %s23, 0
      %p70 = por %p68, %p69
      %s71 = ssub.s32 %s24, %s36
      %s72 = ssub.s32 %s25, %s32
      %s73 = sor.u32 %s71, %s72
      %p74 = scmp.eq.s32.totalorder %s73, 0
      %s76 = sadd.s32 %s75, 1
      %s77 = scalar_select %p74, %s75, %s76
      %p80 = pneg %p74
      %p81 = scmp.eq.s32.totalorder %s17, 7
      %p82 = por %p80, %p81
      %p83 = scmp.ne.s32.totalorder %s75, %s78
      %p84 = scmp.eq.s32.totalorder %s17, 0
      %p85 = por %p83, %p84
      %p86 = scmp.ne.s32.totalorder %s75, %s78
      %p87 = scmp.eq.s32.totalorder %s22, 7
      %p88 = por %p86, %p87
      %p89 = scmp.ne.s32.totalorder %s78, %s79
      %p90 = scmp.eq.s32.totalorder %s22, 0
      %p91 = por %p89, %p90
      %p92 = scmp.ne.s32.totalorder %s78, %s79
      %p93 = scmp.eq.s32.totalorder %s23, 7
      %p94 = por %p92, %p93
      %p96 = scmp.ne.s32.totalorder %s79, %s95
      %p97 = scmp.eq.s32.totalorder %s23, 0
      %p98 = por %p96, %p97
      %s99 = sadd.s32 %s25, 1
      %p100 = scmp.lt.s32.totalorder %s99, 3
      %s101 = scalar_select %p100, %s99, 3
      %s102 = sadd.s32 %s32, 1
      %p103 = scmp.lt.s32.totalorder %s102, 3
      %s104 = scalar_select %p103, %s102, 3
      %s105 = ssub.s32 %s24, %s36
      %s106 = ssub.s32 %s101, %s104
      %s107 = sor.u32 %s105, %s106
      %p108 = scmp.eq.s32.totalorder %s107, 0
      %s110 = sadd.s32 %s109, 1
      %s111 = scalar_select %p108, %s109, %s110
      %p114 = pneg %p108
      %p115 = scmp.eq.s32.totalorder %s17, 7
      %p116 = por %p114, %p115
      %p117 = scmp.ne.s32.totalorder %s109, %s112
      %p118 = scmp.eq.s32.totalorder %s17, 0
      %p119 = por %p117, %p118
      %p120 = scmp.ne.s32.totalorder %s109, %s112
      %p121 = scmp.eq.s32.totalorder %s22, 7
      %p122 = por %p120, %p121
      %p123 = scmp.ne.s32.totalorder %s112, %s113
      %p124 = scmp.eq.s32.totalorder %s22, 0
      %p125 = por %p123, %p124
      %p126 = scmp.ne.s32.totalorder %s112, %s113
      %p127 = scmp.eq.s32.totalorder %s23, 7
      %p128 = por %p126, %p127
      %p130 = scmp.ne.s32.totalorder %s113, %s129
      %p131 = scmp.eq.s32.totalorder %s23, 0
      %p132 = por %p130, %p131
      %s134 = sadd.s32 %s133, 1
      %p137 = scmp.eq.s32.totalorder %s17, 7
      %p138 = scmp.ne.s32.totalorder %s133, %s135
      %p139 = scmp.eq.s32.totalorder %s17, 0
      %p140 = por %p138, %p139
      %p141 = scmp.ne.s32.totalorder %s133, %s135
      %p142 = scmp.eq.s32.totalorder %s22, 7
      %p143 = por %p141, %p142
      %p144 = scmp.ne.s32.totalorder %s135, %s136
      %p145 = scmp.eq.s32.totalorder %s22, 0
      %p146 = por %p144, %p145
      %p147 = scmp.ne.s32.totalorder %s135, %s136
      %p148 = scmp.eq.s32.totalorder %s23, 7
      %p149 = por %p147, %p148
      %p151 = scmp.ne.s32.totalorder %s136, %s150
      %p152 = scmp.eq.s32.totalorder %s23, 0
      %p153 = por %p151, %p152
      %s155 = sadd.s32 %s154, 1
      %p158 = scmp.eq.s32.totalorder %s17, 7
      %p159 = scmp.ne.s32.totalorder %s154, %s156
      %p160 = scmp.eq.s32.totalorder %s17, 0
      %p161 = por %p159, %p160
      %p162 = scmp.ne.s32.totalorder %s154, %s156
      %p163 = scmp.eq.s32.totalorder %s22, 7
      %p164 = por %p162, %p163
      %p165 = scmp.ne.s32.totalorder %s156, %s157
      %p166 = scmp.eq.s32.totalorder %s22, 0
      %p167 = por %p165, %p166
      %p168 = scmp.ne.s32.totalorder %s156, %s157
      %p169 = scmp.eq.s32.totalorder %s23, 7
      %p170 = por %p168, %p169
      %p172 = scmp.ne.s32.totalorder %s157, %s171
      %p173 = scmp.eq.s32.totalorder %s23, 0
      %p174 = por %p172, %p173
      %s176 = sadd.s32 %s175, 1
      %p179 = scmp.eq.s32.totalorder %s17, 7
      %p180 = scmp.ne.s32.totalorder %s175, %s177
      %p181 = scmp.eq.s32.totalorder %s17, 0
      %p182 = por %p180, %p181
      %p183 = scmp.ne.s32.totalorder %s175, %s177
      %p184 = scmp.eq.s32.totalorder %s22, 7
      %p185 = por %p183, %p184
      %p186 = scmp.ne.s32.totalorder %s177, %s178
      %p187 = scmp.eq.s32.totalorder %s22, 0
      %p188 = por %p186, %p187
      %p189 = scmp.ne.s32.totalorder %s177, %s178
      %p190 = scmp.eq.s32.totalorder %s23, 7
      %p191 = por %p189, %p190
      %p193 = scmp.ne.s32.totalorder %s178, %s192
      %p194 = scmp.eq.s32.totalorder %s23, 0
      %p195 = por %p193, %p194
      %s197 = sadd.s32 %s196, 1
      %p200 = scmp.eq.s32.totalorder %s17, 7
      %p201 = scmp.ne.s32.totalorder %s196, %s198
      %p202 = scmp.eq.s32.totalorder %s17, 0
      %p203 = por %p201, %p202
      %p204 = scmp.ne.s32.totalorder %s196, %s198
      %p205 = scmp.eq.s32.totalorder %s22, 7
      %p206 = por %p204, %p205
      %p207 = scmp.ne.s32.totalorder %s198, %s199
      %p208 = scmp.eq.s32.totalorder %s22, 0
      %p209 = por %p207, %p208
      %p210 = scmp.ne.s32.totalorder %s198, %s199
      %p211 = scmp.eq.s32.totalorder %s23, 7
      %p212 = por %p210, %p211
      %p214 = scmp.ne.s32.totalorder %s199, %s213
      %p215 = scmp.eq.s32.totalorder %s23, 0
      %p216 = por %p214, %p215
      %s217 = ssub.s32 %s24, %s36
      %s218 = ssub.s32 %s25, %s32
      %s219 = sor.u32 %s217, %s218
      %p220 = scmp.eq.s32.totalorder %s219, 0
      %s222 = sadd.s32 %s221, 1
      %s223 = scalar_select %p220, %s221, %s222
      %p226 = pneg %p220
      %p227 = scmp.eq.s32.totalorder %s17, 7
      %p228 = por %p226, %p227
      %p229 = scmp.ne.s32.totalorder %s221, %s224
      %p230 = scmp.eq.s32.totalorder %s17, 0
      %p231 = por %p229, %p230
      %p232 = scmp.ne.s32.totalorder %s221, %s224
      %p233 = scmp.eq.s32.totalorder %s22, 7
      %p234 = por %p232, %p233
      %p235 = scmp.ne.s32.totalorder %s224, %s225
      %p236 = scmp.eq.s32.totalorder %s22, 0
      %p237 = por %p235, %p236
      %p238 = scmp.ne.s32.totalorder %s224, %s225
      %p239 = scmp.eq.s32.totalorder %s23, 7
      %p240 = por %p238, %p239
      %p242 = scmp.ne.s32.totalorder %s225, %s241
      %p243 = scmp.eq.s32.totalorder %s23, 0
      %p244 = por %p242, %p243
      %s245 = ssub.s32 %s24, %s36
      %s246 = ssub.s32 %s25, %s32
      %s247 = sor.u32 %s245, %s246
      %p248 = scmp.eq.s32.totalorder %s247, 0
      %s250 = sadd.s32 %s249, 1
      %s251 = scalar_select %p248, %s249, %s250
      %p254 = pneg %p248
      %p255 = scmp.eq.s32.totalorder %s17, 7
      %p256 = por %p254, %p255
      %p257 = scmp.ne.s32.totalorder %s249, %s252
      %p258 = scmp.eq.s32.totalorder %s17, 0
      %p259 = por %p257, %p258
      %p260 = scmp.ne.s32.totalorder %s249, %s252
      %p261 = scmp.eq.s32.totalorder %s22, 7
      %p262 = por %p260, %p261
      %p263 = scmp.ne.s32.totalorder %s252, %s253
      %p264 = scmp.eq.s32.totalorder %s22, 0
      %p265 = por %p263, %p264
      %p266 = scmp.ne.s32.totalorder %s252, %s253
      %p267 = scmp.eq.s32.totalorder %s23, 7
      %p268 = por %p266, %p267
      %p270 = scmp.ne.s32.totalorder %s253, %s269
      %p271 = scmp.eq.s32.totalorder %s23, 0
      %p272 = por %p270, %p271
      %p273 = scmp.le.s32.totalorder 1, %s17
      %p274 = scmp.lt.s32.totalorder %s17, 9
      %p275 = pnand %p273, %p274
      %p276 = pneg %p275
      // Predicated region
      $region9: #{bottleneck_forward.3} parent=5 // pred_check
        _
      $region10: #{bottleneck_forward.3} parent=5 // pred_check_branch
        %278 = sbr.rel (%p275) target = $region12
      $region11: #{bottleneck_forward.3} parent=5 // pred_region
        %s279 = ssub.s32 %s17, 1
        // Predicated region
        $region13: #{bottleneck_forward.3} parent=11 // pred_check
          %p280 = pneg %p146
        $region14: #{bottleneck_forward.3} parent=11 // pred_check_branch
          %282 = sbr.rel (%p280) target = $region16
        $region15: #{bottleneck_forward.3} parent=11 // pred_region
          _
        $region16: #{bottleneck_forward.3} parent=11 // pred_fallthru
          _
        // Predicated region
        $region17: #{bottleneck_forward.3} parent=11 // pred_check
          %p283 = pneg %p167
        $region18: #{bottleneck_forward.3} parent=11 // pred_check_branch
          %285 = sbr.rel (%p283) target = $region20
        $region19: #{bottleneck_forward.3} parent=11 // pred_region
          _
        $region20: #{bottleneck_forward.3} parent=11 // pred_fallthru
          _
        // Predicated region
        $region21: #{bottleneck_forward.3} parent=11 // pred_check
          %p286 = pneg %p188
        $region22: #{bottleneck_forward.3} parent=11 // pred_check_branch
          %288 = sbr.rel (%p286) target = $region24
        $region23: #{bottleneck_forward.3} parent=11 // pred_region
          _
        $region24: #{bottleneck_forward.3} parent=11 // pred_fallthru
          _
        // Predicated region
        $region25: #{bottleneck_forward.3} parent=11 // pred_check
          %p289 = pneg %p209
        $region26: #{bottleneck_forward.3} parent=11 // pred_check_branch
          %291 = sbr.rel (%p289) target = $region28
        $region27: #{bottleneck_forward.3} parent=11 // pred_region
          _
        $region28: #{bottleneck_forward.3} parent=11 // pred_fallthru
          _
      $region12: #{bottleneck_forward.3} parent=5 // pred_fallthru
        _
      %p292 = scmp.lt.s32.totalorder %s17, 8
      // Predicated region
      $region29: #{bottleneck_forward.3} parent=5 // pred_check
        %p293 = pneg %p292
      $region30: #{bottleneck_forward.3} parent=5 // pred_check_branch
        %295 = sbr.rel (%p293) target = $region32
      $region31: #{bottleneck_forward.3} parent=5 // pred_region
        // Predicated region
        $region33: #{bottleneck_forward.3} parent=31 // pred_check
          %p296 = pneg %p57
        $region34: #{bottleneck_forward.3} parent=31 // pred_check_branch
          %298 = sbr.rel (%p296) target = $region36
        $region35: #{bottleneck_forward.3} parent=31 // pred_region
          %s299 = ssub.s32 %s25, 1
          %p300 = scmp.gt.s32.totalorder %s299, 0
          %s301 = scalar_select %p300, %s299, 0
          %p302 = scmp.lt.s32.totalorder %s24, 1
          %s303 = scalar_select %p302, %s24, 1
          %p304 = scmp.lt.s32.totalorder %s301, 3
          %s305 = scalar_select %p304, %s301, 3
          %s306 = smul.addr %s305, 8
          %s307 = smul.addr %s303, 32
          %s308 = sadd.s32 %s306, %s307
          %s309 = smul.addr %s308, 8
          %s310 = scalar_lea.vmem %s0, %s309
          %s311 = ssub.s32 %s25, 1
          %p312 = scmp.gt.s32.totalorder %s311, 0
          %s313 = scalar_select %p312, %s311, 0
        $region36: #{bottleneck_forward.3} parent=31 // pred_fallthru
          _
        // Predicated region
        $region37: #{bottleneck_forward.3} parent=31 // pred_check
          %p314 = pneg %p85
        $region38: #{bottleneck_forward.3} parent=31 // pred_check_branch
          %316 = sbr.rel (%p314) target = $region40
        $region39: #{bottleneck_forward.3} parent=31 // pred_region
          %p317 = scmp.lt.s32.totalorder %s24, 1
          %s318 = scalar_select %p317, %s24, 1
          %p319 = scmp.lt.s32.totalorder %s25, 3
          %s320 = scalar_select %p319, %s25, 3
          %s321 = smul.addr %s320, 8
          %s322 = smul.addr %s318, 32
          %s323 = sadd.s32 %s321, %s322
          %s324 = smul.addr %s323, 8
          %s325 = scalar_lea.vmem %s1, %s324
        $region40: #{bottleneck_forward.3} parent=31 // pred_fallthru
          _
        // Predicated region
        $region41: #{bottleneck_forward.3} parent=31 // pred_check
          %p326 = pneg %p119
        $region42: #{bottleneck_forward.3} parent=31 // pred_check_branch
          %328 = sbr.rel (%p326) target = $region44
        $region43: #{bottleneck_forward.3} parent=31 // pred_region
          %s329 = sadd.s32 %s25, 1
          %p330 = scmp.lt.s32.totalorder %s329, 3
          %s331 = scalar_select %p330, %s329, 3
          %p332 = scmp.lt.s32.totalorder %s24, 1
          %s333 = scalar_select %p332, %s24, 1
          %p334 = scmp.lt.s32.totalorder %s331, 3
          %s335 = scalar_select %p334, %s331, 3
          %s336 = smul.addr %s335, 8
          %s337 = smul.addr %s333, 32
          %s338 = sadd.s32 %s336, %s337
          %s339 = smul.addr %s338, 8
          %s340 = scalar_lea.vmem %s2, %s339
          %s341 = sadd.s32 %s25, 1
          %p342 = scmp.lt.s32.totalorder %s341, 3
          %s343 = scalar_select %p342, %s341, 3
        $region44: #{bottleneck_forward.3} parent=31 // pred_fallthru
          _
        // Predicated region
        $region45: #{bottleneck_forward.3} parent=31 // pred_check
          %p344 = pneg %p231
        $region46: #{bottleneck_forward.3} parent=31 // pred_check_branch
          %346 = sbr.rel (%p344) target = $region48
        $region47: #{bottleneck_forward.3} parent=31 // pred_region
          %p347 = scmp.lt.s32.totalorder %s24, 1
          %s348 = scalar_select %p347, %s24, 1
          %p349 = scmp.lt.s32.totalorder %s25, 3
          %s350 = scalar_select %p349, %s25, 3
          %s351 = smul.addr %s350, 32
          %s352 = smul.addr %s348, 128
          %s353 = sadd.s32 %s351, %s352
          %s354 = smul.addr %s353, 8
          %s355 = scalar_lea.vmem %s7, %s354
        $region48: #{bottleneck_forward.3} parent=31 // pred_fallthru
          _
      $region32: #{bottleneck_forward.3} parent=5 // pred_fallthru
        _
      %p356 = scmp.le.s32.totalorder 1, %s17
      %p357 = scmp.lt.s32.totalorder %s17, 9
      %p358 = pnand %p356, %p357
      %p359 = pneg %p358
      // Predicated region
      $region49: #{bottleneck_forward.3} parent=5 // pred_check
        _
      $region50: #{bottleneck_forward.3} parent=5 // pred_check_branch
        %361 = sbr.rel (%p358) target = $region52
      $region51: #{bottleneck_forward.3} parent=5 // pred_region
        %s362 = ssub.s32 %s17, 1
        %s363 = ssub.s32 %s27, 1
        %p364 = scmp.gt.s32.totalorder %s363, 0
        %s365 = scalar_select %p364, %s363, 0
        %p366 = scmp.lt.s32.totalorder %s26, 1
        %s367 = scalar_select %p366, %s26, 1
        %p368 = scmp.lt.s32.totalorder %s365, 3
        %s369 = scalar_select %p368, %s365, 3
        %s370 = smul.addr %s369, 8
        %s371 = smul.addr %s367, 32
        %s372 = sadd.s32 %s370, %s371
        %s373 = smul.addr %s372, 8
        %s374 = scalar_lea.vmem %s0, %s373
        %p375 = pneg %p63
        %p376 = pneg %p60
        %p377 = scmp.lt.s32.totalorder %s26, 1
        %s378 = scalar_select %p377, %s26, 1
        %p379 = scmp.lt.s32.totalorder %s27, 3
        %s380 = scalar_select %p379, %s27, 3
        %s381 = smul.addr %s380, 8
        %s382 = smul.addr %s378, 32
        %s383 = sadd.s32 %s381, %s382
        %s384 = smul.addr %s383, 8
        %s385 = scalar_lea.vmem %s1, %s384
        %p386 = pneg %p91
        %p387 = pneg %p88
        %s388 = sadd.s32 %s27, 1
        %p389 = scmp.lt.s32.totalorder %s388, 3
        %s390 = scalar_select %p389, %s388, 3
        %p391 = scmp.lt.s32.totalorder %s26, 1
        %s392 = scalar_select %p391, %s26, 1
        %p393 = scmp.lt.s32.totalorder %s390, 3
        %s394 = scalar_select %p393, %s390, 3
        %s395 = smul.addr %s394, 8
        %s396 = smul.addr %s392, 32
        %s397 = sadd.s32 %s395, %s396
        %s398 = smul.addr %s397, 8
        %s399 = scalar_lea.vmem %s2, %s398
        %p400 = pneg %p125
        %p401 = pneg %p122
        %p402 = pneg %p146
        %p403 = pneg %p143
        %p404 = pneg %p167
        %p405 = pneg %p164
        %p406 = pneg %p188
        %p407 = pneg %p185
        %p408 = pneg %p209
        %p409 = pneg %p206
        %p410 = scmp.lt.s32.totalorder %s26, 1
        %s411 = scalar_select %p410, %s26, 1
        %p412 = scmp.lt.s32.totalorder %s27, 3
        %s413 = scalar_select %p412, %s27, 3
        %s414 = smul.addr %s413, 32
        %s415 = smul.addr %s411, 128
        %s416 = sadd.s32 %s414, %s415
        %s417 = smul.addr %s416, 8
        %s418 = scalar_lea.vmem %s7, %s417
        %p419 = pneg %p237
        %p420 = pneg %p234
        %p421 = pneg %p265
        %p422 = pneg %p262
        %s423 = sand.u32 %s252, 1
        %s424 = scalar_lea.sflag [#allocation4], %s423
        %s425 = sand.u32 %s252, 1
        %s426 = smul.addr %s425, 256
        %s427 = scalar_lea.vmem [#allocation3], %s426
        %s428 = ssub.s32 %s27, 1
        %p429 = scmp.gt.s32.totalorder %s428, 0
        %s430 = scalar_select %p429, %s428, 0
        %p431 = scmp.lt.s32.totalorder %s26, 1
        %s432 = scalar_select %p431, %s26, 1
        %p433 = scmp.lt.s32.totalorder %s430, 3
        %s434 = scalar_select %p433, %s430, 3
        %s435 = smul.addr %s434, 8
        %s436 = smul.addr %s432, 32
        %s437 = sadd.s32 %s435, %s436
        %s438 = smul.addr %s437, 8
        %s439 = scalar_lea.vmem %s0, %s438
        %s440 = ssub.s32 %s27, 1
        %p441 = scmp.gt.s32.totalorder %s440, 0
        %s442 = scalar_select %p441, %s440, 0
        %p443 = scmp.lt.s32.totalorder %s26, 1
        %s444 = scalar_select %p443, %s26, 1
        %p445 = scmp.lt.s32.totalorder %s27, 3
        %s446 = scalar_select %p445, %s27, 3
        %s447 = smul.addr %s446, 8
        %s448 = smul.addr %s444, 32
        %s449 = sadd.s32 %s447, %s448
        %s450 = smul.addr %s449, 8
        %s451 = scalar_lea.vmem %s1, %s450
        %s452 = sadd.s32 %s27, 1
        %p453 = scmp.lt.s32.totalorder %s452, 3
        %s454 = scalar_select %p453, %s452, 3
        %p455 = scmp.lt.s32.totalorder %s26, 1
        %s456 = scalar_select %p455, %s26, 1
        %p457 = scmp.lt.s32.totalorder %s454, 3
        %s458 = scalar_select %p457, %s454, 3
        %s459 = smul.addr %s458, 8
        %s460 = smul.addr %s456, 32
        %s461 = sadd.s32 %s459, %s460
        %s462 = smul.addr %s461, 8
        %s463 = scalar_lea.vmem %s2, %s462
        %s464 = sadd.s32 %s27, 1
        %p465 = scmp.lt.s32.totalorder %s464, 3
        %s466 = scalar_select %p465, %s464, 3
        %p467 = scmp.lt.s32.totalorder %s26, 1
        %s468 = scalar_select %p467, %s26, 1
        %p469 = scmp.lt.s32.totalorder %s27, 3
        %s470 = scalar_select %p469, %s27, 3
        %s471 = smul.addr %s470, 32
        %s472 = smul.addr %s468, 128
        %s473 = sadd.s32 %s471, %s472
        %s474 = smul.addr %s473, 8
        %s475 = scalar_lea.vmem %s7, %s474
        %476 = vst [vmem:[#allocation2] sm:$0xff] 0.0
        %477 = vst [vmem:[#allocation2 + $0x8] sm:$0x3] 0.0
        %478 = vst [vmem:[#allocation2 + $0x10] sm:$0xff] 0.0
        %479 = vst [vmem:[#allocation2 + $0x18] sm:$0x3] 0.0
        %480 = vst [vmem:[#allocation2 + $0x20] sm:$0xff] 0.0
        %481 = vst [vmem:[#allocation2 + $0x28] sm:$0x3] 0.0
        %482 = vst [vmem:[#allocation2 + $0x30] sm:$0xff] 0.0
        %483 = vst [vmem:[#allocation2 + $0x38] sm:$0x3] 0.0
        %484 = vst [vmem:[#allocation2 + $0x40] sm:$0xff] 0.0
        %485 = vst [vmem:[#allocation2 + $0x48] sm:$0x3] 0.0
        %486 = vst [vmem:[#allocation2 + $0x50] sm:$0xff] 0.0
        %487 = vst [vmem:[#allocation2 + $0x58] sm:$0x3] 0.0
        %488 = vst [vmem:[#allocation2 + $0x60] sm:$0xff] 0.0
        %489 = vst [vmem:[#allocation2 + $0x68] sm:$0x3] 0.0
        %490 = vst [vmem:[#allocation2 + $0x70] sm:$0xff] 0.0
        %491 = vst [vmem:[#allocation2 + $0x78] sm:$0x3] 0.0
        %492 = vst [vmem:[#allocation2 + $0x80] sm:$0xff] 0.0
        %493 = vst [vmem:[#allocation2 + $0x88] sm:$0x3] 0.0
        %494 = vst [vmem:[#allocation2 + $0x90] sm:$0xff] 0.0
        %495 = vst [vmem:[#allocation2 + $0x98] sm:$0x3] 0.0
        %p496 = scmp.gt.s32.totalorder %s27, 0
        %s497 = scalar_select %p496, 1, 0
        %s498 = scvt.s32.f32 %s497
        %p499 = scmp.lt.s32.totalorder %s27, 3
        %s500 = scalar_select %p499, 1, 0
        %s501 = scvt.s32.f32 %s500
        %v502 = vld [vmem:[%s439] sm:$0xff]
        %v503 = vld [vmem:[%s439 + $0x8] sm:$0xff]
        %v504 = vld [vmem:[%s439 + $0x10] sm:$0xff]
        %v505 = vld [vmem:[%s439 + $0x18] sm:$0xff]
        %v506 = vld [vmem:[%s439 + $0x20] sm:$0xff]
        %v507 = vld [vmem:[%s439 + $0x28] sm:$0xff]
        %v508 = vld [vmem:[%s439 + $0x30] sm:$0xff]
        %v509 = vld [vmem:[%s439 + $0x38] sm:$0xff]
        %v510 = vstv %s498
        %v511 = vmul.f32 %v502, %v510
        %v512 = vmul.f32 %v503, %v510
        %v513 = vmul.f32 %v504, %v510
        %v514 = vmul.f32 %v505, %v510
        %v515 = vmul.f32 %v506, %v510
        %v516 = vmul.f32 %v507, %v510
        %v517 = vmul.f32 %v508, %v510
        %v518 = vmul.f32 %v509, %v510
        %v519 = vld [vmem:[%s451] sm:$0xff]
        %v520 = vld [vmem:[%s451 + $0x8] sm:$0xff]
        %v521 = vld [vmem:[%s451 + $0x10] sm:$0xff]
        %v522 = vld [vmem:[%s451 + $0x18] sm:$0xff]
        %v523 = vld [vmem:[%s451 + $0x20] sm:$0xff]
        %v524 = vld [vmem:[%s451 + $0x28] sm:$0xff]
        %v525 = vld [vmem:[%s451 + $0x30] sm:$0xff]
        %v526 = vld [vmem:[%s451 + $0x38] sm:$0xff]
        %v527 = vld [vmem:[%s463] sm:$0xff]
        %v528 = vld [vmem:[%s463 + $0x8] sm:$0xff]
        %v529 = vld [vmem:[%s463 + $0x10] sm:$0xff]
        %v530 = vld [vmem:[%s463 + $0x18] sm:$0xff]
        %v531 = vld [vmem:[%s463 + $0x20] sm:$0xff]
        %v532 = vld [vmem:[%s463 + $0x28] sm:$0xff]
        %v533 = vld [vmem:[%s463 + $0x30] sm:$0xff]
        %v534 = vld [vmem:[%s463 + $0x38] sm:$0xff]
        %v535 = vstv %s501
        %v536 = vmul.f32 %v527, %v535
        %v537 = vmul.f32 %v528, %v535
        %v538 = vmul.f32 %v529, %v535
        %v539 = vmul.f32 %v530, %v535
        %v540 = vmul.f32 %v531, %v535
        %v541 = vmul.f32 %v532, %v535
        %v542 = vmul.f32 %v533, %v535
        %v543 = vmul.f32 %v534, %v535
        %s544 = scalar_lea.vmem [#allocation2], 16
        %545 = vst [vmem:[%s544 + $0x1] sm:$0xff] %v511
        %546 = vst [vmem:[%s544 + $0x11] sm:$0xff] %v512
        %547 = vst [vmem:[%s544 + $0x21] sm:$0xff] %v513
        %548 = vst [vmem:[%s544 + $0x31] sm:$0xff] %v514
        %549 = vst [vmem:[%s544 + $0x41] sm:$0xff] %v515
        %550 = vst [vmem:[%s544 + $0x51] sm:$0xff] %v516
        %551 = vst [vmem:[%s544 + $0x61] sm:$0xff] %v517
        %552 = vst [vmem:[%s544 + $0x71] sm:$0xff] %v518
        %v553 = vld [vmem:[#allocation2] sm:$0xff]
        %v554 = vld [vmem:[#allocation2 + $0x10] sm:$0xff]
        %v555 = vld [vmem:[#allocation2 + $0x20] sm:$0xff]
        %v556 = vld [vmem:[#allocation2 + $0x30] sm:$0xff]
        %v557 = vld [vmem:[#allocation2 + $0x40] sm:$0xff]
        %v558 = vld [vmem:[#allocation2 + $0x50] sm:$0xff]
        %v559 = vld [vmem:[#allocation2 + $0x60] sm:$0xff]
        %v560 = vld [vmem:[#allocation2 + $0x70] sm:$0xff]
        %v561 = vld [vmem:[#allocation2 + $0x1] sm:$0xff]
        %v562 = vld [vmem:[#allocation2 + $0x11] sm:$0xff]
        %v563 = vld [vmem:[#allocation2 + $0x21] sm:$0xff]
        %v564 = vld [vmem:[#allocation2 + $0x31] sm:$0xff]
        %v565 = vld [vmem:[#allocation2 + $0x41] sm:$0xff]
        %v566 = vld [vmem:[#allocation2 + $0x51] sm:$0xff]
        %v567 = vld [vmem:[#allocation2 + $0x61] sm:$0xff]
        %v568 = vld [vmem:[#allocation2 + $0x71] sm:$0xff]
        %v569 = vld [vmem:[#allocation2 + $0x2] sm:$0xff]
        %v570 = vld [vmem:[#allocation2 + $0x12] sm:$0xff]
        %v571 = vld [vmem:[#allocation2 + $0x22] sm:$0xff]
        %v572 = vld [vmem:[#allocation2 + $0x32] sm:$0xff]
        %v573 = vld [vmem:[#allocation2 + $0x42] sm:$0xff]
        %v574 = vld [vmem:[#allocation2 + $0x52] sm:$0xff]
        %v575 = vld [vmem:[#allocation2 + $0x62] sm:$0xff]
        %v576 = vld [vmem:[#allocation2 + $0x72] sm:$0xff]
        %v577 = vld [vmem:[%s544] sm:$0xff]
        %v578 = vld [vmem:[%s544 + $0x10] sm:$0xff]
        %v579 = vld [vmem:[%s544 + $0x20] sm:$0xff]
        %v580 = vld [vmem:[%s544 + $0x30] sm:$0xff]
        %v581 = vld [vmem:[%s544 + $0x40] sm:$0xff]
        %v582 = vld [vmem:[%s544 + $0x50] sm:$0xff]
        %v583 = vld [vmem:[%s544 + $0x60] sm:$0xff]
        %v584 = vld [vmem:[%s544 + $0x70] sm:$0xff]
        %v585 = vld [vmem:[%s544 + $0x1] sm:$0xff]
        %v586 = vld [vmem:[%s544 + $0x11] sm:$0xff]
        %v587 = vld [vmem:[%s544 + $0x21] sm:$0xff]
        %v588 = vld [vmem:[%s544 + $0x31] sm:$0xff]
        %v589 = vld [vmem:[%s544 + $0x41] sm:$0xff]
        %v590 = vld [vmem:[%s544 + $0x51] sm:$0xff]
        %v591 = vld [vmem:[%s544 + $0x61] sm:$0xff]
        %v592 = vld [vmem:[%s544 + $0x71] sm:$0xff]
        %v593 = vld [vmem:[%s544 + $0x2] sm:$0xff]
        %v594 = vld [vmem:[%s544 + $0x12] sm:$0xff]
        %v595 = vld [vmem:[%s544 + $0x22] sm:$0xff]
        %v596 = vld [vmem:[%s544 + $0x32] sm:$0xff]
        %v597 = vld [vmem:[%s544 + $0x42] sm:$0xff]
        %v598 = vld [vmem:[%s544 + $0x52] sm:$0xff]
        %v599 = vld [vmem:[%s544 + $0x62] sm:$0xff]
        %v600 = vld [vmem:[%s544 + $0x72] sm:$0xff]
        %s601 = scalar_lea.vmem [#allocation2], 32
        %v602 = vld [vmem:[%s601] sm:$0xff]
        %v603 = vld [vmem:[%s601 + $0x10] sm:$0xff]
        %v604 = vld [vmem:[%s601 + $0x20] sm:$0xff]
        %v605 = vld [vmem:[%s601 + $0x30] sm:$0xff]
        %v606 = vld [vmem:[%s601 + $0x40] sm:$0xff]
        %v607 = vld [vmem:[%s601 + $0x50] sm:$0xff]
        %v608 = vld [vmem:[%s601 + $0x60] sm:$0xff]
        %v609 = vld [vmem:[%s601 + $0x70] sm:$0xff]
        %v610 = vld [vmem:[%s601 + $0x1] sm:$0xff]
        %v611 = vld [vmem:[%s601 + $0x11] sm:$0xff]
        %v612 = vld [vmem:[%s601 + $0x21] sm:$0xff]
        %v613 = vld [vmem:[%s601 + $0x31] sm:$0xff]
        %v614 = vld [vmem:[%s601 + $0x41] sm:$0xff]
        %v615 = vld [vmem:[%s601 + $0x51] sm:$0xff]
        %v616 = vld [vmem:[%s601 + $0x61] sm:$0xff]
        %v617 = vld [vmem:[%s601 + $0x71] sm:$0xff]
        %v618 = vld [vmem:[%s601 + $0x2] sm:$0xff]
        %v619 = vld [vmem:[%s601 + $0x12] sm:$0xff]
        %v620 = vld [vmem:[%s601 + $0x22] sm:$0xff]
        %v621 = vld [vmem:[%s601 + $0x32] sm:$0xff]
        %v622 = vld [vmem:[%s601 + $0x42] sm:$0xff]
        %v623 = vld [vmem:[%s601 + $0x52] sm:$0xff]
        %v624 = vld [vmem:[%s601 + $0x62] sm:$0xff]
        %v625 = vld [vmem:[%s601 + $0x72] sm:$0xff]
        %v626 = vld [vmem:[%s3] sm:$0xff]
        %v627 = vld [vmem:[%s3 + $0x8] sm:$0xff]
        %v628 = vld [vmem:[%s3 + $0x10] sm:$0xff]
        %v629 = vld [vmem:[%s3 + $0x18] sm:$0xff]
        %v630 = vld [vmem:[%s3 + $0x20] sm:$0xff]
        %v631 = vld [vmem:[%s3 + $0x28] sm:$0xff]
        %v632 = vld [vmem:[%s3 + $0x30] sm:$0xff]
        %v633 = vld [vmem:[%s3 + $0x38] sm:$0xff]
        %v634 = vld [vmem:[%s3 + $0x40] sm:$0xff]
        %v635 = vld [vmem:[%s3 + $0x48] sm:$0xff]
        %v636 = vld [vmem:[%s3 + $0x50] sm:$0xff]
        %v637 = vld [vmem:[%s3 + $0x58] sm:$0xff]
        %v638 = vld [vmem:[%s3 + $0x60] sm:$0xff]
        %v639 = vld [vmem:[%s3 + $0x68] sm:$0xff]
        %v640 = vld [vmem:[%s3 + $0x70] sm:$0xff]
        %v641 = vld [vmem:[%s3 + $0x78] sm:$0xff]
        %v642 = vld [vmem:[%s3 + $0x80] sm:$0xff]
        %v643 = vld [vmem:[%s3 + $0x88] sm:$0xff]
        %v644 = vld [vmem:[%s3 + $0x90] sm:$0xff]
        %v645 = vld [vmem:[%s3 + $0x98] sm:$0xff]
        %v646 = vld [vmem:[%s3 + $0xa0] sm:$0xff]
        %v647 = vld [vmem:[%s3 + $0xa8] sm:$0xff]
        %v648 = vld [vmem:[%s3 + $0xb0] sm:$0xff]
        %v649 = vld [vmem:[%s3 + $0xb8] sm:$0xff]
        %v650 = vld [vmem:[%s3 + $0xc0] sm:$0xff]
        %v651 = vld [vmem:[%s3 + $0xc8] sm:$0xff]
        %v652 = vld [vmem:[%s3 + $0xd0] sm:$0xff]
        %v653 = vld [vmem:[%s3 + $0xd8] sm:$0xff]
        %v654 = vld [vmem:[%s3 + $0xe0] sm:$0xff]
        %v655 = vld [vmem:[%s3 + $0xe8] sm:$0xff]
        %v656 = vld [vmem:[%s3 + $0xf0] sm:$0xff]
        %v657 = vld [vmem:[%s3 + $0xf8] sm:$0xff]
        %v658 = vld [vmem:[%s3 + $0x100] sm:$0xff]
        %v659 = vld [vmem:[%s3 + $0x108] sm:$0xff]
        %v660 = vld [vmem:[%s3 + $0x110] sm:$0xff]
        %v661 = vld [vmem:[%s3 + $0x118] sm:$0xff]
        %v662 = vld [vmem:[%s3 + $0x120] sm:$0xff]
        %v663 = vld [vmem:[%s3 + $0x128] sm:$0xff]
        %v664 = vld [vmem:[%s3 + $0x130] sm:$0xff]
        %v665 = vld [vmem:[%s3 + $0x138] sm:$0xff]
        %v666 = vld [vmem:[%s3 + $0x140] sm:$0xff]
        %v667 = vld [vmem:[%s3 + $0x148] sm:$0xff]
        %v668 = vld [vmem:[%s3 + $0x150] sm:$0xff]
        %v669 = vld [vmem:[%s3 + $0x158] sm:$0xff]
        %v670 = vld [vmem:[%s3 + $0x160] sm:$0xff]
        %v671 = vld [vmem:[%s3 + $0x168] sm:$0xff]
        %v672 = vld [vmem:[%s3 + $0x170] sm:$0xff]
        %v673 = vld [vmem:[%s3 + $0x178] sm:$0xff]
        %v674 = vld [vmem:[%s3 + $0x180] sm:$0xff]
        %v675 = vld [vmem:[%s3 + $0x188] sm:$0xff]
        %v676 = vld [vmem:[%s3 + $0x190] sm:$0xff]
        %v677 = vld [vmem:[%s3 + $0x198] sm:$0xff]
        %v678 = vld [vmem:[%s3 + $0x1a0] sm:$0xff]
        %v679 = vld [vmem:[%s3 + $0x1a8] sm:$0xff]
        %v680 = vld [vmem:[%s3 + $0x1b0] sm:$0xff]
        %v681 = vld [vmem:[%s3 + $0x1b8] sm:$0xff]
        %v682 = vld [vmem:[%s3 + $0x1c0] sm:$0xff]
        %v683 = vld [vmem:[%s3 + $0x1c8] sm:$0xff]
        %v684 = vld [vmem:[%s3 + $0x1d0] sm:$0xff]
        %v685 = vld [vmem:[%s3 + $0x1d8] sm:$0xff]
        %v686 = vld [vmem:[%s3 + $0x1e0] sm:$0xff]
        %v687 = vld [vmem:[%s3 + $0x1e8] sm:$0xff]
        %v688 = vld [vmem:[%s3 + $0x1f0] sm:$0xff]
        %v689 = vld [vmem:[%s3 + $0x1f8] sm:$0xff]
        %v690 = vld [vmem:[%s3 + $0x200] sm:$0xff]
        %v691 = vld [vmem:[%s3 + $0x208] sm:$0xff]
        %v692 = vld [vmem:[%s3 + $0x210] sm:$0xff]
        %v693 = vld [vmem:[%s3 + $0x218] sm:$0xff]
        %v694 = vld [vmem:[%s3 + $0x220] sm:$0xff]
        %v695 = vld [vmem:[%s3 + $0x228] sm:$0xff]
        %v696 = vld [vmem:[%s3 + $0x230] sm:$0xff]
        %v697 = vld [vmem:[%s3 + $0x238] sm:$0xff]
        %v698 = vld [vmem:[%s3 + $0x240] sm:$0xff]
        %v699 = vld [vmem:[%s3 + $0x248] sm:$0xff]
        %v700 = vld [vmem:[%s3 + $0x250] sm:$0xff]
        %v701 = vld [vmem:[%s3 + $0x258] sm:$0xff]
        %v702 = vld [vmem:[%s3 + $0x260] sm:$0xff]
        %v703 = vld [vmem:[%s3 + $0x268] sm:$0xff]
        %v704 = vld [vmem:[%s3 + $0x270] sm:$0xff]
        %v705 = vld [vmem:[%s3 + $0x278] sm:$0xff]
        %v706 = vld [vmem:[%s3 + $0x280] sm:$0xff]
        %v707 = vld [vmem:[%s3 + $0x288] sm:$0xff]
        %v708 = vld [vmem:[%s3 + $0x290] sm:$0xff]
        %v709 = vld [vmem:[%s3 + $0x298] sm:$0xff]
        %v710 = vld [vmem:[%s3 + $0x2a0] sm:$0xff]
        %v711 = vld [vmem:[%s3 + $0x2a8] sm:$0xff]
        %v712 = vld [vmem:[%s3 + $0x2b0] sm:$0xff]
        %v713 = vld [vmem:[%s3 + $0x2b8] sm:$0xff]
        %v714 = vld [vmem:[%s3 + $0x2c0] sm:$0xff]
        %v715 = vld [vmem:[%s3 + $0x2c8] sm:$0xff]
        %v716 = vld [vmem:[%s3 + $0x2d0] sm:$0xff]
        %v717 = vld [vmem:[%s3 + $0x2d8] sm:$0xff]
        %v718 = vld [vmem:[%s3 + $0x2e0] sm:$0xff]
        %v719 = vld [vmem:[%s3 + $0x2e8] sm:$0xff]
        %v720 = vld [vmem:[%s3 + $0x2f0] sm:$0xff]
        %v721 = vld [vmem:[%s3 + $0x2f8] sm:$0xff]
        %v722 = vld [vmem:[%s3 + $0x300] sm:$0xff]
        %v723 = vld [vmem:[%s3 + $0x308] sm:$0xff]
        %v724 = vld [vmem:[%s3 + $0x310] sm:$0xff]
        %v725 = vld [vmem:[%s3 + $0x318] sm:$0xff]
        %v726 = vld [vmem:[%s3 + $0x320] sm:$0xff]
        %v727 = vld [vmem:[%s3 + $0x328] sm:$0xff]
        %v728 = vld [vmem:[%s3 + $0x330] sm:$0xff]
        %v729 = vld [vmem:[%s3 + $0x338] sm:$0xff]
        %v730 = vld [vmem:[%s3 + $0x340] sm:$0xff]
        %v731 = vld [vmem:[%s3 + $0x348] sm:$0xff]
        %v732 = vld [vmem:[%s3 + $0x350] sm:$0xff]
        %v733 = vld [vmem:[%s3 + $0x358] sm:$0xff]
        %v734 = vld [vmem:[%s3 + $0x360] sm:$0xff]
        %v735 = vld [vmem:[%s3 + $0x368] sm:$0xff]
        %v736 = vld [vmem:[%s3 + $0x370] sm:$0xff]
        %v737 = vld [vmem:[%s3 + $0x378] sm:$0xff]
        %v738 = vld [vmem:[%s3 + $0x380] sm:$0xff]
        %v739 = vld [vmem:[%s3 + $0x388] sm:$0xff]
        %v740 = vld [vmem:[%s3 + $0x390] sm:$0xff]
        %v741 = vld [vmem:[%s3 + $0x398] sm:$0xff]
        %v742 = vld [vmem:[%s3 + $0x3a0] sm:$0xff]
        %v743 = vld [vmem:[%s3 + $0x3a8] sm:$0xff]
        %v744 = vld [vmem:[%s3 + $0x3b0] sm:$0xff]
        %v745 = vld [vmem:[%s3 + $0x3b8] sm:$0xff]
        %v746 = vld [vmem:[%s3 + $0x3c0] sm:$0xff]
        %v747 = vld [vmem:[%s3 + $0x3c8] sm:$0xff]
        %v748 = vld [vmem:[%s3 + $0x3d0] sm:$0xff]
        %v749 = vld [vmem:[%s3 + $0x3d8] sm:$0xff]
        %v750 = vld [vmem:[%s3 + $0x3e0] sm:$0xff]
        %v751 = vld [vmem:[%s3 + $0x3e8] sm:$0xff]
        %v752 = vld [vmem:[%s3 + $0x3f0] sm:$0xff]
        %v753 = vld [vmem:[%s3 + $0x3f8] sm:$0xff]
        %v754 = vld [vmem:[%s3 + $0x400] sm:$0xff]
        %v755 = vld [vmem:[%s3 + $0x408] sm:$0xff]
        %v756 = vld [vmem:[%s3 + $0x410] sm:$0xff]
        %v757 = vld [vmem:[%s3 + $0x418] sm:$0xff]
        %v758 = vld [vmem:[%s3 + $0x420] sm:$0xff]
        %v759 = vld [vmem:[%s3 + $0x428] sm:$0xff]
        %v760 = vld [vmem:[%s3 + $0x430] sm:$0xff]
        %v761 = vld [vmem:[%s3 + $0x438] sm:$0xff]
        %v762 = vld [vmem:[%s3 + $0x440] sm:$0xff]
        %v763 = vld [vmem:[%s3 + $0x448] sm:$0xff]
        %v764 = vld [vmem:[%s3 + $0x450] sm:$0xff]
        %v765 = vld [vmem:[%s3 + $0x458] sm:$0xff]
        %v766 = vld [vmem:[%s3 + $0x460] sm:$0xff]
        %v767 = vld [vmem:[%s3 + $0x468] sm:$0xff]
        %v768 = vld [vmem:[%s3 + $0x470] sm:$0xff]
        %v769 = vld [vmem:[%s3 + $0x478] sm:$0xff]
        %770 = vst [vmem:[%s544 + $0x1] sm:$0xff] %v519
        %771 = vst [vmem:[%s544 + $0x11] sm:$0xff] %v520
        %772 = vst [vmem:[%s544 + $0x21] sm:$0xff] %v521
        %773 = vst [vmem:[%s544 + $0x31] sm:$0xff] %v522
        %774 = vst [vmem:[%s544 + $0x41] sm:$0xff] %v523
        %775 = vst [vmem:[%s544 + $0x51] sm:$0xff] %v524
        %776 = vst [vmem:[%s544 + $0x61] sm:$0xff] %v525
        %777 = vst [vmem:[%s544 + $0x71] sm:$0xff] %v526
        %v778 = vld [vmem:[#allocation2] sm:$0xff]
        %v779 = vld [vmem:[#allocation2 + $0x10] sm:$0xff]
        %v780 = vld [vmem:[#allocation2 + $0x20] sm:$0xff]
        %v781 = vld [vmem:[#allocation2 + $0x30] sm:$0xff]
        %v782 = vld [vmem:[#allocation2 + $0x40] sm:$0xff]
        %v783 = vld [vmem:[#allocation2 + $0x50] sm:$0xff]
        %v784 = vld [vmem:[#allocation2 + $0x60] sm:$0xff]
        %v785 = vld [vmem:[#allocation2 + $0x70] sm:$0xff]
        %v786 = vld [vmem:[#allocation2 + $0x1] sm:$0xff]
        %v787 = vld [vmem:[#allocation2 + $0x11] sm:$0xff]
        %v788 = vld [vmem:[#allocation2 + $0x21] sm:$0xff]
        %v789 = vld [vmem:[#allocation2 + $0x31] sm:$0xff]
        %v790 = vld [vmem:[#allocation2 + $0x41] sm:$0xff]
        %v791 = vld [vmem:[#allocation2 + $0x51] sm:$0xff]
        %v792 = vld [vmem:[#allocation2 + $0x61] sm:$0xff]
        %v793 = vld [vmem:[#allocation2 + $0x71] sm:$0xff]
        %v794 = vld [vmem:[#allocation2 + $0x2] sm:$0xff]
        %v795 = vld [vmem:[#allocation2 + $0x12] sm:$0xff]
        %v796 = vld [vmem:[#allocation2 + $0x22] sm:$0xff]
        %v797 = vld [vmem:[#allocation2 + $0x32] sm:$0xff]
        %v798 = vld [vmem:[#allocation2 + $0x42] sm:$0xff]
        %v799 = vld [vmem:[#allocation2 + $0x52] sm:$0xff]
        %v800 = vld [vmem:[#allocation2 + $0x62] sm:$0xff]
        %v801 = vld [vmem:[#allocation2 + $0x72] sm:$0xff]
        %v802 = vld [vmem:[%s544] sm:$0xff]
        %v803 = vld [vmem:[%s544 + $0x10] sm:$0xff]
        %v804 = vld [vmem:[%s544 + $0x20] sm:$0xff]
        %v805 = vld [vmem:[%s544 + $0x30] sm:$0xff]
        %v806 = vld [vmem:[%s544 + $0x40] sm:$0xff]
        %v807 = vld [vmem:[%s544 + $0x50] sm:$0xff]
        %v808 = vld [vmem:[%s544 + $0x60] sm:$0xff]
        %v809 = vld [vmem:[%s544 + $0x70] sm:$0xff]
        %v810 = vld [vmem:[%s544 + $0x1] sm:$0xff]
        %v811 = vld [vmem:[%s544 + $0x11] sm:$0xff]
        %v812 = vld [vmem:[%s544 + $0x21] sm:$0xff]
        %v813 = vld [vmem:[%s544 + $0x31] sm:$0xff]
        %v814 = vld [vmem:[%s544 + $0x41] sm:$0xff]
        %v815 = vld [vmem:[%s544 + $0x51] sm:$0xff]
        %v816 = vld [vmem:[%s544 + $0x61] sm:$0xff]
        %v817 = vld [vmem:[%s544 + $0x71] sm:$0xff]
        %v818 = vld [vmem:[%s544 + $0x2] sm:$0xff]
        %v819 = vld [vmem:[%s544 + $0x12] sm:$0xff]
        %v820 = vld [vmem:[%s544 + $0x22] sm:$0xff]
        %v821 = vld [vmem:[%s544 + $0x32] sm:$0xff]
        %v822 = vld [vmem:[%s544 + $0x42] sm:$0xff]
        %v823 = vld [vmem:[%s544 + $0x52] sm:$0xff]
        %v824 = vld [vmem:[%s544 + $0x62] sm:$0xff]
        %v825 = vld [vmem:[%s544 + $0x72] sm:$0xff]
        %v826 = vld [vmem:[%s601] sm:$0xff]
        %v827 = vld [vmem:[%s601 + $0x10] sm:$0xff]
        %v828 = vld [vmem:[%s601 + $0x20] sm:$0xff]
        %v829 = vld [vmem:[%s601 + $0x30] sm:$0xff]
        %v830 = vld [vmem:[%s601 + $0x40] sm:$0xff]
        %v831 = vld [vmem:[%s601 + $0x50] sm:$0xff]
        %v832 = vld [vmem:[%s601 + $0x60] sm:$0xff]
        %v833 = vld [vmem:[%s601 + $0x70] sm:$0xff]
        %v834 = vld [vmem:[%s601 + $0x1] sm:$0xff]
        %v835 = vld [vmem:[%s601 + $0x11] sm:$0xff]
        %v836 = vld [vmem:[%s601 + $0x21] sm:$0xff]
        %v837 = vld [vmem:[%s601 + $0x31] sm:$0xff]
        %v838 = vld [vmem:[%s601 + $0x41] sm:$0xff]
        %v839 = vld [vmem:[%s601 + $0x51] sm:$0xff]
        %v840 = vld [vmem:[%s601 + $0x61] sm:$0xff]
        %v841 = vld [vmem:[%s601 + $0x71] sm:$0xff]
        %v842 = vld [vmem:[%s601 + $0x2] sm:$0xff]
        %v843 = vld [vmem:[%s601 + $0x12] sm:$0xff]
        %v844 = vld [vmem:[%s601 + $0x22] sm:$0xff]
        %v845 = vld [vmem:[%s601 + $0x32] sm:$0xff]
        %v846 = vld [vmem:[%s601 + $0x42] sm:$0xff]
        %v847 = vld [vmem:[%s601 + $0x52] sm:$0xff]
        %v848 = vld [vmem:[%s601 + $0x62] sm:$0xff]
        %v849 = vld [vmem:[%s601 + $0x72] sm:$0xff]
        %s850 = scalar_lea.vmem %s3, 1152
        %v851 = vld [vmem:[%s850] sm:$0xff]
        %v852 = vld [vmem:[%s850 + $0x8] sm:$0xff]
        %v853 = vld [vmem:[%s850 + $0x10] sm:$0xff]
        %v854 = vld [vmem:[%s850 + $0x18] sm:$0xff]
        %v855 = vld [vmem:[%s850 + $0x20] sm:$0xff]
        %v856 = vld [vmem:[%s850 + $0x28] sm:$0xff]
        %v857 = vld [vmem:[%s850 + $0x30] sm:$0xff]
        %v858 = vld [vmem:[%s850 + $0x38] sm:$0xff]
        %v859 = vld [vmem:[%s850 + $0x40] sm:$0xff]
        %v860 = vld [vmem:[%s850 + $0x48] sm:$0xff]
        %v861 = vld [vmem:[%s850 + $0x50] sm:$0xff]
        %v862 = vld [vmem:[%s850 + $0x58] sm:$0xff]
        %v863 = vld [vmem:[%s850 + $0x60] sm:$0xff]
        %v864 = vld [vmem:[%s850 + $0x68] sm:$0xff]
        %v865 = vld [vmem:[%s850 + $0x70] sm:$0xff]
        %v866 = vld [vmem:[%s850 + $0x78] sm:$0xff]
        %v867 = vld [vmem:[%s850 + $0x80] sm:$0xff]
        %v868 = vld [vmem:[%s850 + $0x88] sm:$0xff]
        %v869 = vld [vmem:[%s850 + $0x90] sm:$0xff]
        %v870 = vld [vmem:[%s850 + $0x98] sm:$0xff]
        %v871 = vld [vmem:[%s850 + $0xa0] sm:$0xff]
        %v872 = vld [vmem:[%s850 + $0xa8] sm:$0xff]
        %v873 = vld [vmem:[%s850 + $0xb0] sm:$0xff]
        %v874 = vld [vmem:[%s850 + $0xb8] sm:$0xff]
        %v875 = vld [vmem:[%s850 + $0xc0] sm:$0xff]
        %v876 = vld [vmem:[%s850 + $0xc8] sm:$0xff]
        %v877 = vld [vmem:[%s850 + $0xd0] sm:$0xff]
        %v878 = vld [vmem:[%s850 + $0xd8] sm:$0xff]
        %v879 = vld [vmem:[%s850 + $0xe0] sm:$0xff]
        %v880 = vld [vmem:[%s850 + $0xe8] sm:$0xff]
        %v881 = vld [vmem:[%s850 + $0xf0] sm:$0xff]
        %v882 = vld [vmem:[%s850 + $0xf8] sm:$0xff]
        %v883 = vld [vmem:[%s850 + $0x100] sm:$0xff]
        %v884 = vld [vmem:[%s850 + $0x108] sm:$0xff]
        %v885 = vld [vmem:[%s850 + $0x110] sm:$0xff]
        %v886 = vld [vmem:[%s850 + $0x118] sm:$0xff]
        %v887 = vld [vmem:[%s850 + $0x120] sm:$0xff]
        %v888 = vld [vmem:[%s850 + $0x128] sm:$0xff]
        %v889 = vld [vmem:[%s850 + $0x130] sm:$0xff]
        %v890 = vld [vmem:[%s850 + $0x138] sm:$0xff]
        %v891 = vld [vmem:[%s850 + $0x140] sm:$0xff]
        %v892 = vld [vmem:[%s850 + $0x148] sm:$0xff]
        %v893 = vld [vmem:[%s850 + $0x150] sm:$0xff]
        %v894 = vld [vmem:[%s850 + $0x158] sm:$0xff]
        %v895 = vld [vmem:[%s850 + $0x160] sm:$0xff]
        %v896 = vld [vmem:[%s850 + $0x168] sm:$0xff]
        %v897 = vld [vmem:[%s850 + $0x170] sm:$0xff]
        %v898 = vld [vmem:[%s850 + $0x178] sm:$0xff]
        %v899 = vld [vmem:[%s850 + $0x180] sm:$0xff]
        %v900 = vld [vmem:[%s850 + $0x188] sm:$0xff]
        %v901 = vld [vmem:[%s850 + $0x190] sm:$0xff]
        %v902 = vld [vmem:[%s850 + $0x198] sm:$0xff]
        %v903 = vld [vmem:[%s850 + $0x1a0] sm:$0xff]
        %v904 = vld [vmem:[%s850 + $0x1a8] sm:$0xff]
        %v905 = vld [vmem:[%s850 + $0x1b0] sm:$0xff]
        %v906 = vld [vmem:[%s850 + $0x1b8] sm:$0xff]
        %v907 = vld [vmem:[%s850 + $0x1c0] sm:$0xff]
        %v908 = vld [vmem:[%s850 + $0x1c8] sm:$0xff]
        %v909 = vld [vmem:[%s850 + $0x1d0] sm:$0xff]
        %v910 = vld [vmem:[%s850 + $0x1d8] sm:$0xff]
        %v911 = vld [vmem:[%s850 + $0x1e0] sm:$0xff]
        %v912 = vld [vmem:[%s850 + $0x1e8] sm:$0xff]
        %v913 = vld [vmem:[%s850 + $0x1f0] sm:$0xff]
        %v914 = vld [vmem:[%s850 + $0x1f8] sm:$0xff]
        %v915 = vld [vmem:[%s850 + $0x200] sm:$0xff]
        %v916 = vld [vmem:[%s850 + $0x208] sm:$0xff]
        %v917 = vld [vmem:[%s850 + $0x210] sm:$0xff]
        %v918 = vld [vmem:[%s850 + $0x218] sm:$0xff]
        %v919 = vld [vmem:[%s850 + $0x220] sm:$0xff]
        %v920 = vld [vmem:[%s850 + $0x228] sm:$0xff]
        %v921 = vld [vmem:[%s850 + $0x230] sm:$0xff]
        %v922 = vld [vmem:[%s850 + $0x238] sm:$0xff]
        %v923 = vld [vmem:[%s850 + $0x240] sm:$0xff]
        %v924 = vld [vmem:[%s850 + $0x248] sm:$0xff]
        %v925 = vld [vmem:[%s850 + $0x250] sm:$0xff]
        %v926 = vld [vmem:[%s850 + $0x258] sm:$0xff]
        %v927 = vld [vmem:[%s850 + $0x260] sm:$0xff]
        %v928 = vld [vmem:[%s850 + $0x268] sm:$0xff]
        %v929 = vld [vmem:[%s850 + $0x270] sm:$0xff]
        %v930 = vld [vmem:[%s850 + $0x278] sm:$0xff]
        %v931 = vld [vmem:[%s850 + $0x280] sm:$0xff]
        %v932 = vld [vmem:[%s850 + $0x288] sm:$0xff]
        %v933 = vld [vmem:[%s850 + $0x290] sm:$0xff]
        %v934 = vld [vmem:[%s850 + $0x298] sm:$0xff]
        %v935 = vld [vmem:[%s850 + $0x2a0] sm:$0xff]
        %v936 = vld [vmem:[%s850 + $0x2a8] sm:$0xff]
        %v937 = vld [vmem:[%s850 + $0x2b0] sm:$0xff]
        %v938 = vld [vmem:[%s850 + $0x2b8] sm:$0xff]
        %v939 = vld [vmem:[%s850 + $0x2c0] sm:$0xff]
        %v940 = vld [vmem:[%s850 + $0x2c8] sm:$0xff]
        %v941 = vld [vmem:[%s850 + $0x2d0] sm:$0xff]
        %v942 = vld [vmem:[%s850 + $0x2d8] sm:$0xff]
        %v943 = vld [vmem:[%s850 + $0x2e0] sm:$0xff]
        %v944 = vld [vmem:[%s850 + $0x2e8] sm:$0xff]
        %v945 = vld [vmem:[%s850 + $0x2f0] sm:$0xff]
        %v946 = vld [vmem:[%s850 + $0x2f8] sm:$0xff]
        %v947 = vld [vmem:[%s850 + $0x300] sm:$0xff]
        %v948 = vld [vmem:[%s850 + $0x308] sm:$0xff]
        %v949 = vld [vmem:[%s850 + $0x310] sm:$0xff]
        %v950 = vld [vmem:[%s850 + $0x318] sm:$0xff]
        %v951 = vld [vmem:[%s850 + $0x320] sm:$0xff]
        %v952 = vld [vmem:[%s850 + $0x328] sm:$0xff]
        %v953 = vld [vmem:[%s850 + $0x330] sm:$0xff]
        %v954 = vld [vmem:[%s850 + $0x338] sm:$0xff]
        %v955 = vld [vmem:[%s850 + $0x340] sm:$0xff]
        %v956 = vld [vmem:[%s850 + $0x348] sm:$0xff]
        %v957 = vld [vmem:[%s850 + $0x350] sm:$0xff]
        %v958 = vld [vmem:[%s850 + $0x358] sm:$0xff]
        %v959 = vld [vmem:[%s850 + $0x360] sm:$0xff]
        %v960 = vld [vmem:[%s850 + $0x368] sm:$0xff]
        %v961 = vld [vmem:[%s850 + $0x370] sm:$0xff]
        %v962 = vld [vmem:[%s850 + $0x378] sm:$0xff]
        %v963 = vld [vmem:[%s850 + $0x380] sm:$0xff]
        %v964 = vld [vmem:[%s850 + $0x388] sm:$0xff]
        %v965 = vld [vmem:[%s850 + $0x390] sm:$0xff]
        %v966 = vld [vmem:[%s850 + $0x398] sm:$0xff]
        %v967 = vld [vmem:[%s850 + $0x3a0] sm:$0xff]
        %v968 = vld [vmem:[%s850 + $0x3a8] sm:$0xff]
        %v969 = vld [vmem:[%s850 + $0x3b0] sm:$0xff]
        %v970 = vld [vmem:[%s850 + $0x3b8] sm:$0xff]
        %v971 = vld [vmem:[%s850 + $0x3c0] sm:$0xff]
        %v972 = vld [vmem:[%s850 + $0x3c8] sm:$0xff]
        %v973 = vld [vmem:[%s850 + $0x3d0] sm:$0xff]
        %v974 = vld [vmem:[%s850 + $0x3d8] sm:$0xff]
        %v975 = vld [vmem:[%s850 + $0x3e0] sm:$0xff]
        %v976 = vld [vmem:[%s850 + $0x3e8] sm:$0xff]
        %v977 = vld [vmem:[%s850 + $0x3f0] sm:$0xff]
        %v978 = vld [vmem:[%s850 + $0x3f8] sm:$0xff]
        %v979 = vld [vmem:[%s850 + $0x400] sm:$0xff]
        %v980 = vld [vmem:[%s850 + $0x408] sm:$0xff]
        %v981 = vld [vmem:[%s850 + $0x410] sm:$0xff]
        %v982 = vld [vmem:[%s850 + $0x418] sm:$0xff]
        %v983 = vld [vmem:[%s850 + $0x420] sm:$0xff]
        %v984 = vld [vmem:[%s850 + $0x428] sm:$0xff]
        %v985 = vld [vmem:[%s850 + $0x430] sm:$0xff]
        %v986 = vld [vmem:[%s850 + $0x438] sm:$0xff]
        %v987 = vld [vmem:[%s850 + $0x440] sm:$0xff]
        %v988 = vld [vmem:[%s850 + $0x448] sm:$0xff]
        %v989 = vld [vmem:[%s850 + $0x450] sm:$0xff]
        %v990 = vld [vmem:[%s850 + $0x458] sm:$0xff]
        %v991 = vld [vmem:[%s850 + $0x460] sm:$0xff]
        %v992 = vld [vmem:[%s850 + $0x468] sm:$0xff]
        %v993 = vld [vmem:[%s850 + $0x470] sm:$0xff]
        %v994 = vld [vmem:[%s850 + $0x478] sm:$0xff]
        %995 = vmatpush.msra.mxu0 %v866
        %996 = vmatpush.msra.mxu0 %v865
        %997 = vmatpush.msra.mxu0 %v864
        %998 = vmatpush.msra.mxu0 %v863
        %999 = vmatpush.msra.mxu0 %v862
        %1000 = vmatpush.msra.mxu0 %v861
        %1001 = vmatpush.msra.mxu0 %v860
        %1002 = vmatpush.msra.mxu0 %v859
        %1003 = vmatpush.msra.mxu0 %v858
        %1004 = vmatpush.msra.mxu0 %v857
        %1005 = vmatpush.msra.mxu0 %v856
        %1006 = vmatpush.msra.mxu0 %v855
        %1007 = vmatpush.msra.mxu0 %v854
        %1008 = vmatpush.msra.mxu0 %v853
        %1009 = vmatpush.msra.mxu0 %v852
        %1010 = vmatpush.msra.mxu0 %v851
        %1011 = vmatmul.f32.gmra.mxu0 %v778
        %v1012 = vpop.f32.mrf.mxu0
        %v1013 = vadd.f32 0.0, %v1012
        %1014 = vmatmul.f32.gmra.mxu0 %v779
        %v1015 = vpop.f32.mrf.mxu0
        %v1016 = vadd.f32 0.0, %v1015
        %1017 = vmatmul.f32.gmra.mxu0 %v780
        %v1018 = vpop.f32.mrf.mxu0
        %v1019 = vadd.f32 0.0, %v1018
        %1020 = vmatmul.f32.gmra.mxu0 %v781
        %v1021 = vpop.f32.mrf.mxu0
        %v1022 = vadd.f32 0.0, %v1021
        %1023 = vmatmul.f32.gmra.mxu0 %v782
        %v1024 = vpop.f32.mrf.mxu0
        %v1025 = vadd.f32 0.0, %v1024
        %1026 = vmatmul.f32.gmra.mxu0 %v783
        %v1027 = vpop.f32.mrf.mxu0
        %v1028 = vadd.f32 0.0, %v1027
        %1029 = vmatmul.f32.gmra.mxu0 %v784
        %v1030 = vpop.f32.mrf.mxu0
        %v1031 = vadd.f32 0.0, %v1030
        %1032 = vmatmul.f32.gmra.mxu0 %v785
        %v1033 = vpop.f32.mrf.mxu0
        %v1034 = vadd.f32 0.0, %v1033
        %1035 = vdwg.mxu0
        %1036 = vmatpush.msra.mxu0 %v882
        %1037 = vmatpush.msra.mxu0 %v881
        %1038 = vmatpush.msra.mxu0 %v880
        %1039 = vmatpush.msra.mxu0 %v879
        %1040 = vmatpush.msra.mxu0 %v878
        %1041 = vmatpush.msra.mxu0 %v877
        %1042 = vmatpush.msra.mxu0 %v876
        %1043 = vmatpush.msra.mxu0 %v875
        %1044 = vmatpush.msra.mxu0 %v874
        %1045 = vmatpush.msra.mxu0 %v873
        %1046 = vmatpush.msra.mxu0 %v872
        %1047 = vmatpush.msra.mxu0 %v871
        %1048 = vmatpush.msra.mxu0 %v870
        %1049 = vmatpush.msra.mxu0 %v869
        %1050 = vmatpush.msra.mxu0 %v868
        %1051 = vmatpush.msra.mxu0 %v867
        %1052 = vmatmul.f32.gmra.mxu0 %v786
        %v1053 = vpop.f32.mrf.mxu0
        %v1054 = vadd.f32 %v1013, %v1053
        %1055 = vmatmul.f32.gmra.mxu0 %v787
        %v1056 = vpop.f32.mrf.mxu0
        %v1057 = vadd.f32 %v1016, %v1056
        %1058 = vmatmul.f32.gmra.mxu0 %v788
        %v1059 = vpop.f32.mrf.mxu0
        %v1060 = vadd.f32 %v1019, %v1059
        %1061 = vmatmul.f32.gmra.mxu0 %v789
        %v1062 = vpop.f32.mrf.mxu0
        %v1063 = vadd.f32 %v1022, %v1062
        %1064 = vmatmul.f32.gmra.mxu0 %v790
        %v1065 = vpop.f32.mrf.mxu0
        %v1066 = vadd.f32 %v1025, %v1065
        %1067 = vmatmul.f32.gmra.mxu0 %v791
        %v1068 = vpop.f32.mrf.mxu0
        %v1069 = vadd.f32 %v1028, %v1068
        %1070 = vmatmul.f32.gmra.mxu0 %v792
        %v1071 = vpop.f32.mrf.mxu0
        %v1072 = vadd.f32 %v1031, %v1071
        %1073 = vmatmul.f32.gmra.mxu0 %v793
        %v1074 = vpop.f32.mrf.mxu0
        %v1075 = vadd.f32 %v1034, %v1074
        %1076 = vdwg.mxu0
        %1077 = vmatpush.msra.mxu0 %v898
        %1078 = vmatpush.msra.mxu0 %v897
        %1079 = vmatpush.msra.mxu0 %v896
        %1080 = vmatpush.msra.mxu0 %v895
        %1081 = vmatpush.msra.mxu0 %v894
        %1082 = vmatpush.msra.mxu0 %v893
        %1083 = vmatpush.msra.mxu0 %v892
        %1084 = vmatpush.msra.mxu0 %v891
        %1085 = vmatpush.msra.mxu0 %v890
        %1086 = vmatpush.msra.mxu0 %v889
        %1087 = vmatpush.msra.mxu0 %v888
        %1088 = vmatpush.msra.mxu0 %v887
        %1089 = vmatpush.msra.mxu0 %v886
        %1090 = vmatpush.msra.mxu0 %v885
        %1091 = vmatpush.msra.mxu0 %v884
        %1092 = vmatpush.msra.mxu0 %v883
        %1093 = vmatmul.f32.gmra.mxu0 %v794
        %v1094 = vpop.f32.mrf.mxu0
        %v1095 = vadd.f32 %v1054, %v1094
        %1096 = vmatmul.f32.gmra.mxu0 %v795
        %v1097 = vpop.f32.mrf.mxu0
        %v1098 = vadd.f32 %v1057, %v1097
        %1099 = vmatmul.f32.gmra.mxu0 %v796
        %v1100 = vpop.f32.mrf.mxu0
        %v1101 = vadd.f32 %v1060, %v1100
        %1102 = vmatmul.f32.gmra.mxu0 %v797
        %v1103 = vpop.f32.mrf.mxu0
        %v1104 = vadd.f32 %v1063, %v1103
        %1105 = vmatmul.f32.gmra.mxu0 %v798
        %v1106 = vpop.f32.mrf.mxu0
        %v1107 = vadd.f32 %v1066, %v1106
        %1108 = vmatmul.f32.gmra.mxu0 %v799
        %v1109 = vpop.f32.mrf.mxu0
        %v1110 = vadd.f32 %v1069, %v1109
        %1111 = vmatmul.f32.gmra.mxu0 %v800
        %v1112 = vpop.f32.mrf.mxu0
        %v1113 = vadd.f32 %v1072, %v1112
        %1114 = vmatmul.f32.gmra.mxu0 %v801
        %v1115 = vpop.f32.mrf.mxu0
        %v1116 = vadd.f32 %v1075, %v1115
        %1117 = vdwg.mxu0
        %1118 = vmatpush.msra.mxu0 %v914
        %1119 = vmatpush.msra.mxu0 %v913
        %1120 = vmatpush.msra.mxu0 %v912
        %1121 = vmatpush.msra.mxu0 %v911
        %1122 = vmatpush.msra.mxu0 %v910
        %1123 = vmatpush.msra.mxu0 %v909
        %1124 = vmatpush.msra.mxu0 %v908
        %1125 = vmatpush.msra.mxu0 %v907
        %1126 = vmatpush.msra.mxu0 %v906
        %1127 = vmatpush.msra.mxu0 %v905
        %1128 = vmatpush.msra.mxu0 %v904
        %1129 = vmatpush.msra.mxu0 %v903
        %1130 = vmatpush.msra.mxu0 %v902
        %1131 = vmatpush.msra.mxu0 %v901
        %1132 = vmatpush.msra.mxu0 %v900
        %1133 = vmatpush.msra.mxu0 %v899
        %1134 = vmatmul.f32.gmra.mxu0 %v802
        %v1135 = vpop.f32.mrf.mxu0
        %v1136 = vadd.f32 %v1095, %v1135
        %1137 = vmatmul.f32.gmra.mxu0 %v803
        %v1138 = vpop.f32.mrf.mxu0
        %v1139 = vadd.f32 %v1098, %v1138
        %1140 = vmatmul.f32.gmra.mxu0 %v804
        %v1141 = vpop.f32.mrf.mxu0
        %v1142 = vadd.f32 %v1101, %v1141
        %1143 = vmatmul.f32.gmra.mxu0 %v805
        %v1144 = vpop.f32.mrf.mxu0
        %v1145 = vadd.f32 %v1104, %v1144
        %1146 = vmatmul.f32.gmra.mxu0 %v806
        %v1147 = vpop.f32.mrf.mxu0
        %v1148 = vadd.f32 %v1107, %v1147
        %1149 = vmatmul.f32.gmra.mxu0 %v807
        %v1150 = vpop.f32.mrf.mxu0
        %v1151 = vadd.f32 %v1110, %v1150
        %1152 = vmatmul.f32.gmra.mxu0 %v808
        %v1153 = vpop.f32.mrf.mxu0
        %v1154 = vadd.f32 %v1113, %v1153
        %1155 = vmatmul.f32.gmra.mxu0 %v809
        %v1156 = vpop.f32.mrf.mxu0
        %v1157 = vadd.f32 %v1116, %v1156
        %1158 = vdwg.mxu0
        %1159 = vmatpush.msra.mxu0 %v930
        %1160 = vmatpush.msra.mxu0 %v929
        %1161 = vmatpush.msra.mxu0 %v928
        %1162 = vmatpush.msra.mxu0 %v927
        %1163 = vmatpush.msra.mxu0 %v926
        %1164 = vmatpush.msra.mxu0 %v925
        %1165 = vmatpush.msra.mxu0 %v924
        %1166 = vmatpush.msra.mxu0 %v923
        %1167 = vmatpush.msra.mxu0 %v922
        %1168 = vmatpush.msra.mxu0 %v921
        %1169 = vmatpush.msra.mxu0 %v920
        %1170 = vmatpush.msra.mxu0 %v919
        %1171 = vmatpush.msra.mxu0 %v918
        %1172 = vmatpush.msra.mxu0 %v917
        %1173 = vmatpush.msra.mxu0 %v916
        %1174 = vmatpush.msra.mxu0 %v915
        %1175 = vmatmul.f32.gmra.mxu0 %v810
        %v1176 = vpop.f32.mrf.mxu0
        %v1177 = vadd.f32 %v1136, %v1176
        %1178 = vmatmul.f32.gmra.mxu0 %v811
        %v1179 = vpop.f32.mrf.mxu0
        %v1180 = vadd.f32 %v1139, %v1179
        %1181 = vmatmul.f32.gmra.mxu0 %v812
        %v1182 = vpop.f32.mrf.mxu0
        %v1183 = vadd.f32 %v1142, %v1182
        %1184 = vmatmul.f32.gmra.mxu0 %v813
        %v1185 = vpop.f32.mrf.mxu0
        %v1186 = vadd.f32 %v1145, %v1185
        %1187 = vmatmul.f32.gmra.mxu0 %v814
        %v1188 = vpop.f32.mrf.mxu0
        %v1189 = vadd.f32 %v1148, %v1188
        %1190 = vmatmul.f32.gmra.mxu0 %v815
        %v1191 = vpop.f32.mrf.mxu0
        %v1192 = vadd.f32 %v1151, %v1191
        %1193 = vmatmul.f32.gmra.mxu0 %v816
        %v1194 = vpop.f32.mrf.mxu0
        %v1195 = vadd.f32 %v1154, %v1194
        %1196 = vmatmul.f32.gmra.mxu0 %v817
        %v1197 = vpop.f32.mrf.mxu0
        %v1198 = vadd.f32 %v1157, %v1197
        %1199 = vdwg.mxu0
        %1200 = vmatpush.msra.mxu0 %v946
        %1201 = vmatpush.msra.mxu0 %v945
        %1202 = vmatpush.msra.mxu0 %v944
        %1203 = vmatpush.msra.mxu0 %v943
        %1204 = vmatpush.msra.mxu0 %v942
        %1205 = vmatpush.msra.mxu0 %v941
        %1206 = vmatpush.msra.mxu0 %v940
        %1207 = vmatpush.msra.mxu0 %v939
        %1208 = vmatpush.msra.mxu0 %v938
        %1209 = vmatpush.msra.mxu0 %v937
        %1210 = vmatpush.msra.mxu0 %v936
        %1211 = vmatpush.msra.mxu0 %v935
        %1212 = vmatpush.msra.mxu0 %v934
        %1213 = vmatpush.msra.mxu0 %v933
        %1214 = vmatpush.msra.mxu0 %v932
        %1215 = vmatpush.msra.mxu0 %v931
        %1216 = vmatmul.f32.gmra.mxu0 %v818
        %v1217 = vpop.f32.mrf.mxu0
        %v1218 = vadd.f32 %v1177, %v1217
        %1219 = vmatmul.f32.gmra.mxu0 %v819
        %v1220 = vpop.f32.mrf.mxu0
        %v1221 = vadd.f32 %v1180, %v1220
        %1222 = vmatmul.f32.gmra.mxu0 %v820
        %v1223 = vpop.f32.mrf.mxu0
        %v1224 = vadd.f32 %v1183, %v1223
        %1225 = vmatmul.f32.gmra.mxu0 %v821
        %v1226 = vpop.f32.mrf.mxu0
        %v1227 = vadd.f32 %v1186, %v1226
        %1228 = vmatmul.f32.gmra.mxu0 %v822
        %v1229 = vpop.f32.mrf.mxu0
        %v1230 = vadd.f32 %v1189, %v1229
        %1231 = vmatmul.f32.gmra.mxu0 %v823
        %v1232 = vpop.f32.mrf.mxu0
        %v1233 = vadd.f32 %v1192, %v1232
        %1234 = vmatmul.f32.gmra.mxu0 %v824
        %v1235 = vpop.f32.mrf.mxu0
        %v1236 = vadd.f32 %v1195, %v1235
        %1237 = vmatmul.f32.gmra.mxu0 %v825
        %v1238 = vpop.f32.mrf.mxu0
        %v1239 = vadd.f32 %v1198, %v1238
        %1240 = vdwg.mxu0
        %1241 = vmatpush.msra.mxu0 %v962
        %1242 = vmatpush.msra.mxu0 %v961
        %1243 = vmatpush.msra.mxu0 %v960
        %1244 = vmatpush.msra.mxu0 %v959
        %1245 = vmatpush.msra.mxu0 %v958
        %1246 = vmatpush.msra.mxu0 %v957
        %1247 = vmatpush.msra.mxu0 %v956
        %1248 = vmatpush.msra.mxu0 %v955
        %1249 = vmatpush.msra.mxu0 %v954
        %1250 = vmatpush.msra.mxu0 %v953
        %1251 = vmatpush.msra.mxu0 %v952
        %1252 = vmatpush.msra.mxu0 %v951
        %1253 = vmatpush.msra.mxu0 %v950
        %1254 = vmatpush.msra.mxu0 %v949
        %1255 = vmatpush.msra.mxu0 %v948
        %1256 = vmatpush.msra.mxu0 %v947
        %1257 = vmatmul.f32.gmra.mxu0 %v826
        %v1258 = vpop.f32.mrf.mxu0
        %v1259 = vadd.f32 %v1218, %v1258
        %1260 = vmatmul.f32.gmra.mxu0 %v827
        %v1261 = vpop.f32.mrf.mxu0
        %v1262 = vadd.f32 %v1221, %v1261
        %1263 = vmatmul.f32.gmra.mxu0 %v828
        %v1264 = vpop.f32.mrf.mxu0
        %v1265 = vadd.f32 %v1224, %v1264
        %1266 = vmatmul.f32.gmra.mxu0 %v829
        %v1267 = vpop.f32.mrf.mxu0
        %v1268 = vadd.f32 %v1227, %v1267
        %1269 = vmatmul.f32.gmra.mxu0 %v830
        %v1270 = vpop.f32.mrf.mxu0
        %v1271 = vadd.f32 %v1230, %v1270
        %1272 = vmatmul.f32.gmra.mxu0 %v831
        %v1273 = vpop.f32.mrf.mxu0
        %v1274 = vadd.f32 %v1233, %v1273
        %1275 = vmatmul.f32.gmra.mxu0 %v832
        %v1276 = vpop.f32.mrf.mxu0
        %v1277 = vadd.f32 %v1236, %v1276
        %1278 = vmatmul.f32.gmra.mxu0 %v833
        %v1279 = vpop.f32.mrf.mxu0
        %v1280 = vadd.f32 %v1239, %v1279
        %1281 = vdwg.mxu0
        %1282 = vmatpush.msra.mxu0 %v978
        %1283 = vmatpush.msra.mxu0 %v977
        %1284 = vmatpush.msra.mxu0 %v976
        %1285 = vmatpush.msra.mxu0 %v975
        %1286 = vmatpush.msra.mxu0 %v974
        %1287 = vmatpush.msra.mxu0 %v973
        %1288 = vmatpush.msra.mxu0 %v972
        %1289 = vmatpush.msra.mxu0 %v971
        %1290 = vmatpush.msra.mxu0 %v970
        %1291 = vmatpush.msra.mxu0 %v969
        %1292 = vmatpush.msra.mxu0 %v968
        %1293 = vmatpush.msra.mxu0 %v967
        %1294 = vmatpush.msra.mxu0 %v966
        %1295 = vmatpush.msra.mxu0 %v965
        %1296 = vmatpush.msra.mxu0 %v964
        %1297 = vmatpush.msra.mxu0 %v963
        %1298 = vmatmul.f32.gmra.mxu0 %v834
        %v1299 = vpop.f32.mrf.mxu0
        %v1300 = vadd.f32 %v1259, %v1299
        %1301 = vmatmul.f32.gmra.mxu0 %v835
        %v1302 = vpop.f32.mrf.mxu0
        %v1303 = vadd.f32 %v1262, %v1302
        %1304 = vmatmul.f32.gmra.mxu0 %v836
        %v1305 = vpop.f32.mrf.mxu0
        %v1306 = vadd.f32 %v1265, %v1305
        %1307 = vmatmul.f32.gmra.mxu0 %v837
        %v1308 = vpop.f32.mrf.mxu0
        %v1309 = vadd.f32 %v1268, %v1308
        %1310 = vmatmul.f32.gmra.mxu0 %v838
        %v1311 = vpop.f32.mrf.mxu0
        %v1312 = vadd.f32 %v1271, %v1311
        %1313 = vmatmul.f32.gmra.mxu0 %v839
        %v1314 = vpop.f32.mrf.mxu0
        %v1315 = vadd.f32 %v1274, %v1314
        %1316 = vmatmul.f32.gmra.mxu0 %v840
        %v1317 = vpop.f32.mrf.mxu0
        %v1318 = vadd.f32 %v1277, %v1317
        %1319 = vmatmul.f32.gmra.mxu0 %v841
        %v1320 = vpop.f32.mrf.mxu0
        %v1321 = vadd.f32 %v1280, %v1320
        %1322 = vdwg.mxu0
        %1323 = vmatpush.msra.mxu0 %v994
        %1324 = vmatpush.msra.mxu0 %v993
        %1325 = vmatpush.msra.mxu0 %v992
        %1326 = vmatpush.msra.mxu0 %v991
        %1327 = vmatpush.msra.mxu0 %v990
        %1328 = vmatpush.msra.mxu0 %v989
        %1329 = vmatpush.msra.mxu0 %v988
        %1330 = vmatpush.msra.mxu0 %v987
        %1331 = vmatpush.msra.mxu0 %v986
        %1332 = vmatpush.msra.mxu0 %v985
        %1333 = vmatpush.msra.mxu0 %v984
        %1334 = vmatpush.msra.mxu0 %v983
        %1335 = vmatpush.msra.mxu0 %v982
        %1336 = vmatpush.msra.mxu0 %v981
        %1337 = vmatpush.msra.mxu0 %v980
        %1338 = vmatpush.msra.mxu0 %v979
        %1339 = vmatmul.f32.gmra.mxu0 %v842
        %v1340 = vpop.f32.mrf.mxu0
        %v1341 = vadd.f32 %v1300, %v1340
        %1342 = vmatmul.f32.gmra.mxu0 %v843
        %v1343 = vpop.f32.mrf.mxu0
        %v1344 = vadd.f32 %v1303, %v1343
        %1345 = vmatmul.f32.gmra.mxu0 %v844
        %v1346 = vpop.f32.mrf.mxu0
        %v1347 = vadd.f32 %v1306, %v1346
        %1348 = vmatmul.f32.gmra.mxu0 %v845
        %v1349 = vpop.f32.mrf.mxu0
        %v1350 = vadd.f32 %v1309, %v1349
        %1351 = vmatmul.f32.gmra.mxu0 %v846
        %v1352 = vpop.f32.mrf.mxu0
        %v1353 = vadd.f32 %v1312, %v1352
        %1354 = vmatmul.f32.gmra.mxu0 %v847
        %v1355 = vpop.f32.mrf.mxu0
        %v1356 = vadd.f32 %v1315, %v1355
        %1357 = vmatmul.f32.gmra.mxu0 %v848
        %v1358 = vpop.f32.mrf.mxu0
        %v1359 = vadd.f32 %v1318, %v1358
        %1360 = vmatmul.f32.gmra.mxu0 %v849
        %v1361 = vpop.f32.mrf.mxu0
        %v1362 = vadd.f32 %v1321, %v1361
        %1363 = vdwg.mxu0
        %1364 = vmatpush.msra.mxu0 %v641
        %1365 = vmatpush.msra.mxu0 %v640
        %1366 = vmatpush.msra.mxu0 %v639
        %1367 = vmatpush.msra.mxu0 %v638
        %1368 = vmatpush.msra.mxu0 %v637
        %1369 = vmatpush.msra.mxu0 %v636
        %1370 = vmatpush.msra.mxu0 %v635
        %1371 = vmatpush.msra.mxu0 %v634
        %1372 = vmatpush.msra.mxu0 %v633
        %1373 = vmatpush.msra.mxu0 %v632
        %1374 = vmatpush.msra.mxu0 %v631
        %1375 = vmatpush.msra.mxu0 %v630
        %1376 = vmatpush.msra.mxu0 %v629
        %1377 = vmatpush.msra.mxu0 %v628
        %1378 = vmatpush.msra.mxu0 %v627
        %1379 = vmatpush.msra.mxu0 %v626
        %1380 = vmatmul.f32.gmra.mxu0 %v553
        %v1381 = vpop.f32.mrf.mxu0
        %v1382 = vadd.f32 %v1341, %v1381
        %1383 = vmatmul.f32.gmra.mxu0 %v554
        %v1384 = vpop.f32.mrf.mxu0
        %v1385 = vadd.f32 %v1344, %v1384
        %1386 = vmatmul.f32.gmra.mxu0 %v555
        %v1387 = vpop.f32.mrf.mxu0
        %v1388 = vadd.f32 %v1347, %v1387
        %1389 = vmatmul.f32.gmra.mxu0 %v556
        %v1390 = vpop.f32.mrf.mxu0
        %v1391 = vadd.f32 %v1350, %v1390
        %1392 = vmatmul.f32.gmra.mxu0 %v557
        %v1393 = vpop.f32.mrf.mxu0
        %v1394 = vadd.f32 %v1353, %v1393
        %1395 = vmatmul.f32.gmra.mxu0 %v558
        %v1396 = vpop.f32.mrf.mxu0
        %v1397 = vadd.f32 %v1356, %v1396
        %1398 = vmatmul.f32.gmra.mxu0 %v559
        %v1399 = vpop.f32.mrf.mxu0
        %v1400 = vadd.f32 %v1359, %v1399
        %1401 = vmatmul.f32.gmra.mxu0 %v560
        %v1402 = vpop.f32.mrf.mxu0
        %v1403 = vadd.f32 %v1362, %v1402
        %1404 = vdwg.mxu0
        %1405 = vmatpush.msra.mxu0 %v657
        %1406 = vmatpush.msra.mxu0 %v656
        %1407 = vmatpush.msra.mxu0 %v655
        %1408 = vmatpush.msra.mxu0 %v654
        %1409 = vmatpush.msra.mxu0 %v653
        %1410 = vmatpush.msra.mxu0 %v652
        %1411 = vmatpush.msra.mxu0 %v651
        %1412 = vmatpush.msra.mxu0 %v650
        %1413 = vmatpush.msra.mxu0 %v649
        %1414 = vmatpush.msra.mxu0 %v648
        %1415 = vmatpush.msra.mxu0 %v647
        %1416 = vmatpush.msra.mxu0 %v646
        %1417 = vmatpush.msra.mxu0 %v645
        %1418 = vmatpush.msra.mxu0 %v644
        %1419 = vmatpush.msra.mxu0 %v643
        %1420 = vmatpush.msra.mxu0 %v642
        %1421 = vmatmul.f32.gmra.mxu0 %v561
        %v1422 = vpop.f32.mrf.mxu0
        %v1423 = vadd.f32 %v1382, %v1422
        %1424 = vmatmul.f32.gmra.mxu0 %v562
        %v1425 = vpop.f32.mrf.mxu0
        %v1426 = vadd.f32 %v1385, %v1425
        %1427 = vmatmul.f32.gmra.mxu0 %v563
        %v1428 = vpop.f32.mrf.mxu0
        %v1429 = vadd.f32 %v1388, %v1428
        %1430 = vmatmul.f32.gmra.mxu0 %v564
        %v1431 = vpop.f32.mrf.mxu0
        %v1432 = vadd.f32 %v1391, %v1431
        %1433 = vmatmul.f32.gmra.mxu0 %v565
        %v1434 = vpop.f32.mrf.mxu0
        %v1435 = vadd.f32 %v1394, %v1434
        %1436 = vmatmul.f32.gmra.mxu0 %v566
        %v1437 = vpop.f32.mrf.mxu0
        %v1438 = vadd.f32 %v1397, %v1437
        %1439 = vmatmul.f32.gmra.mxu0 %v567
        %v1440 = vpop.f32.mrf.mxu0
        %v1441 = vadd.f32 %v1400, %v1440
        %1442 = vmatmul.f32.gmra.mxu0 %v568
        %v1443 = vpop.f32.mrf.mxu0
        %v1444 = vadd.f32 %v1403, %v1443
        %1445 = vdwg.mxu0
        %1446 = vmatpush.msra.mxu0 %v673
        %1447 = vmatpush.msra.mxu0 %v672
        %1448 = vmatpush.msra.mxu0 %v671
        %1449 = vmatpush.msra.mxu0 %v670
        %1450 = vmatpush.msra.mxu0 %v669
        %1451 = vmatpush.msra.mxu0 %v668
        %1452 = vmatpush.msra.mxu0 %v667
        %1453 = vmatpush.msra.mxu0 %v666
        %1454 = vmatpush.msra.mxu0 %v665
        %1455 = vmatpush.msra.mxu0 %v664
        %1456 = vmatpush.msra.mxu0 %v663
        %1457 = vmatpush.msra.mxu0 %v662
        %1458 = vmatpush.msra.mxu0 %v661
        %1459 = vmatpush.msra.mxu0 %v660
        %1460 = vmatpush.msra.mxu0 %v659
        %1461 = vmatpush.msra.mxu0 %v658
        %1462 = vmatmul.f32.gmra.mxu0 %v569
        %v1463 = vpop.f32.mrf.mxu0
        %v1464 = vadd.f32 %v1423, %v1463
        %1465 = vmatmul.f32.gmra.mxu0 %v570
        %v1466 = vpop.f32.mrf.mxu0
        %v1467 = vadd.f32 %v1426, %v1466
        %1468 = vmatmul.f32.gmra.mxu0 %v571
        %v1469 = vpop.f32.mrf.mxu0
        %v1470 = vadd.f32 %v1429, %v1469
        %1471 = vmatmul.f32.gmra.mxu0 %v572
        %v1472 = vpop.f32.mrf.mxu0
        %v1473 = vadd.f32 %v1432, %v1472
        %1474 = vmatmul.f32.gmra.mxu0 %v573
        %v1475 = vpop.f32.mrf.mxu0
        %v1476 = vadd.f32 %v1435, %v1475
        %1477 = vmatmul.f32.gmra.mxu0 %v574
        %v1478 = vpop.f32.mrf.mxu0
        %v1479 = vadd.f32 %v1438, %v1478
        %1480 = vmatmul.f32.gmra.mxu0 %v575
        %v1481 = vpop.f32.mrf.mxu0
        %v1482 = vadd.f32 %v1441, %v1481
        %1483 = vmatmul.f32.gmra.mxu0 %v576
        %v1484 = vpop.f32.mrf.mxu0
        %v1485 = vadd.f32 %v1444, %v1484
        %1486 = vdwg.mxu0
        %1487 = vmatpush.msra.mxu0 %v689
        %1488 = vmatpush.msra.mxu0 %v688
        %1489 = vmatpush.msra.mxu0 %v687
        %1490 = vmatpush.msra.mxu0 %v686
        %1491 = vmatpush.msra.mxu0 %v685
        %1492 = vmatpush.msra.mxu0 %v684
        %1493 = vmatpush.msra.mxu0 %v683
        %1494 = vmatpush.msra.mxu0 %v682
        %1495 = vmatpush.msra.mxu0 %v681
        %1496 = vmatpush.msra.mxu0 %v680
        %1497 = vmatpush.msra.mxu0 %v679
        %1498 = vmatpush.msra.mxu0 %v678
        %1499 = vmatpush.msra.mxu0 %v677
        %1500 = vmatpush.msra.mxu0 %v676
        %1501 = vmatpush.msra.mxu0 %v675
        %1502 = vmatpush.msra.mxu0 %v674
        %1503 = vmatmul.f32.gmra.mxu0 %v577
        %v1504 = vpop.f32.mrf.mxu0
        %v1505 = vadd.f32 %v1464, %v1504
        %1506 = vmatmul.f32.gmra.mxu0 %v578
        %v1507 = vpop.f32.mrf.mxu0
        %v1508 = vadd.f32 %v1467, %v1507
        %1509 = vmatmul.f32.gmra.mxu0 %v579
        %v1510 = vpop.f32.mrf.mxu0
        %v1511 = vadd.f32 %v1470, %v1510
        %1512 = vmatmul.f32.gmra.mxu0 %v580
        %v1513 = vpop.f32.mrf.mxu0
        %v1514 = vadd.f32 %v1473, %v1513
        %1515 = vmatmul.f32.gmra.mxu0 %v581
        %v1516 = vpop.f32.mrf.mxu0
        %v1517 = vadd.f32 %v1476, %v1516
        %1518 = vmatmul.f32.gmra.mxu0 %v582
        %v1519 = vpop.f32.mrf.mxu0
        %v1520 = vadd.f32 %v1479, %v1519
        %1521 = vmatmul.f32.gmra.mxu0 %v583
        %v1522 = vpop.f32.mrf.mxu0
        %v1523 = vadd.f32 %v1482, %v1522
        %1524 = vmatmul.f32.gmra.mxu0 %v584
        %v1525 = vpop.f32.mrf.mxu0
        %v1526 = vadd.f32 %v1485, %v1525
        %1527 = vdwg.mxu0
        %1528 = vmatpush.msra.mxu0 %v705
        %1529 = vmatpush.msra.mxu0 %v704
        %1530 = vmatpush.msra.mxu0 %v703
        %1531 = vmatpush.msra.mxu0 %v702
        %1532 = vmatpush.msra.mxu0 %v701
        %1533 = vmatpush.msra.mxu0 %v700
        %1534 = vmatpush.msra.mxu0 %v699
        %1535 = vmatpush.msra.mxu0 %v698
        %1536 = vmatpush.msra.mxu0 %v697
        %1537 = vmatpush.msra.mxu0 %v696
        %1538 = vmatpush.msra.mxu0 %v695
        %1539 = vmatpush.msra.mxu0 %v694
        %1540 = vmatpush.msra.mxu0 %v693
        %1541 = vmatpush.msra.mxu0 %v692
        %1542 = vmatpush.msra.mxu0 %v691
        %1543 = vmatpush.msra.mxu0 %v690
        %1544 = vmatmul.f32.gmra.mxu0 %v585
        %v1545 = vpop.f32.mrf.mxu0
        %v1546 = vadd.f32 %v1505, %v1545
        %1547 = vmatmul.f32.gmra.mxu0 %v586
        %v1548 = vpop.f32.mrf.mxu0
        %v1549 = vadd.f32 %v1508, %v1548
        %1550 = vmatmul.f32.gmra.mxu0 %v587
        %v1551 = vpop.f32.mrf.mxu0
        %v1552 = vadd.f32 %v1511, %v1551
        %1553 = vmatmul.f32.gmra.mxu0 %v588
        %v1554 = vpop.f32.mrf.mxu0
        %v1555 = vadd.f32 %v1514, %v1554
        %1556 = vmatmul.f32.gmra.mxu0 %v589
        %v1557 = vpop.f32.mrf.mxu0
        %v1558 = vadd.f32 %v1517, %v1557
        %1559 = vmatmul.f32.gmra.mxu0 %v590
        %v1560 = vpop.f32.mrf.mxu0
        %v1561 = vadd.f32 %v1520, %v1560
        %1562 = vmatmul.f32.gmra.mxu0 %v591
        %v1563 = vpop.f32.mrf.mxu0
        %v1564 = vadd.f32 %v1523, %v1563
        %1565 = vmatmul.f32.gmra.mxu0 %v592
        %v1566 = vpop.f32.mrf.mxu0
        %v1567 = vadd.f32 %v1526, %v1566
        %1568 = vdwg.mxu0
        %1569 = vmatpush.msra.mxu0 %v721
        %1570 = vmatpush.msra.mxu0 %v720
        %1571 = vmatpush.msra.mxu0 %v719
        %1572 = vmatpush.msra.mxu0 %v718
        %1573 = vmatpush.msra.mxu0 %v717
        %1574 = vmatpush.msra.mxu0 %v716
        %1575 = vmatpush.msra.mxu0 %v715
        %1576 = vmatpush.msra.mxu0 %v714
        %1577 = vmatpush.msra.mxu0 %v713
        %1578 = vmatpush.msra.mxu0 %v712
        %1579 = vmatpush.msra.mxu0 %v711
        %1580 = vmatpush.msra.mxu0 %v710
        %1581 = vmatpush.msra.mxu0 %v709
        %1582 = vmatpush.msra.mxu0 %v708
        %1583 = vmatpush.msra.mxu0 %v707
        %1584 = vmatpush.msra.mxu0 %v706
        %1585 = vmatmul.f32.gmra.mxu0 %v593
        %v1586 = vpop.f32.mrf.mxu0
        %v1587 = vadd.f32 %v1546, %v1586
        %1588 = vmatmul.f32.gmra.mxu0 %v594
        %v1589 = vpop.f32.mrf.mxu0
        %v1590 = vadd.f32 %v1549, %v1589
        %1591 = vmatmul.f32.gmra.mxu0 %v595
        %v1592 = vpop.f32.mrf.mxu0
        %v1593 = vadd.f32 %v1552, %v1592
        %1594 = vmatmul.f32.gmra.mxu0 %v596
        %v1595 = vpop.f32.mrf.mxu0
        %v1596 = vadd.f32 %v1555, %v1595
        %1597 = vmatmul.f32.gmra.mxu0 %v597
        %v1598 = vpop.f32.mrf.mxu0
        %v1599 = vadd.f32 %v1558, %v1598
        %1600 = vmatmul.f32.gmra.mxu0 %v598
        %v1601 = vpop.f32.mrf.mxu0
        %v1602 = vadd.f32 %v1561, %v1601
        %1603 = vmatmul.f32.gmra.mxu0 %v599
        %v1604 = vpop.f32.mrf.mxu0
        %v1605 = vadd.f32 %v1564, %v1604
        %1606 = vmatmul.f32.gmra.mxu0 %v600
        %v1607 = vpop.f32.mrf.mxu0
        %v1608 = vadd.f32 %v1567, %v1607
        %1609 = vdwg.mxu0
        %1610 = vmatpush.msra.mxu0 %v737
        %1611 = vmatpush.msra.mxu0 %v736
        %1612 = vmatpush.msra.mxu0 %v735
        %1613 = vmatpush.msra.mxu0 %v734
        %1614 = vmatpush.msra.mxu0 %v733
        %1615 = vmatpush.msra.mxu0 %v732
        %1616 = vmatpush.msra.mxu0 %v731
        %1617 = vmatpush.msra.mxu0 %v730
        %1618 = vmatpush.msra.mxu0 %v729
        %1619 = vmatpush.msra.mxu0 %v728
        %1620 = vmatpush.msra.mxu0 %v727
        %1621 = vmatpush.msra.mxu0 %v726
        %1622 = vmatpush.msra.mxu0 %v725
        %1623 = vmatpush.msra.mxu0 %v724
        %1624 = vmatpush.msra.mxu0 %v723
        %1625 = vmatpush.msra.mxu0 %v722
        %1626 = vmatmul.f32.gmra.mxu0 %v602
        %v1627 = vpop.f32.mrf.mxu0
        %v1628 = vadd.f32 %v1587, %v1627
        %1629 = vmatmul.f32.gmra.mxu0 %v603
        %v1630 = vpop.f32.mrf.mxu0
        %v1631 = vadd.f32 %v1590, %v1630
        %1632 = vmatmul.f32.gmra.mxu0 %v604
        %v1633 = vpop.f32.mrf.mxu0
        %v1634 = vadd.f32 %v1593, %v1633
        %1635 = vmatmul.f32.gmra.mxu0 %v605
        %v1636 = vpop.f32.mrf.mxu0
        %v1637 = vadd.f32 %v1596, %v1636
        %1638 = vmatmul.f32.gmra.mxu0 %v606
        %v1639 = vpop.f32.mrf.mxu0
        %v1640 = vadd.f32 %v1599, %v1639
        %1641 = vmatmul.f32.gmra.mxu0 %v607
        %v1642 = vpop.f32.mrf.mxu0
        %v1643 = vadd.f32 %v1602, %v1642
        %1644 = vmatmul.f32.gmra.mxu0 %v608
        %v1645 = vpop.f32.mrf.mxu0
        %v1646 = vadd.f32 %v1605, %v1645
        %1647 = vmatmul.f32.gmra.mxu0 %v609
        %v1648 = vpop.f32.mrf.mxu0
        %v1649 = vadd.f32 %v1608, %v1648
        %1650 = vdwg.mxu0
        %1651 = vmatpush.msra.mxu0 %v753
        %1652 = vmatpush.msra.mxu0 %v752
        %1653 = vmatpush.msra.mxu0 %v751
        %1654 = vmatpush.msra.mxu0 %v750
        %1655 = vmatpush.msra.mxu0 %v749
        %1656 = vmatpush.msra.mxu0 %v748
        %1657 = vmatpush.msra.mxu0 %v747
        %1658 = vmatpush.msra.mxu0 %v746
        %1659 = vmatpush.msra.mxu0 %v745
        %1660 = vmatpush.msra.mxu0 %v744
        %1661 = vmatpush.msra.mxu0 %v743
        %1662 = vmatpush.msra.mxu0 %v742
        %1663 = vmatpush.msra.mxu0 %v741
        %1664 = vmatpush.msra.mxu0 %v740
        %1665 = vmatpush.msra.mxu0 %v739
        %1666 = vmatpush.msra.mxu0 %v738
        %1667 = vmatmul.f32.gmra.mxu0 %v610
        %v1668 = vpop.f32.mrf.mxu0
        %v1669 = vadd.f32 %v1628, %v1668
        %1670 = vmatmul.f32.gmra.mxu0 %v611
        %v1671 = vpop.f32.mrf.mxu0
        %v1672 = vadd.f32 %v1631, %v1671
        %1673 = vmatmul.f32.gmra.mxu0 %v612
        %v1674 = vpop.f32.mrf.mxu0
        %v1675 = vadd.f32 %v1634, %v1674
        %1676 = vmatmul.f32.gmra.mxu0 %v613
        %v1677 = vpop.f32.mrf.mxu0
        %v1678 = vadd.f32 %v1637, %v1677
        %1679 = vmatmul.f32.gmra.mxu0 %v614
        %v1680 = vpop.f32.mrf.mxu0
        %v1681 = vadd.f32 %v1640, %v1680
        %1682 = vmatmul.f32.gmra.mxu0 %v615
        %v1683 = vpop.f32.mrf.mxu0
        %v1684 = vadd.f32 %v1643, %v1683
        %1685 = vmatmul.f32.gmra.mxu0 %v616
        %v1686 = vpop.f32.mrf.mxu0
        %v1687 = vadd.f32 %v1646, %v1686
        %1688 = vmatmul.f32.gmra.mxu0 %v617
        %v1689 = vpop.f32.mrf.mxu0
        %v1690 = vadd.f32 %v1649, %v1689
        %1691 = vdwg.mxu0
        %1692 = vmatpush.msra.mxu0 %v769
        %1693 = vmatpush.msra.mxu0 %v768
        %1694 = vmatpush.msra.mxu0 %v767
        %1695 = vmatpush.msra.mxu0 %v766
        %1696 = vmatpush.msra.mxu0 %v765
        %1697 = vmatpush.msra.mxu0 %v764
        %1698 = vmatpush.msra.mxu0 %v763
        %1699 = vmatpush.msra.mxu0 %v762
        %1700 = vmatpush.msra.mxu0 %v761
        %1701 = vmatpush.msra.mxu0 %v760
        %1702 = vmatpush.msra.mxu0 %v759
        %1703 = vmatpush.msra.mxu0 %v758
        %1704 = vmatpush.msra.mxu0 %v757
        %1705 = vmatpush.msra.mxu0 %v756
        %1706 = vmatpush.msra.mxu0 %v755
        %1707 = vmatpush.msra.mxu0 %v754
        %1708 = vmatmul.f32.gmra.mxu0 %v618
        %v1709 = vpop.f32.mrf.mxu0
        %v1710 = vadd.f32 %v1669, %v1709
        %1711 = vmatmul.f32.gmra.mxu0 %v619
        %v1712 = vpop.f32.mrf.mxu0
        %v1713 = vadd.f32 %v1672, %v1712
        %1714 = vmatmul.f32.gmra.mxu0 %v620
        %v1715 = vpop.f32.mrf.mxu0
        %v1716 = vadd.f32 %v1675, %v1715
        %1717 = vmatmul.f32.gmra.mxu0 %v621
        %v1718 = vpop.f32.mrf.mxu0
        %v1719 = vadd.f32 %v1678, %v1718
        %1720 = vmatmul.f32.gmra.mxu0 %v622
        %v1721 = vpop.f32.mrf.mxu0
        %v1722 = vadd.f32 %v1681, %v1721
        %1723 = vmatmul.f32.gmra.mxu0 %v623
        %v1724 = vpop.f32.mrf.mxu0
        %v1725 = vadd.f32 %v1684, %v1724
        %1726 = vmatmul.f32.gmra.mxu0 %v624
        %v1727 = vpop.f32.mrf.mxu0
        %v1728 = vadd.f32 %v1687, %v1727
        %1729 = vmatmul.f32.gmra.mxu0 %v625
        %v1730 = vpop.f32.mrf.mxu0
        %v1731 = vadd.f32 %v1690, %v1730
        %1732 = vdwg.mxu0
        %1733 = vst [vmem:[%s544 + $0x1] sm:$0xff] %v536
        %1734 = vst [vmem:[%s544 + $0x11] sm:$0xff] %v537
        %1735 = vst [vmem:[%s544 + $0x21] sm:$0xff] %v538
        %1736 = vst [vmem:[%s544 + $0x31] sm:$0xff] %v539
        %1737 = vst [vmem:[%s544 + $0x41] sm:$0xff] %v540
        %1738 = vst [vmem:[%s544 + $0x51] sm:$0xff] %v541
        %1739 = vst [vmem:[%s544 + $0x61] sm:$0xff] %v542
        %1740 = vst [vmem:[%s544 + $0x71] sm:$0xff] %v543
        %v1741 = vld [vmem:[#allocation2] sm:$0xff]
        %v1742 = vld [vmem:[#allocation2 + $0x10] sm:$0xff]
        %v1743 = vld [vmem:[#allocation2 + $0x20] sm:$0xff]
        %v1744 = vld [vmem:[#allocation2 + $0x30] sm:$0xff]
        %v1745 = vld [vmem:[#allocation2 + $0x40] sm:$0xff]
        %v1746 = vld [vmem:[#allocation2 + $0x50] sm:$0xff]
        %v1747 = vld [vmem:[#allocation2 + $0x60] sm:$0xff]
        %v1748 = vld [vmem:[#allocation2 + $0x70] sm:$0xff]
        %v1749 = vld [vmem:[#allocation2 + $0x1] sm:$0xff]
        %v1750 = vld [vmem:[#allocation2 + $0x11] sm:$0xff]
        %v1751 = vld [vmem:[#allocation2 + $0x21] sm:$0xff]
        %v1752 = vld [vmem:[#allocation2 + $0x31] sm:$0xff]
        %v1753 = vld [vmem:[#allocation2 + $0x41] sm:$0xff]
        %v1754 = vld [vmem:[#allocation2 + $0x51] sm:$0xff]
        %v1755 = vld [vmem:[#allocation2 + $0x61] sm:$0xff]
        %v1756 = vld [vmem:[#allocation2 + $0x71] sm:$0xff]
        %v1757 = vld [vmem:[#allocation2 + $0x2] sm:$0xff]
        %v1758 = vld [vmem:[#allocation2 + $0x12] sm:$0xff]
        %v1759 = vld [vmem:[#allocation2 + $0x22] sm:$0xff]
        %v1760 = vld [vmem:[#allocation2 + $0x32] sm:$0xff]
        %v1761 = vld [vmem:[#allocation2 + $0x42] sm:$0xff]
        %v1762 = vld [vmem:[#allocation2 + $0x52] sm:$0xff]
        %v1763 = vld [vmem:[#allocation2 + $0x62] sm:$0xff]
        %v1764 = vld [vmem:[#allocation2 + $0x72] sm:$0xff]
        %v1765 = vld [vmem:[%s544] sm:$0xff]
        %v1766 = vld [vmem:[%s544 + $0x10] sm:$0xff]
        %v1767 = vld [vmem:[%s544 + $0x20] sm:$0xff]
        %v1768 = vld [vmem:[%s544 + $0x30] sm:$0xff]
        %v1769 = vld [vmem:[%s544 + $0x40] sm:$0xff]
        %v1770 = vld [vmem:[%s544 + $0x50] sm:$0xff]
        %v1771 = vld [vmem:[%s544 + $0x60] sm:$0xff]
        %v1772 = vld [vmem:[%s544 + $0x70] sm:$0xff]
        %v1773 = vld [vmem:[%s544 + $0x1] sm:$0xff]
        %v1774 = vld [vmem:[%s544 + $0x11] sm:$0xff]
        %v1775 = vld [vmem:[%s544 + $0x21] sm:$0xff]
        %v1776 = vld [vmem:[%s544 + $0x31] sm:$0xff]
        %v1777 = vld [vmem:[%s544 + $0x41] sm:$0xff]
        %v1778 = vld [vmem:[%s544 + $0x51] sm:$0xff]
        %v1779 = vld [vmem:[%s544 + $0x61] sm:$0xff]
        %v1780 = vld [vmem:[%s544 + $0x71] sm:$0xff]
        %v1781 = vld [vmem:[%s544 + $0x2] sm:$0xff]
        %v1782 = vld [vmem:[%s544 + $0x12] sm:$0xff]
        %v1783 = vld [vmem:[%s544 + $0x22] sm:$0xff]
        %v1784 = vld [vmem:[%s544 + $0x32] sm:$0xff]
        %v1785 = vld [vmem:[%s544 + $0x42] sm:$0xff]
        %v1786 = vld [vmem:[%s544 + $0x52] sm:$0xff]
        %v1787 = vld [vmem:[%s544 + $0x62] sm:$0xff]
        %v1788 = vld [vmem:[%s544 + $0x72] sm:$0xff]
        %v1789 = vld [vmem:[%s601] sm:$0xff]
        %v1790 = vld [vmem:[%s601 + $0x10] sm:$0xff]
        %v1791 = vld [vmem:[%s601 + $0x20] sm:$0xff]
        %v1792 = vld [vmem:[%s601 + $0x30] sm:$0xff]
        %v1793 = vld [vmem:[%s601 + $0x40] sm:$0xff]
        %v1794 = vld [vmem:[%s601 + $0x50] sm:$0xff]
        %v1795 = vld [vmem:[%s601 + $0x60] sm:$0xff]
        %v1796 = vld [vmem:[%s601 + $0x70] sm:$0xff]
        %v1797 = vld [vmem:[%s601 + $0x1] sm:$0xff]
        %v1798 = vld [vmem:[%s601 + $0x11] sm:$0xff]
        %v1799 = vld [vmem:[%s601 + $0x21] sm:$0xff]
        %v1800 = vld [vmem:[%s601 + $0x31] sm:$0xff]
        %v1801 = vld [vmem:[%s601 + $0x41] sm:$0xff]
        %v1802 = vld [vmem:[%s601 + $0x51] sm:$0xff]
        %v1803 = vld [vmem:[%s601 + $0x61] sm:$0xff]
        %v1804 = vld [vmem:[%s601 + $0x71] sm:$0xff]
        %v1805 = vld [vmem:[%s601 + $0x2] sm:$0xff]
        %v1806 = vld [vmem:[%s601 + $0x12] sm:$0xff]
        %v1807 = vld [vmem:[%s601 + $0x22] sm:$0xff]
        %v1808 = vld [vmem:[%s601 + $0x32] sm:$0xff]
        %v1809 = vld [vmem:[%s601 + $0x42] sm:$0xff]
        %v1810 = vld [vmem:[%s601 + $0x52] sm:$0xff]
        %v1811 = vld [vmem:[%s601 + $0x62] sm:$0xff]
        %v1812 = vld [vmem:[%s601 + $0x72] sm:$0xff]
        %s1813 = scalar_lea.vmem %s3, 2304
        %v1814 = vld [vmem:[%s1813] sm:$0xff]
        %v1815 = vld [vmem:[%s1813 + $0x8] sm:$0xff]
        %v1816 = vld [vmem:[%s1813 + $0x10] sm:$0xff]
        %v1817 = vld [vmem:[%s1813 + $0x18] sm:$0xff]
        %v1818 = vld [vmem:[%s1813 + $0x20] sm:$0xff]
        %v1819 = vld [vmem:[%s1813 + $0x28] sm:$0xff]
        %v1820 = vld [vmem:[%s1813 + $0x30] sm:$0xff]
        %v1821 = vld [vmem:[%s1813 + $0x38] sm:$0xff]
        %v1822 = vld [vmem:[%s1813 + $0x40] sm:$0xff]
        %v1823 = vld [vmem:[%s1813 + $0x48] sm:$0xff]
        %v1824 = vld [vmem:[%s1813 + $0x50] sm:$0xff]
        %v1825 = vld [vmem:[%s1813 + $0x58] sm:$0xff]
        %v1826 = vld [vmem:[%s1813 + $0x60] sm:$0xff]
        %v1827 = vld [vmem:[%s1813 + $0x68] sm:$0xff]
        %v1828 = vld [vmem:[%s1813 + $0x70] sm:$0xff]
        %v1829 = vld [vmem:[%s1813 + $0x78] sm:$0xff]
        %v1830 = vld [vmem:[%s1813 + $0x80] sm:$0xff]
        %v1831 = vld [vmem:[%s1813 + $0x88] sm:$0xff]
        %v1832 = vld [vmem:[%s1813 + $0x90] sm:$0xff]
        %v1833 = vld [vmem:[%s1813 + $0x98] sm:$0xff]
        %v1834 = vld [vmem:[%s1813 + $0xa0] sm:$0xff]
        %v1835 = vld [vmem:[%s1813 + $0xa8] sm:$0xff]
        %v1836 = vld [vmem:[%s1813 + $0xb0] sm:$0xff]
        %v1837 = vld [vmem:[%s1813 + $0xb8] sm:$0xff]
        %v1838 = vld [vmem:[%s1813 + $0xc0] sm:$0xff]
        %v1839 = vld [vmem:[%s1813 + $0xc8] sm:$0xff]
        %v1840 = vld [vmem:[%s1813 + $0xd0] sm:$0xff]
        %v1841 = vld [vmem:[%s1813 + $0xd8] sm:$0xff]
        %v1842 = vld [vmem:[%s1813 + $0xe0] sm:$0xff]
        %v1843 = vld [vmem:[%s1813 + $0xe8] sm:$0xff]
        %v1844 = vld [vmem:[%s1813 + $0xf0] sm:$0xff]
        %v1845 = vld [vmem:[%s1813 + $0xf8] sm:$0xff]
        %v1846 = vld [vmem:[%s1813 + $0x100] sm:$0xff]
        %v1847 = vld [vmem:[%s1813 + $0x108] sm:$0xff]
        %v1848 = vld [vmem:[%s1813 + $0x110] sm:$0xff]
        %v1849 = vld [vmem:[%s1813 + $0x118] sm:$0xff]
        %v1850 = vld [vmem:[%s1813 + $0x120] sm:$0xff]
        %v1851 = vld [vmem:[%s1813 + $0x128] sm:$0xff]
        %v1852 = vld [vmem:[%s1813 + $0x130] sm:$0xff]
        %v1853 = vld [vmem:[%s1813 + $0x138] sm:$0xff]
        %v1854 = vld [vmem:[%s1813 + $0x140] sm:$0xff]
        %v1855 = vld [vmem:[%s1813 + $0x148] sm:$0xff]
        %v1856 = vld [vmem:[%s1813 + $0x150] sm:$0xff]
        %v1857 = vld [vmem:[%s1813 + $0x158] sm:$0xff]
        %v1858 = vld [vmem:[%s1813 + $0x160] sm:$0xff]
        %v1859 = vld [vmem:[%s1813 + $0x168] sm:$0xff]
        %v1860 = vld [vmem:[%s1813 + $0x170] sm:$0xff]
        %v1861 = vld [vmem:[%s1813 + $0x178] sm:$0xff]
        %v1862 = vld [vmem:[%s1813 + $0x180] sm:$0xff]
        %v1863 = vld [vmem:[%s1813 + $0x188] sm:$0xff]
        %v1864 = vld [vmem:[%s1813 + $0x190] sm:$0xff]
        %v1865 = vld [vmem:[%s1813 + $0x198] sm:$0xff]
        %v1866 = vld [vmem:[%s1813 + $0x1a0] sm:$0xff]
        %v1867 = vld [vmem:[%s1813 + $0x1a8] sm:$0xff]
        %v1868 = vld [vmem:[%s1813 + $0x1b0] sm:$0xff]
        %v1869 = vld [vmem:[%s1813 + $0x1b8] sm:$0xff]
        %v1870 = vld [vmem:[%s1813 + $0x1c0] sm:$0xff]
        %v1871 = vld [vmem:[%s1813 + $0x1c8] sm:$0xff]
        %v1872 = vld [vmem:[%s1813 + $0x1d0] sm:$0xff]
        %v1873 = vld [vmem:[%s1813 + $0x1d8] sm:$0xff]
        %v1874 = vld [vmem:[%s1813 + $0x1e0] sm:$0xff]
        %v1875 = vld [vmem:[%s1813 + $0x1e8] sm:$0xff]
        %v1876 = vld [vmem:[%s1813 + $0x1f0] sm:$0xff]
        %v1877 = vld [vmem:[%s1813 + $0x1f8] sm:$0xff]
        %v1878 = vld [vmem:[%s1813 + $0x200] sm:$0xff]
        %v1879 = vld [vmem:[%s1813 + $0x208] sm:$0xff]
        %v1880 = vld [vmem:[%s1813 + $0x210] sm:$0xff]
        %v1881 = vld [vmem:[%s1813 + $0x218] sm:$0xff]
        %v1882 = vld [vmem:[%s1813 + $0x220] sm:$0xff]
        %v1883 = vld [vmem:[%s1813 + $0x228] sm:$0xff]
        %v1884 = vld [vmem:[%s1813 + $0x230] sm:$0xff]
        %v1885 = vld [vmem:[%s1813 + $0x238] sm:$0xff]
        %v1886 = vld [vmem:[%s1813 + $0x240] sm:$0xff]
        %v1887 = vld [vmem:[%s1813 + $0x248] sm:$0xff]
        %v1888 = vld [vmem:[%s1813 + $0x250] sm:$0xff]
        %v1889 = vld [vmem:[%s1813 + $0x258] sm:$0xff]
        %v1890 = vld [vmem:[%s1813 + $0x260] sm:$0xff]
        %v1891 = vld [vmem:[%s1813 + $0x268] sm:$0xff]
        %v1892 = vld [vmem:[%s1813 + $0x270] sm:$0xff]
        %v1893 = vld [vmem:[%s1813 + $0x278] sm:$0xff]
        %v1894 = vld [vmem:[%s1813 + $0x280] sm:$0xff]
        %v1895 = vld [vmem:[%s1813 + $0x288] sm:$0xff]
        %v1896 = vld [vmem:[%s1813 + $0x290] sm:$0xff]
        %v1897 = vld [vmem:[%s1813 + $0x298] sm:$0xff]
        %v1898 = vld [vmem:[%s1813 + $0x2a0] sm:$0xff]
        %v1899 = vld [vmem:[%s1813 + $0x2a8] sm:$0xff]
        %v1900 = vld [vmem:[%s1813 + $0x2b0] sm:$0xff]
        %v1901 = vld [vmem:[%s1813 + $0x2b8] sm:$0xff]
        %v1902 = vld [vmem:[%s1813 + $0x2c0] sm:$0xff]
        %v1903 = vld [vmem:[%s1813 + $0x2c8] sm:$0xff]
        %v1904 = vld [vmem:[%s1813 + $0x2d0] sm:$0xff]
        %v1905 = vld [vmem:[%s1813 + $0x2d8] sm:$0xff]
        %v1906 = vld [vmem:[%s1813 + $0x2e0] sm:$0xff]
        %v1907 = vld [vmem:[%s1813 + $0x2e8] sm:$0xff]
        %v1908 = vld [vmem:[%s1813 + $0x2f0] sm:$0xff]
        %v1909 = vld [vmem:[%s1813 + $0x2f8] sm:$0xff]
        %v1910 = vld [vmem:[%s1813 + $0x300] sm:$0xff]
        %v1911 = vld [vmem:[%s1813 + $0x308] sm:$0xff]
        %v1912 = vld [vmem:[%s1813 + $0x310] sm:$0xff]
        %v1913 = vld [vmem:[%s1813 + $0x318] sm:$0xff]
        %v1914 = vld [vmem:[%s1813 + $0x320] sm:$0xff]
        %v1915 = vld [vmem:[%s1813 + $0x328] sm:$0xff]
        %v1916 = vld [vmem:[%s1813 + $0x330] sm:$0xff]
        %v1917 = vld [vmem:[%s1813 + $0x338] sm:$0xff]
        %v1918 = vld [vmem:[%s1813 + $0x340] sm:$0xff]
        %v1919 = vld [vmem:[%s1813 + $0x348] sm:$0xff]
        %v1920 = vld [vmem:[%s1813 + $0x350] sm:$0xff]
        %v1921 = vld [vmem:[%s1813 + $0x358] sm:$0xff]
        %v1922 = vld [vmem:[%s1813 + $0x360] sm:$0xff]
        %v1923 = vld [vmem:[%s1813 + $0x368] sm:$0xff]
        %v1924 = vld [vmem:[%s1813 + $0x370] sm:$0xff]
        %v1925 = vld [vmem:[%s1813 + $0x378] sm:$0xff]
        %v1926 = vld [vmem:[%s1813 + $0x380] sm:$0xff]
        %v1927 = vld [vmem:[%s1813 + $0x388] sm:$0xff]
        %v1928 = vld [vmem:[%s1813 + $0x390] sm:$0xff]
        %v1929 = vld [vmem:[%s1813 + $0x398] sm:$0xff]
        %v1930 = vld [vmem:[%s1813 + $0x3a0] sm:$0xff]
        %v1931 = vld [vmem:[%s1813 + $0x3a8] sm:$0xff]
        %v1932 = vld [vmem:[%s1813 + $0x3b0] sm:$0xff]
        %v1933 = vld [vmem:[%s1813 + $0x3b8] sm:$0xff]
        %v1934 = vld [vmem:[%s1813 + $0x3c0] sm:$0xff]
        %v1935 = vld [vmem:[%s1813 + $0x3c8] sm:$0xff]
        %v1936 = vld [vmem:[%s1813 + $0x3d0] sm:$0xff]
        %v1937 = vld [vmem:[%s1813 + $0x3d8] sm:$0xff]
        %v1938 = vld [vmem:[%s1813 + $0x3e0] sm:$0xff]
        %v1939 = vld [vmem:[%s1813 + $0x3e8] sm:$0xff]
        %v1940 = vld [vmem:[%s1813 + $0x3f0] sm:$0xff]
        %v1941 = vld [vmem:[%s1813 + $0x3f8] sm:$0xff]
        %v1942 = vld [vmem:[%s1813 + $0x400] sm:$0xff]
        %v1943 = vld [vmem:[%s1813 + $0x408] sm:$0xff]
        %v1944 = vld [vmem:[%s1813 + $0x410] sm:$0xff]
        %v1945 = vld [vmem:[%s1813 + $0x418] sm:$0xff]
        %v1946 = vld [vmem:[%s1813 + $0x420] sm:$0xff]
        %v1947 = vld [vmem:[%s1813 + $0x428] sm:$0xff]
        %v1948 = vld [vmem:[%s1813 + $0x430] sm:$0xff]
        %v1949 = vld [vmem:[%s1813 + $0x438] sm:$0xff]
        %v1950 = vld [vmem:[%s1813 + $0x440] sm:$0xff]
        %v1951 = vld [vmem:[%s1813 + $0x448] sm:$0xff]
        %v1952 = vld [vmem:[%s1813 + $0x450] sm:$0xff]
        %v1953 = vld [vmem:[%s1813 + $0x458] sm:$0xff]
        %v1954 = vld [vmem:[%s1813 + $0x460] sm:$0xff]
        %v1955 = vld [vmem:[%s1813 + $0x468] sm:$0xff]
        %v1956 = vld [vmem:[%s1813 + $0x470] sm:$0xff]
        %v1957 = vld [vmem:[%s1813 + $0x478] sm:$0xff]
        %1958 = vmatpush.msra.mxu0 %v1829
        %1959 = vmatpush.msra.mxu0 %v1828
        %1960 = vmatpush.msra.mxu0 %v1827
        %1961 = vmatpush.msra.mxu0 %v1826
        %1962 = vmatpush.msra.mxu0 %v1825
        %1963 = vmatpush.msra.mxu0 %v1824
        %1964 = vmatpush.msra.mxu0 %v1823
        %1965 = vmatpush.msra.mxu0 %v1822
        %1966 = vmatpush.msra.mxu0 %v1821
        %1967 = vmatpush.msra.mxu0 %v1820
        %1968 = vmatpush.msra.mxu0 %v1819
        %1969 = vmatpush.msra.mxu0 %v1818
        %1970 = vmatpush.msra.mxu0 %v1817
        %1971 = vmatpush.msra.mxu0 %v1816
        %1972 = vmatpush.msra.mxu0 %v1815
        %1973 = vmatpush.msra.mxu0 %v1814
        %1974 = vmatmul.f32.gmra.mxu0 %v1741
        %v1975 = vpop.f32.mrf.mxu0
        %v1976 = vadd.f32 0.0, %v1975
        %1977 = vmatmul.f32.gmra.mxu0 %v1742
        %v1978 = vpop.f32.mrf.mxu0
        %v1979 = vadd.f32 0.0, %v1978
        %1980 = vmatmul.f32.gmra.mxu0 %v1743
        %v1981 = vpop.f32.mrf.mxu0
        %v1982 = vadd.f32 0.0, %v1981
        %1983 = vmatmul.f32.gmra.mxu0 %v1744
        %v1984 = vpop.f32.mrf.mxu0
        %v1985 = vadd.f32 0.0, %v1984
        %1986 = vmatmul.f32.gmra.mxu0 %v1745
        %v1987 = vpop.f32.mrf.mxu0
        %v1988 = vadd.f32 0.0, %v1987
        %1989 = vmatmul.f32.gmra.mxu0 %v1746
        %v1990 = vpop.f32.mrf.mxu0
        %v1991 = vadd.f32 0.0, %v1990
        %1992 = vmatmul.f32.gmra.mxu0 %v1747
        %v1993 = vpop.f32.mrf.mxu0
        %v1994 = vadd.f32 0.0, %v1993
        %1995 = vmatmul.f32.gmra.mxu0 %v1748
        %v1996 = vpop.f32.mrf.mxu0
        %v1997 = vadd.f32 0.0, %v1996
        %1998 = vdwg.mxu0
        %1999 = vmatpush.msra.mxu0 %v1845
        %2000 = vmatpush.msra.mxu0 %v1844
        %2001 = vmatpush.msra.mxu0 %v1843
        %2002 = vmatpush.msra.mxu0 %v1842
        %2003 = vmatpush.msra.mxu0 %v1841
        %2004 = vmatpush.msra.mxu0 %v1840
        %2005 = vmatpush.msra.mxu0 %v1839
        %2006 = vmatpush.msra.mxu0 %v1838
        %2007 = vmatpush.msra.mxu0 %v1837
        %2008 = vmatpush.msra.mxu0 %v1836
        %2009 = vmatpush.msra.mxu0 %v1835
        %2010 = vmatpush.msra.mxu0 %v1834
        %2011 = vmatpush.msra.mxu0 %v1833
        %2012 = vmatpush.msra.mxu0 %v1832
        %2013 = vmatpush.msra.mxu0 %v1831
        %2014 = vmatpush.msra.mxu0 %v1830
        %2015 = vmatmul.f32.gmra.mxu0 %v1749
        %v2016 = vpop.f32.mrf.mxu0
        %v2017 = vadd.f32 %v1976, %v2016
        %2018 = vmatmul.f32.gmra.mxu0 %v1750
        %v2019 = vpop.f32.mrf.mxu0
        %v2020 = vadd.f32 %v1979, %v2019
        %2021 = vmatmul.f32.gmra.mxu0 %v1751
        %v2022 = vpop.f32.mrf.mxu0
        %v2023 = vadd.f32 %v1982, %v2022
        %2024 = vmatmul.f32.gmra.mxu0 %v1752
        %v2025 = vpop.f32.mrf.mxu0
        %v2026 = vadd.f32 %v1985, %v2025
        %2027 = vmatmul.f32.gmra.mxu0 %v1753
        %v2028 = vpop.f32.mrf.mxu0
        %v2029 = vadd.f32 %v1988, %v2028
        %2030 = vmatmul.f32.gmra.mxu0 %v1754
        %v2031 = vpop.f32.mrf.mxu0
        %v2032 = vadd.f32 %v1991, %v2031
        %2033 = vmatmul.f32.gmra.mxu0 %v1755
        %v2034 = vpop.f32.mrf.mxu0
        %v2035 = vadd.f32 %v1994, %v2034
        %2036 = vmatmul.f32.gmra.mxu0 %v1756
        %v2037 = vpop.f32.mrf.mxu0
        %v2038 = vadd.f32 %v1997, %v2037
        %2039 = vdwg.mxu0
        %2040 = vmatpush.msra.mxu0 %v1861
        %2041 = vmatpush.msra.mxu0 %v1860
        %2042 = vmatpush.msra.mxu0 %v1859
        %2043 = vmatpush.msra.mxu0 %v1858
        %2044 = vmatpush.msra.mxu0 %v1857
        %2045 = vmatpush.msra.mxu0 %v1856
        %2046 = vmatpush.msra.mxu0 %v1855
        %2047 = vmatpush.msra.mxu0 %v1854
        %2048 = vmatpush.msra.mxu0 %v1853
        %2049 = vmatpush.msra.mxu0 %v1852
        %2050 = vmatpush.msra.mxu0 %v1851
        %2051 = vmatpush.msra.mxu0 %v1850
        %2052 = vmatpush.msra.mxu0 %v1849
        %2053 = vmatpush.msra.mxu0 %v1848
        %2054 = vmatpush.msra.mxu0 %v1847
        %2055 = vmatpush.msra.mxu0 %v1846
        %2056 = vmatmul.f32.gmra.mxu0 %v1757
        %v2057 = vpop.f32.mrf.mxu0
        %v2058 = vadd.f32 %v2017, %v2057
        %2059 = vmatmul.f32.gmra.mxu0 %v1758
        %v2060 = vpop.f32.mrf.mxu0
        %v2061 = vadd.f32 %v2020, %v2060
        %2062 = vmatmul.f32.gmra.mxu0 %v1759
        %v2063 = vpop.f32.mrf.mxu0
        %v2064 = vadd.f32 %v2023, %v2063
        %2065 = vmatmul.f32.gmra.mxu0 %v1760
        %v2066 = vpop.f32.mrf.mxu0
        %v2067 = vadd.f32 %v2026, %v2066
        %2068 = vmatmul.f32.gmra.mxu0 %v1761
        %v2069 = vpop.f32.mrf.mxu0
        %v2070 = vadd.f32 %v2029, %v2069
        %2071 = vmatmul.f32.gmra.mxu0 %v1762
        %v2072 = vpop.f32.mrf.mxu0
        %v2073 = vadd.f32 %v2032, %v2072
        %2074 = vmatmul.f32.gmra.mxu0 %v1763
        %v2075 = vpop.f32.mrf.mxu0
        %v2076 = vadd.f32 %v2035, %v2075
        %2077 = vmatmul.f32.gmra.mxu0 %v1764
        %v2078 = vpop.f32.mrf.mxu0
        %v2079 = vadd.f32 %v2038, %v2078
        %2080 = vdwg.mxu0
        %2081 = vmatpush.msra.mxu0 %v1877
        %2082 = vmatpush.msra.mxu0 %v1876
        %2083 = vmatpush.msra.mxu0 %v1875
        %2084 = vmatpush.msra.mxu0 %v1874
        %2085 = vmatpush.msra.mxu0 %v1873
        %2086 = vmatpush.msra.mxu0 %v1872
        %2087 = vmatpush.msra.mxu0 %v1871
        %2088 = vmatpush.msra.mxu0 %v1870
        %2089 = vmatpush.msra.mxu0 %v1869
        %2090 = vmatpush.msra.mxu0 %v1868
        %2091 = vmatpush.msra.mxu0 %v1867
        %2092 = vmatpush.msra.mxu0 %v1866
        %2093 = vmatpush.msra.mxu0 %v1865
        %2094 = vmatpush.msra.mxu0 %v1864
        %2095 = vmatpush.msra.mxu0 %v1863
        %2096 = vmatpush.msra.mxu0 %v1862
        %2097 = vmatmul.f32.gmra.mxu0 %v1765
        %v2098 = vpop.f32.mrf.mxu0
        %v2099 = vadd.f32 %v2058, %v2098
        %2100 = vmatmul.f32.gmra.mxu0 %v1766
        %v2101 = vpop.f32.mrf.mxu0
        %v2102 = vadd.f32 %v2061, %v2101
        %2103 = vmatmul.f32.gmra.mxu0 %v1767
        %v2104 = vpop.f32.mrf.mxu0
        %v2105 = vadd.f32 %v2064, %v2104
        %2106 = vmatmul.f32.gmra.mxu0 %v1768
        %v2107 = vpop.f32.mrf.mxu0
        %v2108 = vadd.f32 %v2067, %v2107
        %2109 = vmatmul.f32.gmra.mxu0 %v1769
        %v2110 = vpop.f32.mrf.mxu0
        %v2111 = vadd.f32 %v2070, %v2110
        %2112 = vmatmul.f32.gmra.mxu0 %v1770
        %v2113 = vpop.f32.mrf.mxu0
        %v2114 = vadd.f32 %v2073, %v2113
        %2115 = vmatmul.f32.gmra.mxu0 %v1771
        %v2116 = vpop.f32.mrf.mxu0
        %v2117 = vadd.f32 %v2076, %v2116
        %2118 = vmatmul.f32.gmra.mxu0 %v1772
        %v2119 = vpop.f32.mrf.mxu0
        %v2120 = vadd.f32 %v2079, %v2119
        %2121 = vdwg.mxu0
        %2122 = vmatpush.msra.mxu0 %v1893
        %2123 = vmatpush.msra.mxu0 %v1892
        %2124 = vmatpush.msra.mxu0 %v1891
        %2125 = vmatpush.msra.mxu0 %v1890
        %2126 = vmatpush.msra.mxu0 %v1889
        %2127 = vmatpush.msra.mxu0 %v1888
        %2128 = vmatpush.msra.mxu0 %v1887
        %2129 = vmatpush.msra.mxu0 %v1886
        %2130 = vmatpush.msra.mxu0 %v1885
        %2131 = vmatpush.msra.mxu0 %v1884
        %2132 = vmatpush.msra.mxu0 %v1883
        %2133 = vmatpush.msra.mxu0 %v1882
        %2134 = vmatpush.msra.mxu0 %v1881
        %2135 = vmatpush.msra.mxu0 %v1880
        %2136 = vmatpush.msra.mxu0 %v1879
        %2137 = vmatpush.msra.mxu0 %v1878
        %2138 = vmatmul.f32.gmra.mxu0 %v1773
        %v2139 = vpop.f32.mrf.mxu0
        %v2140 = vadd.f32 %v2099, %v2139
        %2141 = vmatmul.f32.gmra.mxu0 %v1774
        %v2142 = vpop.f32.mrf.mxu0
        %v2143 = vadd.f32 %v2102, %v2142
        %2144 = vmatmul.f32.gmra.mxu0 %v1775
        %v2145 = vpop.f32.mrf.mxu0
        %v2146 = vadd.f32 %v2105, %v2145
        %2147 = vmatmul.f32.gmra.mxu0 %v1776
        %v2148 = vpop.f32.mrf.mxu0
        %v2149 = vadd.f32 %v2108, %v2148
        %2150 = vmatmul.f32.gmra.mxu0 %v1777
        %v2151 = vpop.f32.mrf.mxu0
        %v2152 = vadd.f32 %v2111, %v2151
        %2153 = vmatmul.f32.gmra.mxu0 %v1778
        %v2154 = vpop.f32.mrf.mxu0
        %v2155 = vadd.f32 %v2114, %v2154
        %2156 = vmatmul.f32.gmra.mxu0 %v1779
        %v2157 = vpop.f32.mrf.mxu0
        %v2158 = vadd.f32 %v2117, %v2157
        %2159 = vmatmul.f32.gmra.mxu0 %v1780
        %v2160 = vpop.f32.mrf.mxu0
        %v2161 = vadd.f32 %v2120, %v2160
        %2162 = vdwg.mxu0
        %2163 = vmatpush.msra.mxu0 %v1909
        %2164 = vmatpush.msra.mxu0 %v1908
        %2165 = vmatpush.msra.mxu0 %v1907
        %2166 = vmatpush.msra.mxu0 %v1906
        %2167 = vmatpush.msra.mxu0 %v1905
        %2168 = vmatpush.msra.mxu0 %v1904
        %2169 = vmatpush.msra.mxu0 %v1903
        %2170 = vmatpush.msra.mxu0 %v1902
        %2171 = vmatpush.msra.mxu0 %v1901
        %2172 = vmatpush.msra.mxu0 %v1900
        %2173 = vmatpush.msra.mxu0 %v1899
        %2174 = vmatpush.msra.mxu0 %v1898
        %2175 = vmatpush.msra.mxu0 %v1897
        %2176 = vmatpush.msra.mxu0 %v1896
        %2177 = vmatpush.msra.mxu0 %v1895
        %2178 = vmatpush.msra.mxu0 %v1894
        %2179 = vmatmul.f32.gmra.mxu0 %v1781
        %v2180 = vpop.f32.mrf.mxu0
        %v2181 = vadd.f32 %v2140, %v2180
        %2182 = vmatmul.f32.gmra.mxu0 %v1782
        %v2183 = vpop.f32.mrf.mxu0
        %v2184 = vadd.f32 %v2143, %v2183
        %2185 = vmatmul.f32.gmra.mxu0 %v1783
        %v2186 = vpop.f32.mrf.mxu0
        %v2187 = vadd.f32 %v2146, %v2186
        %2188 = vmatmul.f32.gmra.mxu0 %v1784
        %v2189 = vpop.f32.mrf.mxu0
        %v2190 = vadd.f32 %v2149, %v2189
        %2191 = vmatmul.f32.gmra.mxu0 %v1785
        %v2192 = vpop.f32.mrf.mxu0
        %v2193 = vadd.f32 %v2152, %v2192
        %2194 = vmatmul.f32.gmra.mxu0 %v1786
        %v2195 = vpop.f32.mrf.mxu0
        %v2196 = vadd.f32 %v2155, %v2195
        %2197 = vmatmul.f32.gmra.mxu0 %v1787
        %v2198 = vpop.f32.mrf.mxu0
        %v2199 = vadd.f32 %v2158, %v2198
        %2200 = vmatmul.f32.gmra.mxu0 %v1788
        %v2201 = vpop.f32.mrf.mxu0
        %v2202 = vadd.f32 %v2161, %v2201
        %2203 = vdwg.mxu0
        %2204 = vmatpush.msra.mxu0 %v1925
        %2205 = vmatpush.msra.mxu0 %v1924
        %2206 = vmatpush.msra.mxu0 %v1923
        %2207 = vmatpush.msra.mxu0 %v1922
        %2208 = vmatpush.msra.mxu0 %v1921
        %2209 = vmatpush.msra.mxu0 %v1920
        %2210 = vmatpush.msra.mxu0 %v1919
        %2211 = vmatpush.msra.mxu0 %v1918
        %2212 = vmatpush.msra.mxu0 %v1917
        %2213 = vmatpush.msra.mxu0 %v1916
        %2214 = vmatpush.msra.mxu0 %v1915
        %2215 = vmatpush.msra.mxu0 %v1914
        %2216 = vmatpush.msra.mxu0 %v1913
        %2217 = vmatpush.msra.mxu0 %v1912
        %2218 = vmatpush.msra.mxu0 %v1911
        %2219 = vmatpush.msra.mxu0 %v1910
        %2220 = vmatmul.f32.gmra.mxu0 %v1789
        %v2221 = vpop.f32.mrf.mxu0
        %v2222 = vadd.f32 %v2181, %v2221
        %2223 = vmatmul.f32.gmra.mxu0 %v1790
        %v2224 = vpop.f32.mrf.mxu0
        %v2225 = vadd.f32 %v2184, %v2224
        %2226 = vmatmul.f32.gmra.mxu0 %v1791
        %v2227 = vpop.f32.mrf.mxu0
        %v2228 = vadd.f32 %v2187, %v2227
        %2229 = vmatmul.f32.gmra.mxu0 %v1792
        %v2230 = vpop.f32.mrf.mxu0
        %v2231 = vadd.f32 %v2190, %v2230
        %2232 = vmatmul.f32.gmra.mxu0 %v1793
        %v2233 = vpop.f32.mrf.mxu0
        %v2234 = vadd.f32 %v2193, %v2233
        %2235 = vmatmul.f32.gmra.mxu0 %v1794
        %v2236 = vpop.f32.mrf.mxu0
        %v2237 = vadd.f32 %v2196, %v2236
        %2238 = vmatmul.f32.gmra.mxu0 %v1795
        %v2239 = vpop.f32.mrf.mxu0
        %v2240 = vadd.f32 %v2199, %v2239
        %2241 = vmatmul.f32.gmra.mxu0 %v1796
        %v2242 = vpop.f32.mrf.mxu0
        %v2243 = vadd.f32 %v2202, %v2242
        %2244 = vdwg.mxu0
        %2245 = vmatpush.msra.mxu0 %v1941
        %2246 = vmatpush.msra.mxu0 %v1940
        %2247 = vmatpush.msra.mxu0 %v1939
        %2248 = vmatpush.msra.mxu0 %v1938
        %2249 = vmatpush.msra.mxu0 %v1937
        %2250 = vmatpush.msra.mxu0 %v1936
        %2251 = vmatpush.msra.mxu0 %v1935
        %2252 = vmatpush.msra.mxu0 %v1934
        %2253 = vmatpush.msra.mxu0 %v1933
        %2254 = vmatpush.msra.mxu0 %v1932
        %2255 = vmatpush.msra.mxu0 %v1931
        %2256 = vmatpush.msra.mxu0 %v1930
        %2257 = vmatpush.msra.mxu0 %v1929
        %2258 = vmatpush.msra.mxu0 %v1928
        %2259 = vmatpush.msra.mxu0 %v1927
        %2260 = vmatpush.msra.mxu0 %v1926
        %2261 = vmatmul.f32.gmra.mxu0 %v1797
        %v2262 = vpop.f32.mrf.mxu0
        %v2263 = vadd.f32 %v2222, %v2262
        %2264 = vmatmul.f32.gmra.mxu0 %v1798
        %v2265 = vpop.f32.mrf.mxu0
        %v2266 = vadd.f32 %v2225, %v2265
        %2267 = vmatmul.f32.gmra.mxu0 %v1799
        %v2268 = vpop.f32.mrf.mxu0
        %v2269 = vadd.f32 %v2228, %v2268
        %2270 = vmatmul.f32.gmra.mxu0 %v1800
        %v2271 = vpop.f32.mrf.mxu0
        %v2272 = vadd.f32 %v2231, %v2271
        %2273 = vmatmul.f32.gmra.mxu0 %v1801
        %v2274 = vpop.f32.mrf.mxu0
        %v2275 = vadd.f32 %v2234, %v2274
        %2276 = vmatmul.f32.gmra.mxu0 %v1802
        %v2277 = vpop.f32.mrf.mxu0
        %v2278 = vadd.f32 %v2237, %v2277
        %2279 = vmatmul.f32.gmra.mxu0 %v1803
        %v2280 = vpop.f32.mrf.mxu0
        %v2281 = vadd.f32 %v2240, %v2280
        %2282 = vmatmul.f32.gmra.mxu0 %v1804
        %v2283 = vpop.f32.mrf.mxu0
        %v2284 = vadd.f32 %v2243, %v2283
        %2285 = vdwg.mxu0
        %2286 = vmatpush.msra.mxu0 %v1957
        %2287 = vmatpush.msra.mxu0 %v1956
        %2288 = vmatpush.msra.mxu0 %v1955
        %2289 = vmatpush.msra.mxu0 %v1954
        %2290 = vmatpush.msra.mxu0 %v1953
        %2291 = vmatpush.msra.mxu0 %v1952
        %2292 = vmatpush.msra.mxu0 %v1951
        %2293 = vmatpush.msra.mxu0 %v1950
        %2294 = vmatpush.msra.mxu0 %v1949
        %2295 = vmatpush.msra.mxu0 %v1948
        %2296 = vmatpush.msra.mxu0 %v1947
        %2297 = vmatpush.msra.mxu0 %v1946
        %2298 = vmatpush.msra.mxu0 %v1945
        %2299 = vmatpush.msra.mxu0 %v1944
        %2300 = vmatpush.msra.mxu0 %v1943
        %2301 = vmatpush.msra.mxu0 %v1942
        %2302 = vmatmul.f32.gmra.mxu0 %v1805
        %v2303 = vpop.f32.mrf.mxu0
        %v2304 = vadd.f32 %v2263, %v2303
        %2305 = vmatmul.f32.gmra.mxu0 %v1806
        %v2306 = vpop.f32.mrf.mxu0
        %v2307 = vadd.f32 %v2266, %v2306
        %2308 = vmatmul.f32.gmra.mxu0 %v1807
        %v2309 = vpop.f32.mrf.mxu0
        %v2310 = vadd.f32 %v2269, %v2309
        %2311 = vmatmul.f32.gmra.mxu0 %v1808
        %v2312 = vpop.f32.mrf.mxu0
        %v2313 = vadd.f32 %v2272, %v2312
        %2314 = vmatmul.f32.gmra.mxu0 %v1809
        %v2315 = vpop.f32.mrf.mxu0
        %v2316 = vadd.f32 %v2275, %v2315
        %2317 = vmatmul.f32.gmra.mxu0 %v1810
        %v2318 = vpop.f32.mrf.mxu0
        %v2319 = vadd.f32 %v2278, %v2318
        %2320 = vmatmul.f32.gmra.mxu0 %v1811
        %v2321 = vpop.f32.mrf.mxu0
        %v2322 = vadd.f32 %v2281, %v2321
        %2323 = vmatmul.f32.gmra.mxu0 %v1812
        %v2324 = vpop.f32.mrf.mxu0
        %v2325 = vadd.f32 %v2284, %v2324
        %2326 = vdwg.mxu0
        %v2327 = vadd.f32 %v1710, %v2304
        %v2328 = vadd.f32 %v1713, %v2307
        %v2329 = vadd.f32 %v1716, %v2310
        %v2330 = vadd.f32 %v1719, %v2313
        %v2331 = vadd.f32 %v1722, %v2316
        %v2332 = vadd.f32 %v1725, %v2319
        %v2333 = vadd.f32 %v1728, %v2322
        %v2334 = vadd.f32 %v1731, %v2325
        %v2335 = vld [vmem:[%s4] sm:$0x1]
        %v2337 = vperm.slane %v2335, 0
        %v2339 = vadd.f32 %v2327, %v2337
        %v2340 = vadd.f32 %v2328, %v2337
        %v2341 = vadd.f32 %v2329, %v2337
        %v2342 = vadd.f32 %v2330, %v2337
        %v2343 = vadd.f32 %v2331, %v2337
        %v2344 = vadd.f32 %v2332, %v2337
        %v2345 = vadd.f32 %v2333, %v2337
        %v2346 = vadd.f32 %v2334, %v2337
        %v2347 = vmax.f32 %v2339, 0.0
        %v2348 = vmax.f32 %v2340, 0.0
        %v2349 = vmax.f32 %v2341, 0.0
        %v2350 = vmax.f32 %v2342, 0.0
        %v2351 = vmax.f32 %v2343, 0.0
        %v2352 = vmax.f32 %v2344, 0.0
        %v2353 = vmax.f32 %v2345, 0.0
        %v2354 = vmax.f32 %v2346, 0.0
        %v2355 = vld [vmem:[%s5] sm:$0xff]
        %v2356 = vld [vmem:[%s5 + $0x8] sm:$0xff]
        %v2357 = vld [vmem:[%s5 + $0x10] sm:$0xff]
        %v2358 = vld [vmem:[%s5 + $0x18] sm:$0xff]
        %v2359 = vld [vmem:[%s5 + $0x20] sm:$0xff]
        %v2360 = vld [vmem:[%s5 + $0x28] sm:$0xff]
        %v2361 = vld [vmem:[%s5 + $0x30] sm:$0xff]
        %v2362 = vld [vmem:[%s5 + $0x38] sm:$0xff]
        %v2363 = vld [vmem:[%s5 + $0x40] sm:$0xff]
        %v2364 = vld [vmem:[%s5 + $0x48] sm:$0xff]
        %v2365 = vld [vmem:[%s5 + $0x50] sm:$0xff]
        %v2366 = vld [vmem:[%s5 + $0x58] sm:$0xff]
        %v2367 = vld [vmem:[%s5 + $0x60] sm:$0xff]
        %v2368 = vld [vmem:[%s5 + $0x68] sm:$0xff]
        %v2369 = vld [vmem:[%s5 + $0x70] sm:$0xff]
        %v2370 = vld [vmem:[%s5 + $0x78] sm:$0xff]
        %v2371 = vld [vmem:[%s5 + $0x80] sm:$0xff]
        %v2372 = vld [vmem:[%s5 + $0x88] sm:$0xff]
        %v2373 = vld [vmem:[%s5 + $0x90] sm:$0xff]
        %v2374 = vld [vmem:[%s5 + $0x98] sm:$0xff]
        %v2375 = vld [vmem:[%s5 + $0xa0] sm:$0xff]
        %v2376 = vld [vmem:[%s5 + $0xa8] sm:$0xff]
        %v2377 = vld [vmem:[%s5 + $0xb0] sm:$0xff]
        %v2378 = vld [vmem:[%s5 + $0xb8] sm:$0xff]
        %v2379 = vld [vmem:[%s5 + $0xc0] sm:$0xff]
        %v2380 = vld [vmem:[%s5 + $0xc8] sm:$0xff]
        %v2381 = vld [vmem:[%s5 + $0xd0] sm:$0xff]
        %v2382 = vld [vmem:[%s5 + $0xd8] sm:$0xff]
        %v2383 = vld [vmem:[%s5 + $0xe0] sm:$0xff]
        %v2384 = vld [vmem:[%s5 + $0xe8] sm:$0xff]
        %v2385 = vld [vmem:[%s5 + $0xf0] sm:$0xff]
        %v2386 = vld [vmem:[%s5 + $0xf8] sm:$0xff]
        %v2387 = vld [vmem:[%s5 + $0x100] sm:$0xff]
        %v2388 = vld [vmem:[%s5 + $0x108] sm:$0xff]
        %v2389 = vld [vmem:[%s5 + $0x110] sm:$0xff]
        %v2390 = vld [vmem:[%s5 + $0x118] sm:$0xff]
        %v2391 = vld [vmem:[%s5 + $0x120] sm:$0xff]
        %v2392 = vld [vmem:[%s5 + $0x128] sm:$0xff]
        %v2393 = vld [vmem:[%s5 + $0x130] sm:$0xff]
        %v2394 = vld [vmem:[%s5 + $0x138] sm:$0xff]
        %v2395 = vld [vmem:[%s5 + $0x140] sm:$0xff]
        %v2396 = vld [vmem:[%s5 + $0x148] sm:$0xff]
        %v2397 = vld [vmem:[%s5 + $0x150] sm:$0xff]
        %v2398 = vld [vmem:[%s5 + $0x158] sm:$0xff]
        %v2399 = vld [vmem:[%s5 + $0x160] sm:$0xff]
        %v2400 = vld [vmem:[%s5 + $0x168] sm:$0xff]
        %v2401 = vld [vmem:[%s5 + $0x170] sm:$0xff]
        %v2402 = vld [vmem:[%s5 + $0x178] sm:$0xff]
        %v2403 = vld [vmem:[%s5 + $0x180] sm:$0xff]
        %v2404 = vld [vmem:[%s5 + $0x188] sm:$0xff]
        %v2405 = vld [vmem:[%s5 + $0x190] sm:$0xff]
        %v2406 = vld [vmem:[%s5 + $0x198] sm:$0xff]
        %v2407 = vld [vmem:[%s5 + $0x1a0] sm:$0xff]
        %v2408 = vld [vmem:[%s5 + $0x1a8] sm:$0xff]
        %v2409 = vld [vmem:[%s5 + $0x1b0] sm:$0xff]
        %v2410 = vld [vmem:[%s5 + $0x1b8] sm:$0xff]
        %v2411 = vld [vmem:[%s5 + $0x1c0] sm:$0xff]
        %v2412 = vld [vmem:[%s5 + $0x1c8] sm:$0xff]
        %v2413 = vld [vmem:[%s5 + $0x1d0] sm:$0xff]
        %v2414 = vld [vmem:[%s5 + $0x1d8] sm:$0xff]
        %v2415 = vld [vmem:[%s5 + $0x1e0] sm:$0xff]
        %v2416 = vld [vmem:[%s5 + $0x1e8] sm:$0xff]
        %v2417 = vld [vmem:[%s5 + $0x1f0] sm:$0xff]
        %v2418 = vld [vmem:[%s5 + $0x1f8] sm:$0xff]
        %v2419 = vld [vmem:[%s6] sm:$0xf]
        %v2421 = vperm.slane %v2419, 0
        %v2422 = vperm.slane %v2419, 1
        %v2423 = vperm.slane %v2419, 2
        %v2424 = vperm.slane %v2419, 3
        %2429 = vmatpush.msra.mxu0 %v2415
        %2430 = vmatpush.msra.mxu0 %v2411
        %2431 = vmatpush.msra.mxu0 %v2407
        %2432 = vmatpush.msra.mxu0 %v2403
        %2433 = vmatpush.msra.mxu0 %v2399
        %2434 = vmatpush.msra.mxu0 %v2395
        %2435 = vmatpush.msra.mxu0 %v2391
        %2436 = vmatpush.msra.mxu0 %v2387
        %2437 = vmatpush.msra.mxu0 %v2383
        %2438 = vmatpush.msra.mxu0 %v2379
        %2439 = vmatpush.msra.mxu0 %v2375
        %2440 = vmatpush.msra.mxu0 %v2371
        %2441 = vmatpush.msra.mxu0 %v2367
        %2442 = vmatpush.msra.mxu0 %v2363
        %2443 = vmatpush.msra.mxu0 %v2359
        %2444 = vmatpush.msra.mxu0 %v2355
        %2445 = vmatmul.f32.gmra.mxu0 %v2347
        %v2446 = vpop.f32.mrf.mxu0
        %v2447 = vadd.f32 %v2421, %v2446
        %2448 = vmatmul.f32.gmra.mxu0 %v2348
        %v2449 = vpop.f32.mrf.mxu0
        %v2450 = vadd.f32 %v2421, %v2449
        %2451 = vmatmul.f32.gmra.mxu0 %v2349
        %v2452 = vpop.f32.mrf.mxu0
        %v2453 = vadd.f32 %v2421, %v2452
        %2454 = vmatmul.f32.gmra.mxu0 %v2350
        %v2455 = vpop.f32.mrf.mxu0
        %v2456 = vadd.f32 %v2421, %v2455
        %2457 = vmatmul.f32.gmra.mxu0 %v2351
        %v2458 = vpop.f32.mrf.mxu0
        %v2459 = vadd.f32 %v2421, %v2458
        %2460 = vmatmul.f32.gmra.mxu0 %v2352
        %v2461 = vpop.f32.mrf.mxu0
        %v2462 = vadd.f32 %v2421, %v2461
        %2463 = vmatmul.f32.gmra.mxu0 %v2353
        %v2464 = vpop.f32.mrf.mxu0
        %v2465 = vadd.f32 %v2421, %v2464
        %2466 = vmatmul.f32.gmra.mxu0 %v2354
        %v2467 = vpop.f32.mrf.mxu0
        %v2468 = vadd.f32 %v2421, %v2467
        %2469 = vdwg.mxu0
        %2470 = vmatpush.msra.mxu0 %v2416
        %2471 = vmatpush.msra.mxu0 %v2412
        %2472 = vmatpush.msra.mxu0 %v2408
        %2473 = vmatpush.msra.mxu0 %v2404
        %2474 = vmatpush.msra.mxu0 %v2400
        %2475 = vmatpush.msra.mxu0 %v2396
        %2476 = vmatpush.msra.mxu0 %v2392
        %2477 = vmatpush.msra.mxu0 %v2388
        %2478 = vmatpush.msra.mxu0 %v2384
        %2479 = vmatpush.msra.mxu0 %v2380
        %2480 = vmatpush.msra.mxu0 %v2376
        %2481 = vmatpush.msra.mxu0 %v2372
        %2482 = vmatpush.msra.mxu0 %v2368
        %2483 = vmatpush.msra.mxu0 %v2364
        %2484 = vmatpush.msra.mxu0 %v2360
        %2485 = vmatpush.msra.mxu0 %v2356
        %2486 = vmatmul.f32.gmra.mxu0 %v2347
        %v2487 = vpop.f32.mrf.mxu0
        %v2488 = vadd.f32 %v2422, %v2487
        %2489 = vmatmul.f32.gmra.mxu0 %v2348
        %v2490 = vpop.f32.mrf.mxu0
        %v2491 = vadd.f32 %v2422, %v2490
        %2492 = vmatmul.f32.gmra.mxu0 %v2349
        %v2493 = vpop.f32.mrf.mxu0
        %v2494 = vadd.f32 %v2422, %v2493
        %2495 = vmatmul.f32.gmra.mxu0 %v2350
        %v2496 = vpop.f32.mrf.mxu0
        %v2497 = vadd.f32 %v2422, %v2496
        %2498 = vmatmul.f32.gmra.mxu0 %v2351
        %v2499 = vpop.f32.mrf.mxu0
        %v2500 = vadd.f32 %v2422, %v2499
        %2501 = vmatmul.f32.gmra.mxu0 %v2352
        %v2502 = vpop.f32.mrf.mxu0
        %v2503 = vadd.f32 %v2422, %v2502
        %2504 = vmatmul.f32.gmra.mxu0 %v2353
        %v2505 = vpop.f32.mrf.mxu0
        %v2506 = vadd.f32 %v2422, %v2505
        %2507 = vmatmul.f32.gmra.mxu0 %v2354
        %v2508 = vpop.f32.mrf.mxu0
        %v2509 = vadd.f32 %v2422, %v2508
        %2510 = vdwg.mxu0
        %2511 = vmatpush.msra.mxu0 %v2417
        %2512 = vmatpush.msra.mxu0 %v2413
        %2513 = vmatpush.msra.mxu0 %v2409
        %2514 = vmatpush.msra.mxu0 %v2405
        %2515 = vmatpush.msra.mxu0 %v2401
        %2516 = vmatpush.msra.mxu0 %v2397
        %2517 = vmatpush.msra.mxu0 %v2393
        %2518 = vmatpush.msra.mxu0 %v2389
        %2519 = vmatpush.msra.mxu0 %v2385
        %2520 = vmatpush.msra.mxu0 %v2381
        %2521 = vmatpush.msra.mxu0 %v2377
        %2522 = vmatpush.msra.mxu0 %v2373
        %2523 = vmatpush.msra.mxu0 %v2369
        %2524 = vmatpush.msra.mxu0 %v2365
        %2525 = vmatpush.msra.mxu0 %v2361
        %2526 = vmatpush.msra.mxu0 %v2357
        %2527 = vmatmul.f32.gmra.mxu0 %v2347
        %v2528 = vpop.f32.mrf.mxu0
        %v2529 = vadd.f32 %v2423, %v2528
        %2530 = vmatmul.f32.gmra.mxu0 %v2348
        %v2531 = vpop.f32.mrf.mxu0
        %v2532 = vadd.f32 %v2423, %v2531
        %2533 = vmatmul.f32.gmra.mxu0 %v2349
        %v2534 = vpop.f32.mrf.mxu0
        %v2535 = vadd.f32 %v2423, %v2534
        %2536 = vmatmul.f32.gmra.mxu0 %v2350
        %v2537 = vpop.f32.mrf.mxu0
        %v2538 = vadd.f32 %v2423, %v2537
        %2539 = vmatmul.f32.gmra.mxu0 %v2351
        %v2540 = vpop.f32.mrf.mxu0
        %v2541 = vadd.f32 %v2423, %v2540
        %2542 = vmatmul.f32.gmra.mxu0 %v2352
        %v2543 = vpop.f32.mrf.mxu0
        %v2544 = vadd.f32 %v2423, %v2543
        %2545 = vmatmul.f32.gmra.mxu0 %v2353
        %v2546 = vpop.f32.mrf.mxu0
        %v2547 = vadd.f32 %v2423, %v2546
        %2548 = vmatmul.f32.gmra.mxu0 %v2354
        %v2549 = vpop.f32.mrf.mxu0
        %v2550 = vadd.f32 %v2423, %v2549
        %2551 = vdwg.mxu0
        %2552 = vmatpush.msra.mxu0 %v2418
        %2553 = vmatpush.msra.mxu0 %v2414
        %2554 = vmatpush.msra.mxu0 %v2410
        %2555 = vmatpush.msra.mxu0 %v2406
        %2556 = vmatpush.msra.mxu0 %v2402
        %2557 = vmatpush.msra.mxu0 %v2398
        %2558 = vmatpush.msra.mxu0 %v2394
        %2559 = vmatpush.msra.mxu0 %v2390
        %2560 = vmatpush.msra.mxu0 %v2386
        %2561 = vmatpush.msra.mxu0 %v2382
        %2562 = vmatpush.msra.mxu0 %v2378
        %2563 = vmatpush.msra.mxu0 %v2374
        %2564 = vmatpush.msra.mxu0 %v2370
        %2565 = vmatpush.msra.mxu0 %v2366
        %2566 = vmatpush.msra.mxu0 %v2362
        %2567 = vmatpush.msra.mxu0 %v2358
        %2568 = vmatmul.f32.gmra.mxu0 %v2347
        %v2569 = vpop.f32.mrf.mxu0
        %v2570 = vadd.f32 %v2424, %v2569
        %2571 = vmatmul.f32.gmra.mxu0 %v2348
        %v2572 = vpop.f32.mrf.mxu0
        %v2573 = vadd.f32 %v2424, %v2572
        %2574 = vmatmul.f32.gmra.mxu0 %v2349
        %v2575 = vpop.f32.mrf.mxu0
        %v2576 = vadd.f32 %v2424, %v2575
        %2577 = vmatmul.f32.gmra.mxu0 %v2350
        %v2578 = vpop.f32.mrf.mxu0
        %v2579 = vadd.f32 %v2424, %v2578
        %2580 = vmatmul.f32.gmra.mxu0 %v2351
        %v2581 = vpop.f32.mrf.mxu0
        %v2582 = vadd.f32 %v2424, %v2581
        %2583 = vmatmul.f32.gmra.mxu0 %v2352
        %v2584 = vpop.f32.mrf.mxu0
        %v2585 = vadd.f32 %v2424, %v2584
        %2586 = vmatmul.f32.gmra.mxu0 %v2353
        %v2587 = vpop.f32.mrf.mxu0
        %v2588 = vadd.f32 %v2424, %v2587
        %2589 = vmatmul.f32.gmra.mxu0 %v2354
        %v2590 = vpop.f32.mrf.mxu0
        %v2591 = vadd.f32 %v2424, %v2590
        %2592 = vdwg.mxu0
        %v2593 = vld [vmem:[%s475] sm:$0xff]
        %v2594 = vld [vmem:[%s475 + $0x8] sm:$0xff]
        %v2595 = vld [vmem:[%s475 + $0x10] sm:$0xff]
        %v2596 = vld [vmem:[%s475 + $0x18] sm:$0xff]
        %v2597 = vld [vmem:[%s475 + $0x20] sm:$0xff]
        %v2598 = vld [vmem:[%s475 + $0x28] sm:$0xff]
        %v2599 = vld [vmem:[%s475 + $0x30] sm:$0xff]
        %v2600 = vld [vmem:[%s475 + $0x38] sm:$0xff]
        %v2601 = vld [vmem:[%s475 + $0x40] sm:$0xff]
        %v2602 = vld [vmem:[%s475 + $0x48] sm:$0xff]
        %v2603 = vld [vmem:[%s475 + $0x50] sm:$0xff]
        %v2604 = vld [vmem:[%s475 + $0x58] sm:$0xff]
        %v2605 = vld [vmem:[%s475 + $0x60] sm:$0xff]
        %v2606 = vld [vmem:[%s475 + $0x68] sm:$0xff]
        %v2607 = vld [vmem:[%s475 + $0x70] sm:$0xff]
        %v2608 = vld [vmem:[%s475 + $0x78] sm:$0xff]
        %v2609 = vld [vmem:[%s475 + $0x80] sm:$0xff]
        %v2610 = vld [vmem:[%s475 + $0x88] sm:$0xff]
        %v2611 = vld [vmem:[%s475 + $0x90] sm:$0xff]
        %v2612 = vld [vmem:[%s475 + $0x98] sm:$0xff]
        %v2613 = vld [vmem:[%s475 + $0xa0] sm:$0xff]
        %v2614 = vld [vmem:[%s475 + $0xa8] sm:$0xff]
        %v2615 = vld [vmem:[%s475 + $0xb0] sm:$0xff]
        %v2616 = vld [vmem:[%s475 + $0xb8] sm:$0xff]
        %v2617 = vld [vmem:[%s475 + $0xc0] sm:$0xff]
        %v2618 = vld [vmem:[%s475 + $0xc8] sm:$0xff]
        %v2619 = vld [vmem:[%s475 + $0xd0] sm:$0xff]
        %v2620 = vld [vmem:[%s475 + $0xd8] sm:$0xff]
        %v2621 = vld [vmem:[%s475 + $0xe0] sm:$0xff]
        %v2622 = vld [vmem:[%s475 + $0xe8] sm:$0xff]
        %v2623 = vld [vmem:[%s475 + $0xf0] sm:$0xff]
        %v2624 = vld [vmem:[%s475 + $0xf8] sm:$0xff]
        %v2625 = vadd.f32 %v2447, %v2593
        %v2626 = vadd.f32 %v2488, %v2594
        %v2627 = vadd.f32 %v2529, %v2595
        %v2628 = vadd.f32 %v2570, %v2596
        %v2629 = vadd.f32 %v2450, %v2597
        %v2630 = vadd.f32 %v2491, %v2598
        %v2631 = vadd.f32 %v2532, %v2599
        %v2632 = vadd.f32 %v2573, %v2600
        %v2633 = vadd.f32 %v2453, %v2601
        %v2634 = vadd.f32 %v2494, %v2602
        %v2635 = vadd.f32 %v2535, %v2603
        %v2636 = vadd.f32 %v2576, %v2604
        %v2637 = vadd.f32 %v2456, %v2605
        %v2638 = vadd.f32 %v2497, %v2606
        %v2639 = vadd.f32 %v2538, %v2607
        %v2640 = vadd.f32 %v2579, %v2608
        %v2641 = vadd.f32 %v2459, %v2609
        %v2642 = vadd.f32 %v2500, %v2610
        %v2643 = vadd.f32 %v2541, %v2611
        %v2644 = vadd.f32 %v2582, %v2612
        %v2645 = vadd.f32 %v2462, %v2613
        %v2646 = vadd.f32 %v2503, %v2614
        %v2647 = vadd.f32 %v2544, %v2615
        %v2648 = vadd.f32 %v2585, %v2616
        %v2649 = vadd.f32 %v2465, %v2617
        %v2650 = vadd.f32 %v2506, %v2618
        %v2651 = vadd.f32 %v2547, %v2619
        %v2652 = vadd.f32 %v2588, %v2620
        %v2653 = vadd.f32 %v2468, %v2621
        %v2654 = vadd.f32 %v2509, %v2622
        %v2655 = vadd.f32 %v2550, %v2623
        %v2656 = vadd.f32 %v2591, %v2624
        %v2657 = vmax.f32 %v2625, 0.0
        %v2658 = vmax.f32 %v2626, 0.0
        %v2659 = vmax.f32 %v2627, 0.0
        %v2660 = vmax.f32 %v2628, 0.0
        %v2661 = vmax.f32 %v2629, 0.0
        %v2662 = vmax.f32 %v2630, 0.0
        %v2663 = vmax.f32 %v2631, 0.0
        %v2664 = vmax.f32 %v2632, 0.0
        %v2665 = vmax.f32 %v2633, 0.0
        %v2666 = vmax.f32 %v2634, 0.0
        %v2667 = vmax.f32 %v2635, 0.0
        %v2668 = vmax.f32 %v2636, 0.0
        %v2669 = vmax.f32 %v2637, 0.0
        %v2670 = vmax.f32 %v2638, 0.0
        %v2671 = vmax.f32 %v2639, 0.0
        %v2672 = vmax.f32 %v2640, 0.0
        %v2673 = vmax.f32 %v2641, 0.0
        %v2674 = vmax.f32 %v2642, 0.0
        %v2675 = vmax.f32 %v2643, 0.0
        %v2676 = vmax.f32 %v2644, 0.0
        %v2677 = vmax.f32 %v2645, 0.0
        %v2678 = vmax.f32 %v2646, 0.0
        %v2679 = vmax.f32 %v2647, 0.0
        %v2680 = vmax.f32 %v2648, 0.0
        %v2681 = vmax.f32 %v2649, 0.0
        %v2682 = vmax.f32 %v2650, 0.0
        %v2683 = vmax.f32 %v2651, 0.0
        %v2684 = vmax.f32 %v2652, 0.0
        %v2685 = vmax.f32 %v2653, 0.0
        %v2686 = vmax.f32 %v2654, 0.0
        %v2687 = vmax.f32 %v2655, 0.0
        %v2688 = vmax.f32 %v2656, 0.0
        %2689 = vst [vmem:[%s427] sm:$0xff] %v2657
        %2690 = vst [vmem:[%s427 + $0x8] sm:$0xff] %v2658
        %2691 = vst [vmem:[%s427 + $0x10] sm:$0xff] %v2659
        %2692 = vst [vmem:[%s427 + $0x18] sm:$0xff] %v2660
        %2693 = vst [vmem:[%s427 + $0x20] sm:$0xff] %v2661
        %2694 = vst [vmem:[%s427 + $0x28] sm:$0xff] %v2662
        %2695 = vst [vmem:[%s427 + $0x30] sm:$0xff] %v2663
        %2696 = vst [vmem:[%s427 + $0x38] sm:$0xff] %v2664
        %2697 = vst [vmem:[%s427 + $0x40] sm:$0xff] %v2665
        %2698 = vst [vmem:[%s427 + $0x48] sm:$0xff] %v2666
        %2699 = vst [vmem:[%s427 + $0x50] sm:$0xff] %v2667
        %2700 = vst [vmem:[%s427 + $0x58] sm:$0xff] %v2668
        %2701 = vst [vmem:[%s427 + $0x60] sm:$0xff] %v2669
        %2702 = vst [vmem:[%s427 + $0x68] sm:$0xff] %v2670
        %2703 = vst [vmem:[%s427 + $0x70] sm:$0xff] %v2671
        %2704 = vst [vmem:[%s427 + $0x78] sm:$0xff] %v2672
        %2705 = vst [vmem:[%s427 + $0x80] sm:$0xff] %v2673
        %2706 = vst [vmem:[%s427 + $0x88] sm:$0xff] %v2674
        %2707 = vst [vmem:[%s427 + $0x90] sm:$0xff] %v2675
        %2708 = vst [vmem:[%s427 + $0x98] sm:$0xff] %v2676
        %2709 = vst [vmem:[%s427 + $0xa0] sm:$0xff] %v2677
        %2710 = vst [vmem:[%s427 + $0xa8] sm:$0xff] %v2678
        %2711 = vst [vmem:[%s427 + $0xb0] sm:$0xff] %v2679
        %2712 = vst [vmem:[%s427 + $0xb8] sm:$0xff] %v2680
        %2713 = vst [vmem:[%s427 + $0xc0] sm:$0xff] %v2681
        %2714 = vst [vmem:[%s427 + $0xc8] sm:$0xff] %v2682
        %2715 = vst [vmem:[%s427 + $0xd0] sm:$0xff] %v2683
        %2716 = vst [vmem:[%s427 + $0xd8] sm:$0xff] %v2684
        %2717 = vst [vmem:[%s427 + $0xe0] sm:$0xff] %v2685
        %2718 = vst [vmem:[%s427 + $0xe8] sm:$0xff] %v2686
        %2719 = vst [vmem:[%s427 + $0xf0] sm:$0xff] %v2687
        %2720 = vst [vmem:[%s427 + $0xf8] sm:$0xff] %v2688
        %s2721 = sand.u32 %s252, 1
        %s2722 = scalar_lea.sflag [#allocation4], %s2721
        %s2723 = sand.u32 %s252, 1
        %s2724 = smul.addr %s2723, 256
        %s2725 = scalar_lea.vmem [#allocation3], %s2724
        // Predicated region
        $region53: #{bottleneck_forward.3} parent=51 // pred_check
          %p2726 = pneg %p262
        $region54: #{bottleneck_forward.3} parent=51 // pred_check_branch
          %2728 = sbr.rel (%p2726) target = $region56
        $region55: #{bottleneck_forward.3} parent=51 // pred_region
          %2730 = vsyncadd %s2722, 0
          %s2731 = smul.addr %s27, 32
          %s2732 = smul.addr %s26, 128
          %s2733 = sadd.s32 %s2731, %s2732
          %s2734 = smul.addr %s2733, 8
          %s2735 = scalar_lea.hbm %s8, %s2734
          %s2736 = sshll.u32 %s2725, 4
          %s2737 = int_to_ptr.vmem [resolvable:$true] %s2736
          %s2738 = sshll.u32 %s2735, 4
          %s2739 = int_to_ptr.hbm [resolvable:$true] %s2738
          %2744 = dma.vmem_to_hbm [thread:$0]  %s2737, 4096, %s2739, %s2722, 512, 512, 32
        $region56: #{bottleneck_forward.3} parent=51 // pred_fallthru
          _
      $region52: #{bottleneck_forward.3} parent=5 // pred_fallthru
        _
      %p2745 = scmp.le.s32.totalorder 2, %s17
      // Predicated region
      $region57: #{bottleneck_forward.3} parent=5 // pred_check
        %p2746 = pneg %p2745
      $region58: #{bottleneck_forward.3} parent=5 // pred_check_branch
        %2748 = sbr.rel (%p2746) target = $region60
      $region59: #{bottleneck_forward.3} parent=5 // pred_region
        %s2749 = ssub.s32 %s17, 2
        // Predicated region
        $region61: #{bottleneck_forward.3} parent=59 // pred_check
          %p2750 = pneg %p268
        $region62: #{bottleneck_forward.3} parent=59 // pred_check_branch
          %2752 = sbr.rel (%p2750) target = $region64
        $region63: #{bottleneck_forward.3} parent=59 // pred_region
          %s2753 = sand.u32 %s253, 1
          %s2754 = scalar_lea.sflag [#allocation4], %s2753
          %s2755 = sand.u32 %s253, 1
          %s2756 = smul.addr %s2755, 256
          %s2757 = scalar_lea.vmem [#allocation3], %s2756
          %2759 = dma.done %s2754, 4096
        $region64: #{bottleneck_forward.3} parent=59 // pred_fallthru
          _
      $region60: #{bottleneck_forward.3} parent=5 // pred_fallthru
        _
    $region6: #{bottleneck_forward.3} parent=1 // loop_footer
      %s21 = sadd.s32 1, %s17
    $region7: #{bottleneck_forward.3} parent=1 // loop_footer_branch
      %16 = sbr.rel target = $region3
    $region8: #{bottleneck_forward.3} parent=1 // loop_exit
      _
    %2760 = vsyncpa [#allocation4], 1
    %s2761 = scalar_lea.sflag [#allocation4], 1
    %2762 = vsyncpa %s2761, 1

</llo_original>
